<compile_context>
chip_gen: v7x
topology: tpu7x:2x2x1
jax: 0.10.0
libtpu: 0.0.40
codegen_flags: <defaults>
</compile_context>

<pallas_src>
import numpy as np
import jax
import jax.numpy as jnp
from jax import lax
from jax.experimental import pallas as pl
from jax.experimental.pallas import tpu as pltpu


def _round_up(x, m):
    return ((x + m - 1) // m) * m


def _pad_gates(w, H, Hp):
    """Pad each of the 4 fused gate blocks (order i|f|g|o) along last dim H->Hp."""
    if Hp == H:
        return w
    parts = [w[..., k * H:(k + 1) * H] for k in range(4)]
    pad = [(0, 0)] * (w.ndim - 1) + [(0, Hp - H)]
    return jnp.concatenate([jnp.pad(p, pad) for p in parts], axis=-1)


def _vmem_limit(nbytes):
    # Headroom over the estimate, floored at the common 32 MiB scoped default
    # and capped at v7x's 64 MiB physical VMEM.
    return int(min(max(2 * nbytes, 32 << 20), 64 << 20))


# --------------------------------------------------------------------------
# Kernel 1: sequential LSTM recurrence, TS time steps per grid iteration.
# Grid: (batch_tiles [parallel], time_chunks [arbitrary]).
# --------------------------------------------------------------------------
def lstm_recurrent_kernel(emb_ref, w_ih_ref, w_hh_ref, b_ref, h_out_ref,
                          h_sc, c_sc, xg_sc):
    """emb_ref:   (TS, BT, Ep)  bf16 embeddings for this (batch, time) chunk
       w_ih_ref:  (Ep, 4Hp)     bf16 fused input weights   (gate order i|f|g|o)
       w_hh_ref:  (Hp, 4Hp)     bf16 fused recurrent weights
       b_ref:     (1, 4Hp)      f32 combined bias (b_ih + b_hh)
       h_out_ref: (TS, BT, Hp)  bf16 hidden states for the projection pass
       h_sc, c_sc:(BT, Hp)      f32 persistent state across time chunks
       xg_sc:     (TS, BT, 4Hp) f32 staged input projection (bounds vreg live range)
    """
    TS, BT, Ep = emb_ref.shape
    Hp = w_hh_ref.shape[0]
    H4 = w_hh_ref.shape[1]

    @pl.when(pl.program_id(1) == 0)
    def _():
        h_sc[...] = jnp.zeros_like(h_sc)
        c_sc[...] = jnp.zeros_like(c_sc)

    # Hoisted input projection for the whole chunk (off the serial critical
    # path), staged in VMEM so the unrolled recurrence stays low on vregs.
    x = emb_ref[...].reshape(TS * BT, Ep)
    xg = (jnp.dot(x, w_ih_ref[...], preferred_element_type=jnp.float32)
          + b_ref[...])
    xg_sc[...] = xg.reshape(TS, BT, H4)

    def step(s, carry):
        h, c = carry
        # Single lane-dense (BT, 4Hp) recurrent matmul per time step (bf16 MXU,
        # f32 accumulate); gate math stays f32.
        gates = xg_sc[s] + jnp.dot(h.astype(jnp.bfloat16), w_hh_ref[...],
                                   preferred_element_type=jnp.float32)
        i_g = jax.nn.sigmoid(gates[:, 0 * Hp:1 * Hp])
        f_g = jax.nn.sigmoid(gates[:, 1 * Hp:2 * Hp])
        g_g = jnp.tanh(gates[:, 2 * Hp:3 * Hp])
        o_g = jax.nn.sigmoid(gates[:, 3 * Hp:4 * Hp])
        c = f_g * c + i_g * g_g
        h = o_g * jnp.tanh(c)
        h_out_ref[s] = h.astype(h_out_ref.dtype)
        return h, c

    h, c = lax.fori_loop(0, TS, step, (h_sc[...], c_sc[...]), unroll=True)
    h_sc[...] = h
    c_sc[...] = c


# --------------------------------------------------------------------------
# Kernel 2: vocab projection.  Grid: (V-tiles [slow], T-tiles [fast]) so each
# (Hp, TV) W_out tile is streamed from HBM exactly once.
# --------------------------------------------------------------------------
def output_proj_kernel(h_ref, w_out_ref, b_out_ref, out_ref):
    """h_ref: (TT, Bp, Hp) bf16; w_out_ref: (Hp, TV) bf16; b_out_ref: (1, TV) f32;
    out_ref: (TT, Bp, TV) f32."""
    TT, Bp, Hp = h_ref.shape
    TV = out_ref.shape[-1]
    h = h_ref[...].reshape(TT * Bp, Hp)
    logits = (jnp.dot(h, w_out_ref[...], preferred_element_type=jnp.float32)
              + b_out_ref[...])
    out_ref[...] = logits.reshape(TT, Bp, TV).astype(out_ref.dtype)


# --------------------------------------------------------------------------
# Wrapper
# --------------------------------------------------------------------------
def rnn_lstm_forward(tokens, params, *, ts=32, tt=128, tv=512, bt=128):
    """tokens: (T, B) int32.  Returns (T, V, B) float32 logits."""
    emb_table = params["emb"]                       # (V, E)
    V, E = emb_table.shape
    H = params["w_hh"].shape[0]
    T, B = tokens.shape

    # ---- tile / padding sizes --------------------------------------------
    TS = max(1, min(ts, T))                         # time steps per recurrent grid step
    TT = _round_up(min(tt, _round_up(T, TS)), TS)   # projection T-tile (multiple of TS)
    Tp = _round_up(T, TT)                           # multiple of both TS and TT
    Bp = _round_up(max(B, 16), 16)                  # bf16 sublane packing
    BT = min(bt, Bp)
    if Bp % BT:
        BT = Bp
    Hp = _round_up(H, 128)                          # lane-dense gates / h stores
    Ep = _round_up(E, 128)
    TV = min(tv, _round_up(V, 128))                 # vocab tile (multiple of 128)
    Vp = _round_up(V, TV)
    H4 = 4 * Hp

    # ---- weights: per-gate pad to Hp, cast MXU operands to bf16 -----------
    w_ih = _pad_gates(params["w_ih"], H, Hp)
    w_ih = jnp.pad(w_ih, ((0, Ep - E), (0, 0))).astype(jnp.bfloat16)      # (Ep, 4Hp)
    w_hh = _pad_gates(params["w_hh"], H, Hp)
    w_hh = jnp.pad(w_hh, ((0, Hp - H), (0, 0))).astype(jnp.bfloat16)      # (Hp, 4Hp)
    b = _pad_gates(params["b"], H, Hp).astype(jnp.float32)                # (1, 4Hp)
    w_out = jnp.pad(params["w_out"],
                    ((0, Hp - H), (0, Vp - V))).astype(jnp.bfloat16)      # (Hp, Vp)
    b_out = jnp.pad(params["b_out"], ((0, 0), (0, Vp - V))).astype(jnp.float32)

    # Embedding lookup (glue); embedding dropout is identity in eval mode.
    # TODO(synk): fold the gather into Pass 1 (token ids via scalar prefetch +
    # per-row DMA) to avoid materializing the (Tp, Bp, Ep) activation in HBM.
    emb_tab = jnp.pad(emb_table, ((0, 0), (0, Ep - E))).astype(jnp.bfloat16)
    emb = jnp.take(emb_tab, tokens, axis=0)                                # (T, B, Ep)
    emb_p = jnp.pad(emb, ((0, Tp - T), (0, Bp - B), (0, 0)))               # (Tp, Bp, Ep)

    # ---- VMEM budgets (set explicitly so v5e/v6e/v7x all fit) -------------
    p1_bytes = (2 * TS * BT * Ep * 2          # emb chunk, double-buffered bf16
                + Ep * H4 * 2                 # W_ih, single-buffered bf16
                + Hp * H4 * 2                 # W_hh, single-buffered bf16
                + H4 * 4                      # bias f32
                + 2 * TS * BT * Hp * 2        # h_out chunk, double-buffered bf16
                + 2 * BT * Hp * 4             # h, c scratch f32
                + TS * BT * H4 * 4)           # xg scratch f32
    p2_bytes = (2 * TT * Bp * Hp * 2          # h_seq tile bf16
                + 2 * Hp * TV * 2             # W_out tile bf16
                + 2 * TV * 4                  # b_out tile f32
                + 2 * TT * Bp * TV * 4)       # out tile f32

    # --- Pass 1: sequential recurrence, writes h_t (bf16) for every step. ---
    h_seq = pl.pallas_call(
        lstm_recurrent_kernel,
        out_shape=jax.ShapeDtypeStruct((Tp, Bp, Hp), jnp.bfloat16),
        grid_spec=pltpu.PrefetchScalarGridSpec(
            num_scalar_prefetch=0,
            grid=(Bp // BT, Tp // TS),
            in_specs=[
                pl.BlockSpec((TS, BT, Ep), lambda bti, t: (t, bti, 0)),
                # Grid-constant weights: single-buffer to halve VMEM residency.
                pl.BlockSpec((Ep, H4), lambda bti, t: (0, 0),
                             pipeline_mode=pl.Buffered(1)),
                pl.BlockSpec((Hp, H4), lambda bti, t: (0, 0),
                             pipeline_mode=pl.Buffered(1)),
                pl.BlockSpec((1, H4), lambda bti, t: (0, 0),
                             pipeline_mode=pl.Buffered(1)),
            ],
            out_specs=pl.BlockSpec((TS, BT, Hp), lambda bti, t: (t, bti, 0)),
            scratch_shapes=[pltpu.VMEM((BT, Hp), jnp.float32),        # h state
                            pltpu.VMEM((BT, Hp), jnp.float32),        # c state
                            pltpu.VMEM((TS, BT, H4), jnp.float32)],   # staged xg
        ),
        compiler_params=pltpu.CompilerParams(
            dimension_semantics=("parallel", "arbitrary"),   # batch tiles || , time serial
            vmem_limit_bytes=_vmem_limit(p1_bytes)),
    )(emb_p, w_ih, w_hh, b)

    # --- Pass 2: vocab projection.  V-tile outer (slow) so W_out streams once;
    # only the small bf16 h_seq is re-read (Vp/TV) times. ---
    logits_p = pl.pallas_call(
        output_proj_kernel,
        out_shape=jax.ShapeDtypeStruct((Tp, Bp, Vp), jnp.float32),
        grid_spec=pltpu.PrefetchScalarGridSpec(
            num_scalar_prefetch=0,
            grid=(Vp // TV, Tp // TT),
            in_specs=[
                pl.BlockSpec((TT, Bp, Hp), lambda vi, ti: (ti, 0, 0)),
                pl.BlockSpec((Hp, TV), lambda vi, ti: (0, vi)),
                pl.BlockSpec((1, TV), lambda vi, ti: (0, vi)),
            ],
            out_specs=pl.BlockSpec((TT, Bp, TV), lambda vi, ti: (ti, 0, vi)),
        ),
        compiler_params=pltpu.CompilerParams(
            dimension_semantics=("parallel", "parallel"),
            vmem_limit_bytes=_vmem_limit(p2_bytes)),
    )(h_seq, w_out, b_out)

    # Slice off padding; output dropout is identity in eval mode.
    logits = logits_p[:T, :B, :V]
    return jnp.transpose(logits, (0, 2, 1))                          # (T, V, B)


# --------------------------------------------------------------------------
# Pure-JAX f32 reference (same parameterization) for validation.
# --------------------------------------------------------------------------
def ref_forward(tokens, params):
    emb = jnp.take(params["emb"], tokens, axis=0)
    T, B, E = emb.shape
    H = params["w_hh"].shape[0]
    w_ih, w_hh, b = params["w_ih"], params["w_hh"], params["b"]

    def step(carry, x):
        h, c = carry
        gates = x @ w_ih + h @ w_hh + b          # (B, 4H), gate order i|f|g|o
        i = jax.nn.sigmoid(gates[:, 0 * H:1 * H])
        f = jax.nn.sigmoid(gates[:, 1 * H:2 * H])
        g = jnp.tanh(gates[:, 2 * H:3 * H])
        o = jax.nn.sigmoid(gates[:, 3 * H:4 * H])
        c = f * c + i * g
        h = o * jnp.tanh(c)
        return (h, c), h

    init = (jnp.zeros((B, H), jnp.float32), jnp.zeros((B, H), jnp.float32))
    (_, _), hs = jax.lax.scan(step, init, emb)
    logits = hs @ params["w_out"] + params["b_out"]
    return jnp.transpose(logits, (0, 2, 1))


def init_params(key, vocab_size, emb_size, hidden_size, pad_index=0):
    ks = jax.random.split(key, 7)
    k = 1.0 / np.sqrt(hidden_size)
    emb = jax.random.normal(ks[0], (vocab_size, emb_size), jnp.float32)
    emb = emb.at[pad_index].set(0.0)                                # padding_idx row = 0
    w_ih = jax.random.uniform(ks[1], (emb_size, 4 * hidden_size), jnp.float32, -k, k)
    w_hh = jax.random.uniform(ks[2], (hidden_size, 4 * hidden_size), jnp.float32, -k, k)
    b_ih = jax.random.uniform(ks[3], (1, 4 * hidden_size), jnp.float32, -k, k)
    b_hh = jax.random.uniform(ks[4], (1, 4 * hidden_size), jnp.float32, -k, k)
    w_out = jax.random.uniform(ks[5], (hidden_size, vocab_size), jnp.float32, -k, k)
    b_out = jax.random.uniform(ks[6], (1, vocab_size), jnp.float32, -k, k)
    return {"emb": emb, "w_ih": w_ih, "w_hh": w_hh, "b": b_ih + b_hh,
            "w_out": w_out, "b_out": b_out}


if __name__ == "__main__":
    # Small shapes: vocab=64, emb=16, hidden=32, seq T=8, batch B=2
    vocab_size, emb_size, hidden_size = 64, 16, 32
    T, B = 8, 2

    key = jax.random.PRNGKey(0)
    pkey, tkey = jax.random.split(key)
    params = init_params(pkey, vocab_size, emb_size, hidden_size, pad_index=0)
    tokens = jax.random.randint(tkey, (T, B), 0, vocab_size, dtype=jnp.int32)

    out = jax.block_until_ready(rnn_lstm_forward(tokens, params))
    ref = jax.block_until_ready(ref_forward(tokens, params))

    assert out.shape == (T, vocab_size, B), out.shape
    # bf16 MXU path vs f32 reference -> looser tolerance than the f32 kernel.
    np.testing.assert_allclose(np.asarray(out), np.asarray(ref), atol=2e-2, rtol=2e-2)
    print("KERNEL_OK")
</pallas_src>

<mosaic_0001>
module attributes {stable_mosaic.version = 11 : i64} {
  func.func @lstm_recurrent_kernel(%arg0: i32, %arg1: i32, %arg2: memref<8x16x128xbf16, #tpu.memory_space<vmem>>, %arg3: memref<128x512xbf16, #tpu.memory_space<vmem>>, %arg4: memref<128x512xbf16, #tpu.memory_space<vmem>>, %arg5: memref<1x512xf32, #tpu.memory_space<vmem>>, %arg6: memref<8x16x128xbf16, #tpu.memory_space<vmem>>, %arg7: memref<16x128xf32, #tpu.memory_space<vmem>>, %arg8: memref<16x128xf32, #tpu.memory_space<vmem>>, %arg9: memref<8x16x512xf32, #tpu.memory_space<vmem>>) attributes {dimension_semantics = [#tpu.dimension_semantics<parallel>, #tpu.dimension_semantics<arbitrary>], iteration_bounds = array<i64: 1, 1>, scalar_prefetch = 0 : i64, scratch_operands = 3 : i64, tpu.core_type = #tpu.core_type<tc>, window_params = [{transform_indices = @transform_0, window_bounds = array<i64: 8, 16, 128>}, {pipeline_mode = #tpu.pipeline_mode<synchronous>, transform_indices = @transform_1, window_bounds = array<i64: 128, 512>}, {pipeline_mode = #tpu.pipeline_mode<synchronous>, transform_indices = @transform_2, window_bounds = array<i64: 128, 512>}, {pipeline_mode = #tpu.pipeline_mode<synchronous>, transform_indices = @transform_3, window_bounds = array<i64: 1, 512>}, {transform_indices = @transform_4, window_bounds = array<i64: 8, 16, 128>}]} {
    %c0_i32 = arith.constant 0 : i32
    %0 = arith.cmpi eq, %arg1, %c0_i32 : i32
    %1 = arith.extui %0 : i1 to i32
    %c0_i32_0 = arith.constant 0 : i32
    %2 = arith.cmpi ne, %1, %c0_i32_0 : i32
    scf.if %2 {
      %cst_99 = arith.constant 0.000000e+00 : f32
      %312 = vector.broadcast %cst_99 : f32 to vector<16x128xf32>
      %c0_100 = arith.constant 0 : index
      %c0_101 = arith.constant 0 : index
      %313 = vector.load %arg7[%c0_100, %c0_101] : memref<16x128xf32, #tpu.memory_space<vmem>>, vector<16x128xf32>
      tpu.vector_store %arg7[%c0_100, %c0_101], %312 {strides = array<i32>} : memref<16x128xf32, #tpu.memory_space<vmem>>, vector<16x128xf32>,
      %cst_102 = arith.constant 0.000000e+00 : f32
      %314 = vector.broadcast %cst_102 : f32 to vector<16x128xf32>
      %c0_103 = arith.constant 0 : index
      %c0_104 = arith.constant 0 : index
      %315 = vector.load %arg8[%c0_103, %c0_104] : memref<16x128xf32, #tpu.memory_space<vmem>>, vector<16x128xf32>
      tpu.vector_store %arg8[%c0_103, %c0_104], %314 {strides = array<i32>} : memref<16x128xf32, #tpu.memory_space<vmem>>, vector<16x128xf32>,
    } else {
    }
    %c0 = arith.constant 0 : index
    %c0_1 = arith.constant 0 : index
    %c0_2 = arith.constant 0 : index
    %3 = vector.load %arg2[%c0, %c0_1, %c0_2] : memref<8x16x128xbf16, #tpu.memory_space<vmem>>, vector<8x16x128xbf16>
    %4 = vector.shape_cast %3 : vector<8x16x128xbf16> to vector<128x128xbf16>
    %c0_3 = arith.constant 0 : index
    %c0_4 = arith.constant 0 : index
    %5 = vector.load %arg3[%c0_3, %c0_4] : memref<128x512xbf16, #tpu.memory_space<vmem>>, vector<128x512xbf16>
    %cst = arith.constant dense<0.000000e+00> : vector<128x512xf32>
    %6 = tpu.matmul %4, %5, %cst {dimension_numbers = #tpu.dot_dimension_numbers<[1], [0], [0], [1], [0, 0, 1, 1], [], []>} : vector<128x128xbf16>, vector<128x512xbf16>, vector<128x512xf32> -> vector<128x512xf32>
    %c0_5 = arith.constant 0 : index
    %c0_6 = arith.constant 0 : index
    %7 = vector.load %arg5[%c0_5, %c0_6] : memref<1x512xf32, #tpu.memory_space<vmem>>, vector<1x512xf32>
    %8 = vector.broadcast %7 : vector<1x512xf32> to vector<128x512xf32>
    %9 = arith.addf %6, %8 : vector<128x512xf32>
    %10 = vector.shape_cast %9 : vector<128x512xf32> to vector<8x16x512xf32>
    %c0_7 = arith.constant 0 : index
    %c0_8 = arith.constant 0 : index
    %c0_9 = arith.constant 0 : index
    %11 = vector.load %arg9[%c0_7, %c0_8, %c0_9] : memref<8x16x512xf32, #tpu.memory_space<vmem>>, vector<8x16x512xf32>
    tpu.vector_store %arg9[%c0_7, %c0_8, %c0_9], %10 {strides = array<i32>} : memref<8x16x512xf32, #tpu.memory_space<vmem>>, vector<8x16x512xf32>,
    %c0_10 = arith.constant 0 : index
    %c0_11 = arith.constant 0 : index
    %12 = vector.load %arg7[%c0_10, %c0_11] : memref<16x128xf32, #tpu.memory_space<vmem>>, vector<16x128xf32>
    %c0_12 = arith.constant 0 : index
    %c0_13 = arith.constant 0 : index
    %13 = vector.load %arg8[%c0_12, %c0_13] : memref<16x128xf32, #tpu.memory_space<vmem>>, vector<16x128xf32>
    %c0_i32_14 = arith.constant 0 : i32
    %14 = arith.index_cast %c0_i32_14 : i32 to index
    %c0_15 = arith.constant 0 : index
    %c0_16 = arith.constant 0 : index
    %15 = vector.load %arg9[%14, %c0_15, %c0_16] : memref<8x16x512xf32, #tpu.memory_space<vmem>>, vector<1x16x512xf32>
    %16 = vector.shape_cast %15 : vector<1x16x512xf32> to vector<16x512xf32>
    %17 = arith.truncf %12 : vector<16x128xf32> to vector<16x128xbf16>
    %c0_17 = arith.constant 0 : index
    %c0_18 = arith.constant 0 : index
    %18 = vector.load %arg4[%c0_17, %c0_18] : memref<128x512xbf16, #tpu.memory_space<vmem>>, vector<128x512xbf16>
    %cst_19 = arith.constant dense<0.000000e+00> : vector<16x512xf32>
    %19 = tpu.matmul %17, %18, %cst_19 {dimension_numbers = #tpu.dot_dimension_numbers<[1], [0], [0], [1], [0, 0, 1, 1], [], []>} : vector<16x128xbf16>, vector<128x512xbf16>, vector<16x512xf32> -> vector<16x512xf32>
    %20 = arith.addf %16, %19 : vector<16x512xf32>
    %21 = vector.extract_strided_slice %20 {offsets = [0, 0], sizes = [16, 128], strides = [1, 1]} : vector<16x512xf32> to vector<16x128xf32>
    %22 = arith.negf %21 : vector<16x128xf32>
    %23 = math.exp %22 : vector<16x128xf32>
    %cst_20 = arith.constant 1.000000e+00 : f32
    %24 = vector.broadcast %cst_20 : f32 to vector<16x128xf32>
    %25 = arith.addf %24, %23 : vector<16x128xf32>
    %26 = arith.divf %24, %25 : vector<16x128xf32>
    %27 = vector.extract_strided_slice %20 {offsets = [0, 128], sizes = [16, 128], strides = [1, 1]} : vector<16x512xf32> to vector<16x128xf32>
    %28 = arith.negf %27 : vector<16x128xf32>
    %29 = math.exp %28 : vector<16x128xf32>
    %cst_21 = arith.constant 1.000000e+00 : f32
    %30 = vector.broadcast %cst_21 : f32 to vector<16x128xf32>
    %31 = arith.addf %30, %29 : vector<16x128xf32>
    %32 = arith.divf %30, %31 : vector<16x128xf32>
    %33 = vector.extract_strided_slice %20 {offsets = [0, 256], sizes = [16, 128], strides = [1, 1]} : vector<16x512xf32> to vector<16x128xf32>
    %34 = math.tanh %33 : vector<16x128xf32>
    %35 = vector.extract_strided_slice %20 {offsets = [0, 384], sizes = [16, 128], strides = [1, 1]} : vector<16x512xf32> to vector<16x128xf32>
    %36 = arith.negf %35 : vector<16x128xf32>
    %37 = math.exp %36 : vector<16x128xf32>
    %cst_22 = arith.constant 1.000000e+00 : f32
    %38 = vector.broadcast %cst_22 : f32 to vector<16x128xf32>
    %39 = arith.addf %38, %37 : vector<16x128xf32>
    %40 = arith.divf %38, %39 : vector<16x128xf32>
    %41 = arith.mulf %32, %13 : vector<16x128xf32>
    %42 = arith.mulf %26, %34 : vector<16x128xf32>
    %43 = arith.addf %41, %42 : vector<16x128xf32>
    %44 = math.tanh %43 : vector<16x128xf32>
    %45 = arith.mulf %40, %44 : vector<16x128xf32>
    %46 = arith.truncf %45 : vector<16x128xf32> to vector<16x128xbf16>
    %47 = arith.index_cast %c0_i32_14 : i32 to index
    %c0_23 = arith.constant 0 : index
    %c0_24 = arith.constant 0 : index
    %48 = vector.load %arg6[%47, %c0_23, %c0_24] : memref<8x16x128xbf16, #tpu.memory_space<vmem>>, vector<1x16x128xbf16>
    %49 = vector.shape_cast %48 : vector<1x16x128xbf16> to vector<16x128xbf16>
    %50 = vector.shape_cast %46 : vector<16x128xbf16> to vector<1x16x128xbf16>
    tpu.vector_store %arg6[%47, %c0_23, %c0_24], %50 {strides = array<i32>} : memref<8x16x128xbf16, #tpu.memory_space<vmem>>, vector<1x16x128xbf16>,
    %c1_i32 = arith.constant 1 : i32
    %51 = arith.index_cast %c1_i32 : i32 to index
    %c0_25 = arith.constant 0 : index
    %c0_26 = arith.constant 0 : index
    %52 = vector.load %arg9[%51, %c0_25, %c0_26] : memref<8x16x512xf32, #tpu.memory_space<vmem>>, vector<1x16x512xf32>
    %53 = vector.shape_cast %52 : vector<1x16x512xf32> to vector<16x512xf32>
    %54 = arith.truncf %45 : vector<16x128xf32> to vector<16x128xbf16>
    %c0_27 = arith.constant 0 : index
    %c0_28 = arith.constant 0 : index
    %55 = vector.load %arg4[%c0_27, %c0_28] : memref<128x512xbf16, #tpu.memory_space<vmem>>, vector<128x512xbf16>
    %cst_29 = arith.constant dense<0.000000e+00> : vector<16x512xf32>
    %56 = tpu.matmul %54, %55, %cst_29 {dimension_numbers = #tpu.dot_dimension_numbers<[1], [0], [0], [1], [0, 0, 1, 1], [], []>} : vector<16x128xbf16>, vector<128x512xbf16>, vector<16x512xf32> -> vector<16x512xf32>
    %57 = arith.addf %53, %56 : vector<16x512xf32>
    %58 = vector.extract_strided_slice %57 {offsets = [0, 0], sizes = [16, 128], strides = [1, 1]} : vector<16x512xf32> to vector<16x128xf32>
    %59 = arith.negf %58 : vector<16x128xf32>
    %60 = math.exp %59 : vector<16x128xf32>
    %cst_30 = arith.constant 1.000000e+00 : f32
    %61 = vector.broadcast %cst_30 : f32 to vector<16x128xf32>
    %62 = arith.addf %61, %60 : vector<16x128xf32>
    %63 = arith.divf %61, %62 : vector<16x128xf32>
    %64 = vector.extract_strided_slice %57 {offsets = [0, 128], sizes = [16, 128], strides = [1, 1]} : vector<16x512xf32> to vector<16x128xf32>
    %65 = arith.negf %64 : vector<16x128xf32>
    %66 = math.exp %65 : vector<16x128xf32>
    %cst_31 = arith.constant 1.000000e+00 : f32
    %67 = vector.broadcast %cst_31 : f32 to vector<16x128xf32>
    %68 = arith.addf %67, %66 : vector<16x128xf32>
    %69 = arith.divf %67, %68 : vector<16x128xf32>
    %70 = vector.extract_strided_slice %57 {offsets = [0, 256], sizes = [16, 128], strides = [1, 1]} : vector<16x512xf32> to vector<16x128xf32>
    %71 = math.tanh %70 : vector<16x128xf32>
    %72 = vector.extract_strided_slice %57 {offsets = [0, 384], sizes = [16, 128], strides = [1, 1]} : vector<16x512xf32> to vector<16x128xf32>
    %73 = arith.negf %72 : vector<16x128xf32>
    %74 = math.exp %73 : vector<16x128xf32>
    %cst_32 = arith.constant 1.000000e+00 : f32
    %75 = vector.broadcast %cst_32 : f32 to vector<16x128xf32>
    %76 = arith.addf %75, %74 : vector<16x128xf32>
    %77 = arith.divf %75, %76 : vector<16x128xf32>
    %78 = arith.mulf %69, %43 : vector<16x128xf32>
    %79 = arith.mulf %63, %71 : vector<16x128xf32>
    %80 = arith.addf %78, %79 : vector<16x128xf32>
    %81 = math.tanh %80 : vector<16x128xf32>
    %82 = arith.mulf %77, %81 : vector<16x128xf32>
    %83 = arith.truncf %82 : vector<16x128xf32> to vector<16x128xbf16>
    %84 = arith.index_cast %c1_i32 : i32 to index
    %c0_33 = arith.constant 0 : index
    %c0_34 = arith.constant 0 : index
    %85 = vector.load %arg6[%84, %c0_33, %c0_34] : memref<8x16x128xbf16, #tpu.memory_space<vmem>>, vector<1x16x128xbf16>
    %86 = vector.shape_cast %85 : vector<1x16x128xbf16> to vector<16x128xbf16>
    %87 = vector.shape_cast %83 : vector<16x128xbf16> to vector<1x16x128xbf16>
    tpu.vector_store %arg6[%84, %c0_33, %c0_34], %87 {strides = array<i32>} : memref<8x16x128xbf16, #tpu.memory_space<vmem>>, vector<1x16x128xbf16>,
    %c2_i32 = arith.constant 2 : i32
    %88 = arith.index_cast %c2_i32 : i32 to index
    %c0_35 = arith.constant 0 : index
    %c0_36 = arith.constant 0 : index
    %89 = vector.load %arg9[%88, %c0_35, %c0_36] : memref<8x16x512xf32, #tpu.memory_space<vmem>>, vector<1x16x512xf32>
    %90 = vector.shape_cast %89 : vector<1x16x512xf32> to vector<16x512xf32>
    %91 = arith.truncf %82 : vector<16x128xf32> to vector<16x128xbf16>
    %c0_37 = arith.constant 0 : index
    %c0_38 = arith.constant 0 : index
    %92 = vector.load %arg4[%c0_37, %c0_38] : memref<128x512xbf16, #tpu.memory_space<vmem>>, vector<128x512xbf16>
    %cst_39 = arith.constant dense<0.000000e+00> : vector<16x512xf32>
    %93 = tpu.matmul %91, %92, %cst_39 {dimension_numbers = #tpu.dot_dimension_numbers<[1], [0], [0], [1], [0, 0, 1, 1], [], []>} : vector<16x128xbf16>, vector<128x512xbf16>, vector<16x512xf32> -> vector<16x512xf32>
    %94 = arith.addf %90, %93 : vector<16x512xf32>
    %95 = vector.extract_strided_slice %94 {offsets = [0, 0], sizes = [16, 128], strides = [1, 1]} : vector<16x512xf32> to vector<16x128xf32>
    %96 = arith.negf %95 : vector<16x128xf32>
    %97 = math.exp %96 : vector<16x128xf32>
    %cst_40 = arith.constant 1.000000e+00 : f32
    %98 = vector.broadcast %cst_40 : f32 to vector<16x128xf32>
    %99 = arith.addf %98, %97 : vector<16x128xf32>
    %100 = arith.divf %98, %99 : vector<16x128xf32>
    %101 = vector.extract_strided_slice %94 {offsets = [0, 128], sizes = [16, 128], strides = [1, 1]} : vector<16x512xf32> to vector<16x128xf32>
    %102 = arith.negf %101 : vector<16x128xf32>
    %103 = math.exp %102 : vector<16x128xf32>
    %cst_41 = arith.constant 1.000000e+00 : f32
    %104 = vector.broadcast %cst_41 : f32 to vector<16x128xf32>
    %105 = arith.addf %104, %103 : vector<16x128xf32>
    %106 = arith.divf %104, %105 : vector<16x128xf32>
    %107 = vector.extract_strided_slice %94 {offsets = [0, 256], sizes = [16, 128], strides = [1, 1]} : vector<16x512xf32> to vector<16x128xf32>
    %108 = math.tanh %107 : vector<16x128xf32>
    %109 = vector.extract_strided_slice %94 {offsets = [0, 384], sizes = [16, 128], strides = [1, 1]} : vector<16x512xf32> to vector<16x128xf32>
    %110 = arith.negf %109 : vector<16x128xf32>
    %111 = math.exp %110 : vector<16x128xf32>
    %cst_42 = arith.constant 1.000000e+00 : f32
    %112 = vector.broadcast %cst_42 : f32 to vector<16x128xf32>
    %113 = arith.addf %112, %111 : vector<16x128xf32>
    %114 = arith.divf %112, %113 : vector<16x128xf32>
    %115 = arith.mulf %106, %80 : vector<16x128xf32>
    %116 = arith.mulf %100, %108 : vector<16x128xf32>
    %117 = arith.addf %115, %116 : vector<16x128xf32>
    %118 = math.tanh %117 : vector<16x128xf32>
    %119 = arith.mulf %114, %118 : vector<16x128xf32>
    %120 = arith.truncf %119 : vector<16x128xf32> to vector<16x128xbf16>
    %121 = arith.index_cast %c2_i32 : i32 to index
    %c0_43 = arith.constant 0 : index
    %c0_44 = arith.constant 0 : index
    %122 = vector.load %arg6[%121, %c0_43, %c0_44] : memref<8x16x128xbf16, #tpu.memory_space<vmem>>, vector<1x16x128xbf16>
    %123 = vector.shape_cast %122 : vector<1x16x128xbf16> to vector<16x128xbf16>
    %124 = vector.shape_cast %120 : vector<16x128xbf16> to vector<1x16x128xbf16>
    tpu.vector_store %arg6[%121, %c0_43, %c0_44], %124 {strides = array<i32>} : memref<8x16x128xbf16, #tpu.memory_space<vmem>>, vector<1x16x128xbf16>,
    %c3_i32 = arith.constant 3 : i32
    %125 = arith.index_cast %c3_i32 : i32 to index
    %c0_45 = arith.constant 0 : index
    %c0_46 = arith.constant 0 : index
    %126 = vector.load %arg9[%125, %c0_45, %c0_46] : memref<8x16x512xf32, #tpu.memory_space<vmem>>, vector<1x16x512xf32>
    %127 = vector.shape_cast %126 : vector<1x16x512xf32> to vector<16x512xf32>
    %128 = arith.truncf %119 : vector<16x128xf32> to vector<16x128xbf16>
    %c0_47 = arith.constant 0 : index
    %c0_48 = arith.constant 0 : index
    %129 = vector.load %arg4[%c0_47, %c0_48] : memref<128x512xbf16, #tpu.memory_space<vmem>>, vector<128x512xbf16>
    %cst_49 = arith.constant dense<0.000000e+00> : vector<16x512xf32>
    %130 = tpu.matmul %128, %129, %cst_49 {dimension_numbers = #tpu.dot_dimension_numbers<[1], [0], [0], [1], [0, 0, 1, 1], [], []>} : vector<16x128xbf16>, vector<128x512xbf16>, vector<16x512xf32> -> vector<16x512xf32>
    %131 = arith.addf %127, %130 : vector<16x512xf32>
    %132 = vector.extract_strided_slice %131 {offsets = [0, 0], sizes = [16, 128], strides = [1, 1]} : vector<16x512xf32> to vector<16x128xf32>
    %133 = arith.negf %132 : vector<16x128xf32>
    %134 = math.exp %133 : vector<16x128xf32>
    %cst_50 = arith.constant 1.000000e+00 : f32
    %135 = vector.broadcast %cst_50 : f32 to vector<16x128xf32>
    %136 = arith.addf %135, %134 : vector<16x128xf32>
    %137 = arith.divf %135, %136 : vector<16x128xf32>
    %138 = vector.extract_strided_slice %131 {offsets = [0, 128], sizes = [16, 128], strides = [1, 1]} : vector<16x512xf32> to vector<16x128xf32>
    %139 = arith.negf %138 : vector<16x128xf32>
    %140 = math.exp %139 : vector<16x128xf32>
    %cst_51 = arith.constant 1.000000e+00 : f32
    %141 = vector.broadcast %cst_51 : f32 to vector<16x128xf32>
    %142 = arith.addf %141, %140 : vector<16x128xf32>
    %143 = arith.divf %141, %142 : vector<16x128xf32>
    %144 = vector.extract_strided_slice %131 {offsets = [0, 256], sizes = [16, 128], strides = [1, 1]} : vector<16x512xf32> to vector<16x128xf32>
    %145 = math.tanh %144 : vector<16x128xf32>
    %146 = vector.extract_strided_slice %131 {offsets = [0, 384], sizes = [16, 128], strides = [1, 1]} : vector<16x512xf32> to vector<16x128xf32>
    %147 = arith.negf %146 : vector<16x128xf32>
    %148 = math.exp %147 : vector<16x128xf32>
    %cst_52 = arith.constant 1.000000e+00 : f32
    %149 = vector.broadcast %cst_52 : f32 to vector<16x128xf32>
    %150 = arith.addf %149, %148 : vector<16x128xf32>
    %151 = arith.divf %149, %150 : vector<16x128xf32>
    %152 = arith.mulf %143, %117 : vector<16x128xf32>
    %153 = arith.mulf %137, %145 : vector<16x128xf32>
    %154 = arith.addf %152, %153 : vector<16x128xf32>
    %155 = math.tanh %154 : vector<16x128xf32>
    %156 = arith.mulf %151, %155 : vector<16x128xf32>
    %157 = arith.truncf %156 : vector<16x128xf32> to vector<16x128xbf16>
    %158 = arith.index_cast %c3_i32 : i32 to index
    %c0_53 = arith.constant 0 : index
    %c0_54 = arith.constant 0 : index
    %159 = vector.load %arg6[%158, %c0_53, %c0_54] : memref<8x16x128xbf16, #tpu.memory_space<vmem>>, vector<1x16x128xbf16>
    %160 = vector.shape_cast %159 : vector<1x16x128xbf16> to vector<16x128xbf16>
    %161 = vector.shape_cast %157 : vector<16x128xbf16> to vector<1x16x128xbf16>
    tpu.vector_store %arg6[%158, %c0_53, %c0_54], %161 {strides = array<i32>} : memref<8x16x128xbf16, #tpu.memory_space<vmem>>, vector<1x16x128xbf16>,
    %c4_i32 = arith.constant 4 : i32
    %162 = arith.index_cast %c4_i32 : i32 to index
    %c0_55 = arith.constant 0 : index
    %c0_56 = arith.constant 0 : index
    %163 = vector.load %arg9[%162, %c0_55, %c0_56] : memref<8x16x512xf32, #tpu.memory_space<vmem>>, vector<1x16x512xf32>
    %164 = vector.shape_cast %163 : vector<1x16x512xf32> to vector<16x512xf32>
    %165 = arith.truncf %156 : vector<16x128xf32> to vector<16x128xbf16>
    %c0_57 = arith.constant 0 : index
    %c0_58 = arith.constant 0 : index
    %166 = vector.load %arg4[%c0_57, %c0_58] : memref<128x512xbf16, #tpu.memory_space<vmem>>, vector<128x512xbf16>
    %cst_59 = arith.constant dense<0.000000e+00> : vector<16x512xf32>
    %167 = tpu.matmul %165, %166, %cst_59 {dimension_numbers = #tpu.dot_dimension_numbers<[1], [0], [0], [1], [0, 0, 1, 1], [], []>} : vector<16x128xbf16>, vector<128x512xbf16>, vector<16x512xf32> -> vector<16x512xf32>
    %168 = arith.addf %164, %167 : vector<16x512xf32>
    %169 = vector.extract_strided_slice %168 {offsets = [0, 0], sizes = [16, 128], strides = [1, 1]} : vector<16x512xf32> to vector<16x128xf32>
    %170 = arith.negf %169 : vector<16x128xf32>
    %171 = math.exp %170 : vector<16x128xf32>
    %cst_60 = arith.constant 1.000000e+00 : f32
    %172 = vector.broadcast %cst_60 : f32 to vector<16x128xf32>
    %173 = arith.addf %172, %171 : vector<16x128xf32>
    %174 = arith.divf %172, %173 : vector<16x128xf32>
    %175 = vector.extract_strided_slice %168 {offsets = [0, 128], sizes = [16, 128], strides = [1, 1]} : vector<16x512xf32> to vector<16x128xf32>
    %176 = arith.negf %175 : vector<16x128xf32>
    %177 = math.exp %176 : vector<16x128xf32>
    %cst_61 = arith.constant 1.000000e+00 : f32
    %178 = vector.broadcast %cst_61 : f32 to vector<16x128xf32>
    %179 = arith.addf %178, %177 : vector<16x128xf32>
    %180 = arith.divf %178, %179 : vector<16x128xf32>
    %181 = vector.extract_strided_slice %168 {offsets = [0, 256], sizes = [16, 128], strides = [1, 1]} : vector<16x512xf32> to vector<16x128xf32>
    %182 = math.tanh %181 : vector<16x128xf32>
    %183 = vector.extract_strided_slice %168 {offsets = [0, 384], sizes = [16, 128], strides = [1, 1]} : vector<16x512xf32> to vector<16x128xf32>
    %184 = arith.negf %183 : vector<16x128xf32>
    %185 = math.exp %184 : vector<16x128xf32>
    %cst_62 = arith.constant 1.000000e+00 : f32
    %186 = vector.broadcast %cst_62 : f32 to vector<16x128xf32>
    %187 = arith.addf %186, %185 : vector<16x128xf32>
    %188 = arith.divf %186, %187 : vector<16x128xf32>
    %189 = arith.mulf %180, %154 : vector<16x128xf32>
    %190 = arith.mulf %174, %182 : vector<16x128xf32>
    %191 = arith.addf %189, %190 : vector<16x128xf32>
    %192 = math.tanh %191 : vector<16x128xf32>
    %193 = arith.mulf %188, %192 : vector<16x128xf32>
    %194 = arith.truncf %193 : vector<16x128xf32> to vector<16x128xbf16>
    %195 = arith.index_cast %c4_i32 : i32 to index
    %c0_63 = arith.constant 0 : index
    %c0_64 = arith.constant 0 : index
    %196 = vector.load %arg6[%195, %c0_63, %c0_64] : memref<8x16x128xbf16, #tpu.memory_space<vmem>>, vector<1x16x128xbf16>
    %197 = vector.shape_cast %196 : vector<1x16x128xbf16> to vector<16x128xbf16>
    %198 = vector.shape_cast %194 : vector<16x128xbf16> to vector<1x16x128xbf16>
    tpu.vector_store %arg6[%195, %c0_63, %c0_64], %198 {strides = array<i32>} : memref<8x16x128xbf16, #tpu.memory_space<vmem>>, vector<1x16x128xbf16>,
    %c5_i32 = arith.constant 5 : i32
    %199 = arith.index_cast %c5_i32 : i32 to index
    %c0_65 = arith.constant 0 : index
    %c0_66 = arith.constant 0 : index
    %200 = vector.load %arg9[%199, %c0_65, %c0_66] : memref<8x16x512xf32, #tpu.memory_space<vmem>>, vector<1x16x512xf32>
    %201 = vector.shape_cast %200 : vector<1x16x512xf32> to vector<16x512xf32>
    %202 = arith.truncf %193 : vector<16x128xf32> to vector<16x128xbf16>
    %c0_67 = arith.constant 0 : index
    %c0_68 = arith.constant 0 : index
    %203 = vector.load %arg4[%c0_67, %c0_68] : memref<128x512xbf16, #tpu.memory_space<vmem>>, vector<128x512xbf16>
    %cst_69 = arith.constant dense<0.000000e+00> : vector<16x512xf32>
    %204 = tpu.matmul %202, %203, %cst_69 {dimension_numbers = #tpu.dot_dimension_numbers<[1], [0], [0], [1], [0, 0, 1, 1], [], []>} : vector<16x128xbf16>, vector<128x512xbf16>, vector<16x512xf32> -> vector<16x512xf32>
    %205 = arith.addf %201, %204 : vector<16x512xf32>
    %206 = vector.extract_strided_slice %205 {offsets = [0, 0], sizes = [16, 128], strides = [1, 1]} : vector<16x512xf32> to vector<16x128xf32>
    %207 = arith.negf %206 : vector<16x128xf32>
    %208 = math.exp %207 : vector<16x128xf32>
    %cst_70 = arith.constant 1.000000e+00 : f32
    %209 = vector.broadcast %cst_70 : f32 to vector<16x128xf32>
    %210 = arith.addf %209, %208 : vector<16x128xf32>
    %211 = arith.divf %209, %210 : vector<16x128xf32>
    %212 = vector.extract_strided_slice %205 {offsets = [0, 128], sizes = [16, 128], strides = [1, 1]} : vector<16x512xf32> to vector<16x128xf32>
    %213 = arith.negf %212 : vector<16x128xf32>
    %214 = math.exp %213 : vector<16x128xf32>
    %cst_71 = arith.constant 1.000000e+00 : f32
    %215 = vector.broadcast %cst_71 : f32 to vector<16x128xf32>
    %216 = arith.addf %215, %214 : vector<16x128xf32>
    %217 = arith.divf %215, %216 : vector<16x128xf32>
    %218 = vector.extract_strided_slice %205 {offsets = [0, 256], sizes = [16, 128], strides = [1, 1]} : vector<16x512xf32> to vector<16x128xf32>
    %219 = math.tanh %218 : vector<16x128xf32>
    %220 = vector.extract_strided_slice %205 {offsets = [0, 384], sizes = [16, 128], strides = [1, 1]} : vector<16x512xf32> to vector<16x128xf32>
    %221 = arith.negf %220 : vector<16x128xf32>
    %222 = math.exp %221 : vector<16x128xf32>
    %cst_72 = arith.constant 1.000000e+00 : f32
    %223 = vector.broadcast %cst_72 : f32 to vector<16x128xf32>
    %224 = arith.addf %223, %222 : vector<16x128xf32>
    %225 = arith.divf %223, %224 : vector<16x128xf32>
    %226 = arith.mulf %217, %191 : vector<16x128xf32>
    %227 = arith.mulf %211, %219 : vector<16x128xf32>
    %228 = arith.addf %226, %227 : vector<16x128xf32>
    %229 = math.tanh %228 : vector<16x128xf32>
    %230 = arith.mulf %225, %229 : vector<16x128xf32>
    %231 = arith.truncf %230 : vector<16x128xf32> to vector<16x128xbf16>
    %232 = arith.index_cast %c5_i32 : i32 to index
    %c0_73 = arith.constant 0 : index
    %c0_74 = arith.constant 0 : index
    %233 = vector.load %arg6[%232, %c0_73, %c0_74] : memref<8x16x128xbf16, #tpu.memory_space<vmem>>, vector<1x16x128xbf16>
    %234 = vector.shape_cast %233 : vector<1x16x128xbf16> to vector<16x128xbf16>
    %235 = vector.shape_cast %231 : vector<16x128xbf16> to vector<1x16x128xbf16>
    tpu.vector_store %arg6[%232, %c0_73, %c0_74], %235 {strides = array<i32>} : memref<8x16x128xbf16, #tpu.memory_space<vmem>>, vector<1x16x128xbf16>,
    %c6_i32 = arith.constant 6 : i32
    %236 = arith.index_cast %c6_i32 : i32 to index
    %c0_75 = arith.constant 0 : index
    %c0_76 = arith.constant 0 : index
    %237 = vector.load %arg9[%236, %c0_75, %c0_76] : memref<8x16x512xf32, #tpu.memory_space<vmem>>, vector<1x16x512xf32>
    %238 = vector.shape_cast %237 : vector<1x16x512xf32> to vector<16x512xf32>
    %239 = arith.truncf %230 : vector<16x128xf32> to vector<16x128xbf16>
    %c0_77 = arith.constant 0 : index
    %c0_78 = arith.constant 0 : index
    %240 = vector.load %arg4[%c0_77, %c0_78] : memref<128x512xbf16, #tpu.memory_space<vmem>>, vector<128x512xbf16>
    %cst_79 = arith.constant dense<0.000000e+00> : vector<16x512xf32>
    %241 = tpu.matmul %239, %240, %cst_79 {dimension_numbers = #tpu.dot_dimension_numbers<[1], [0], [0], [1], [0, 0, 1, 1], [], []>} : vector<16x128xbf16>, vector<128x512xbf16>, vector<16x512xf32> -> vector<16x512xf32>
    %242 = arith.addf %238, %241 : vector<16x512xf32>
    %243 = vector.extract_strided_slice %242 {offsets = [0, 0], sizes = [16, 128], strides = [1, 1]} : vector<16x512xf32> to vector<16x128xf32>
    %244 = arith.negf %243 : vector<16x128xf32>
    %245 = math.exp %244 : vector<16x128xf32>
    %cst_80 = arith.constant 1.000000e+00 : f32
    %246 = vector.broadcast %cst_80 : f32 to vector<16x128xf32>
    %247 = arith.addf %246, %245 : vector<16x128xf32>
    %248 = arith.divf %246, %247 : vector<16x128xf32>
    %249 = vector.extract_strided_slice %242 {offsets = [0, 128], sizes = [16, 128], strides = [1, 1]} : vector<16x512xf32> to vector<16x128xf32>
    %250 = arith.negf %249 : vector<16x128xf32>
    %251 = math.exp %250 : vector<16x128xf32>
    %cst_81 = arith.constant 1.000000e+00 : f32
    %252 = vector.broadcast %cst_81 : f32 to vector<16x128xf32>
    %253 = arith.addf %252, %251 : vector<16x128xf32>
    %254 = arith.divf %252, %253 : vector<16x128xf32>
    %255 = vector.extract_strided_slice %242 {offsets = [0, 256], sizes = [16, 128], strides = [1, 1]} : vector<16x512xf32> to vector<16x128xf32>
    %256 = math.tanh %255 : vector<16x128xf32>
    %257 = vector.extract_strided_slice %242 {offsets = [0, 384], sizes = [16, 128], strides = [1, 1]} : vector<16x512xf32> to vector<16x128xf32>
    %258 = arith.negf %257 : vector<16x128xf32>
    %259 = math.exp %258 : vector<16x128xf32>
    %cst_82 = arith.constant 1.000000e+00 : f32
    %260 = vector.broadcast %cst_82 : f32 to vector<16x128xf32>
    %261 = arith.addf %260, %259 : vector<16x128xf32>
    %262 = arith.divf %260, %261 : vector<16x128xf32>
    %263 = arith.mulf %254, %228 : vector<16x128xf32>
    %264 = arith.mulf %248, %256 : vector<16x128xf32>
    %265 = arith.addf %263, %264 : vector<16x128xf32>
    %266 = math.tanh %265 : vector<16x128xf32>
    %267 = arith.mulf %262, %266 : vector<16x128xf32>
    %268 = arith.truncf %267 : vector<16x128xf32> to vector<16x128xbf16>
    %269 = arith.index_cast %c6_i32 : i32 to index
    %c0_83 = arith.constant 0 : index
    %c0_84 = arith.constant 0 : index
    %270 = vector.load %arg6[%269, %c0_83, %c0_84] : memref<8x16x128xbf16, #tpu.memory_space<vmem>>, vector<1x16x128xbf16>
    %271 = vector.shape_cast %270 : vector<1x16x128xbf16> to vector<16x128xbf16>
    %272 = vector.shape_cast %268 : vector<16x128xbf16> to vector<1x16x128xbf16>
    tpu.vector_store %arg6[%269, %c0_83, %c0_84], %272 {strides = array<i32>} : memref<8x16x128xbf16, #tpu.memory_space<vmem>>, vector<1x16x128xbf16>,
    %c7_i32 = arith.constant 7 : i32
    %273 = arith.index_cast %c7_i32 : i32 to index
    %c0_85 = arith.constant 0 : index
    %c0_86 = arith.constant 0 : index
    %274 = vector.load %arg9[%273, %c0_85, %c0_86] : memref<8x16x512xf32, #tpu.memory_space<vmem>>, vector<1x16x512xf32>
    %275 = vector.shape_cast %274 : vector<1x16x512xf32> to vector<16x512xf32>
    %276 = arith.truncf %267 : vector<16x128xf32> to vector<16x128xbf16>
    %c0_87 = arith.constant 0 : index
    %c0_88 = arith.constant 0 : index
    %277 = vector.load %arg4[%c0_87, %c0_88] : memref<128x512xbf16, #tpu.memory_space<vmem>>, vector<128x512xbf16>
    %cst_89 = arith.constant dense<0.000000e+00> : vector<16x512xf32>
    %278 = tpu.matmul %276, %277, %cst_89 {dimension_numbers = #tpu.dot_dimension_numbers<[1], [0], [0], [1], [0, 0, 1, 1], [], []>} : vector<16x128xbf16>, vector<128x512xbf16>, vector<16x512xf32> -> vector<16x512xf32>
    %279 = arith.addf %275, %278 : vector<16x512xf32>
    %280 = vector.extract_strided_slice %279 {offsets = [0, 0], sizes = [16, 128], strides = [1, 1]} : vector<16x512xf32> to vector<16x128xf32>
    %281 = arith.negf %280 : vector<16x128xf32>
    %282 = math.exp %281 : vector<16x128xf32>
    %cst_90 = arith.constant 1.000000e+00 : f32
    %283 = vector.broadcast %cst_90 : f32 to vector<16x128xf32>
    %284 = arith.addf %283, %282 : vector<16x128xf32>
    %285 = arith.divf %283, %284 : vector<16x128xf32>
    %286 = vector.extract_strided_slice %279 {offsets = [0, 128], sizes = [16, 128], strides = [1, 1]} : vector<16x512xf32> to vector<16x128xf32>
    %287 = arith.negf %286 : vector<16x128xf32>
    %288 = math.exp %287 : vector<16x128xf32>
    %cst_91 = arith.constant 1.000000e+00 : f32
    %289 = vector.broadcast %cst_91 : f32 to vector<16x128xf32>
    %290 = arith.addf %289, %288 : vector<16x128xf32>
    %291 = arith.divf %289, %290 : vector<16x128xf32>
    %292 = vector.extract_strided_slice %279 {offsets = [0, 256], sizes = [16, 128], strides = [1, 1]} : vector<16x512xf32> to vector<16x128xf32>
    %293 = math.tanh %292 : vector<16x128xf32>
    %294 = vector.extract_strided_slice %279 {offsets = [0, 384], sizes = [16, 128], strides = [1, 1]} : vector<16x512xf32> to vector<16x128xf32>
    %295 = arith.negf %294 : vector<16x128xf32>
    %296 = math.exp %295 : vector<16x128xf32>
    %cst_92 = arith.constant 1.000000e+00 : f32
    %297 = vector.broadcast %cst_92 : f32 to vector<16x128xf32>
    %298 = arith.addf %297, %296 : vector<16x128xf32>
    %299 = arith.divf %297, %298 : vector<16x128xf32>
    %300 = arith.mulf %291, %265 : vector<16x128xf32>
    %301 = arith.mulf %285, %293 : vector<16x128xf32>
    %302 = arith.addf %300, %301 : vector<16x128xf32>
    %303 = math.tanh %302 : vector<16x128xf32>
    %304 = arith.mulf %299, %303 : vector<16x128xf32>
    %305 = arith.truncf %304 : vector<16x128xf32> to vector<16x128xbf16>
    %306 = arith.index_cast %c7_i32 : i32 to index
    %c0_93 = arith.constant 0 : index
    %c0_94 = arith.constant 0 : index
    %307 = vector.load %arg6[%306, %c0_93, %c0_94] : memref<8x16x128xbf16, #tpu.memory_space<vmem>>, vector<1x16x128xbf16>
    %308 = vector.shape_cast %307 : vector<1x16x128xbf16> to vector<16x128xbf16>
    %309 = vector.shape_cast %305 : vector<16x128xbf16> to vector<1x16x128xbf16>
    tpu.vector_store %arg6[%306, %c0_93, %c0_94], %309 {strides = array<i32>} : memref<8x16x128xbf16, #tpu.memory_space<vmem>>, vector<1x16x128xbf16>,
    %c8_i32 = arith.constant 8 : i32
    %c0_95 = arith.constant 0 : index
    %c0_96 = arith.constant 0 : index
    %310 = vector.load %arg7[%c0_95, %c0_96] : memref<16x128xf32, #tpu.memory_space<vmem>>, vector<16x128xf32>
    tpu.vector_store %arg7[%c0_95, %c0_96], %304 {strides = array<i32>} : memref<16x128xf32, #tpu.memory_space<vmem>>, vector<16x128xf32>,
    %c0_97 = arith.constant 0 : index
    %c0_98 = arith.constant 0 : index
    %311 = vector.load %arg8[%c0_97, %c0_98] : memref<16x128xf32, #tpu.memory_space<vmem>>, vector<16x128xf32>
    tpu.vector_store %arg8[%c0_97, %c0_98], %302 {strides = array<i32>} : memref<16x128xf32, #tpu.memory_space<vmem>>, vector<16x128xf32>,
    return
  }
  func.func @transform_0(%arg0: i32, %arg1: i32) -> (i32, i32, i32) {
    %c0_i32 = arith.constant 0 : i32
    %c0_i32_0 = arith.constant 0 : i32
    return %arg1, %arg0, %c0_i32 : i32, i32, i32
  }
  func.func @transform_1(%arg0: i32, %arg1: i32) -> (i32, i32) {
    %c0_i32 = arith.constant 0 : i32
    %c0_i32_0 = arith.constant 0 : i32
    %c0_i32_1 = arith.constant 0 : i32
    return %c0_i32, %c0_i32_0 : i32, i32
  }
  func.func @transform_2(%arg0: i32, %arg1: i32) -> (i32, i32) {
    %c0_i32 = arith.constant 0 : i32
    %c0_i32_0 = arith.constant 0 : i32
    %c0_i32_1 = arith.constant 0 : i32
    return %c0_i32, %c0_i32_0 : i32, i32
  }
  func.func @transform_3(%arg0: i32, %arg1: i32) -> (i32, i32) {
    %c0_i32 = arith.constant 0 : i32
    %c0_i32_0 = arith.constant 0 : i32
    %c0_i32_1 = arith.constant 0 : i32
    return %c0_i32, %c0_i32_0 : i32, i32
  }
  func.func @transform_4(%arg0: i32, %arg1: i32) -> (i32, i32, i32) {
    %c0_i32 = arith.constant 0 : i32
    %c0_i32_0 = arith.constant 0 : i32
    return %arg1, %arg0, %c0_i32 : i32, i32, i32
  }
}

</mosaic_0001>

<llo_original>
// kernel: tpu_custom_call.1
$region0: #{tpu_custom_call.1}
  #allocation0 [shape = 'u32[]', space=smem, size = 0x4, offset = 0x4, fixed_abs, tag = 'smem constant byte address 0x4 - core index']
  #allocation1 [shape = 'u32[144,128]{1,0:T(1,128)}', space=vmem, size = 0x12000, scoped, tag = 'internal scratch']
  #allocation2 [shape = 'f32[16,128]{1,0:T(8,128)}', space=vmem, size = 0x2000, scoped, tag = 'scratch operand']
  #allocation3 [shape = 'f32[16,128]{1,0:T(8,128)}', space=vmem, size = 0x2000, scoped, tag = 'scratch operand']
  #allocation4 [shape = 'f32[8,16,512]{2,1,0:T(8,128)}', space=vmem, size = 0x40000, scoped, tag = 'scratch operand']
  %s0 = inlined_call_operand.hbm [shape: bf16[8,16,128], index: 0, kind: input, shape index: {}]
  %s1 = inlined_call_operand.hbm [shape: bf16[128,512], index: 1, kind: input, shape index: {}]
  %s2 = inlined_call_operand.hbm [shape: bf16[128,512], index: 2, kind: input, shape index: {}]
  %s3 = inlined_call_operand.vmem [shape: f32[1,512], index: 3, kind: input, shape index: {}]
  %s4 = inlined_call_operand.hbm [shape: bf16[8,16,128], index: 4, kind: output, shape index: {}]
  %s5 = sld [smem:[#allocation0]]
  $region42: #{tpu_custom_call.1} parent=0
    _
  %s7 = ssub.s32 1, %s5
  %s8 = scalar_select 0, %s7, %s5
  $region1: #{tpu_custom_call.1} parent=0
    #allocation5 [shape = 'u8[32768]{0}', space=vmem, size = 0x8000, scoped, tag = 'input window, operand 0, single buffered']
    #allocation6 [shape = 's32[1]{0}', space=sflag, size = 0x4, scoped, tag = 'scoped memory for tpu_custom_call.1']
    #allocation7 [shape = 's32[1]{0}', space=sflag, size = 0x4, scoped, tag = 'scoped memory for tpu_custom_call.1']
    #allocation8 [shape = 'u8[131072]{0}', space=vmem, size = 0x20000, scoped, tag = 'input window, operand 1, single buffered']
    #allocation9 [shape = 's32[1]{0}', space=sflag, size = 0x4, scoped, tag = 'scoped memory for tpu_custom_call.1']
    #allocation10 [shape = 'u8[131072]{0}', space=vmem, size = 0x20000, scoped, tag = 'input window, operand 2, single buffered']
    #allocation11 [shape = 'u8[32768]{0}', space=vmem, size = 0x8000, scoped, tag = 'output window, operand 0, single buffered']
    %9 = vsyncpa [#allocation6], 0
    %10 = vsyncpa [#allocation9], 0
    %11 = vsyncpa [#allocation7], 0
    // Predicated region
    $region2: #{tpu_custom_call.1} parent=1 // pred_check
      _
    $region3: #{tpu_custom_call.1} parent=1 // pred_check_branch
      %13 = sbr.rel (0) target = $region5
    $region4: #{tpu_custom_call.1} parent=1 // pred_region
      %s15 = ssub.s32 1024, 1024
      %16 = vsyncadd [#allocation6], %s15
      %s17 = sshll.u32 [#allocation5], 4
      %s18 = int_to_ptr.vmem [resolvable:$true] %s17
      %23 = dma.hbm_to_vmem [thread:$0]  %s0, 1024, %s18, [#allocation6], 64, 64, 4
    $region5: #{tpu_custom_call.1} parent=1 // pred_fallthru
      _
    // Predicated region
    $region6: #{tpu_custom_call.1} parent=1 // pred_check
      _
    $region7: #{tpu_custom_call.1} parent=1 // pred_check_branch
      %25 = sbr.rel (0) target = $region9
    $region8: #{tpu_custom_call.1} parent=1 // pred_region
      %s27 = ssub.s32 4096, 4096
      %28 = vsyncadd [#allocation9], %s27
      %s29 = sshll.u32 [#allocation8], 4
      %s30 = int_to_ptr.vmem [resolvable:$true] %s29
      %35 = dma.hbm_to_vmem [thread:$0]  %s1, 4096, %s30, [#allocation9], 256, 256, 16
    $region9: #{tpu_custom_call.1} parent=1 // pred_fallthru
      _
    // Predicated region
    $region10: #{tpu_custom_call.1} parent=1 // pred_check
      _
    $region11: #{tpu_custom_call.1} parent=1 // pred_check_branch
      %37 = sbr.rel (0) target = $region13
    $region12: #{tpu_custom_call.1} parent=1 // pred_region
      %s39 = ssub.s32 4096, 4096
      %40 = vsyncadd [#allocation9], %s39
      %s41 = sshll.u32 [#allocation10], 4
      %s42 = int_to_ptr.vmem [resolvable:$true] %s41
      %47 = dma.hbm_to_vmem [thread:$0]  %s2, 4096, %s42, [#allocation9], 256, 256, 16
    $region13: #{tpu_custom_call.1} parent=1 // pred_fallthru
      _
    // Predicated region
    $region14: #{tpu_custom_call.1} parent=1 // pred_check
      _
    $region15: #{tpu_custom_call.1} parent=1 // pred_check_branch
      %49 = sbr.rel (0) target = $region17
    $region16: #{tpu_custom_call.1} parent=1 // pred_region
      _
    $region17: #{tpu_custom_call.1} parent=1 // pred_fallthru
      _
    // Predicated region
    $region18: #{tpu_custom_call.1} parent=1 // pred_check
      _
    $region19: #{tpu_custom_call.1} parent=1 // pred_check_branch
      %51 = sbr.rel (0) target = $region21
    $region20: #{tpu_custom_call.1} parent=1 // pred_region
      %52 = dma.done [#allocation6], 1024
    $region21: #{tpu_custom_call.1} parent=1 // pred_fallthru
      _
    // Predicated region
    $region22: #{tpu_custom_call.1} parent=1 // pred_check
      _
    $region23: #{tpu_custom_call.1} parent=1 // pred_check_branch
      %54 = sbr.rel (0) target = $region25
    $region24: #{tpu_custom_call.1} parent=1 // pred_region
      %55 = dma.done [#allocation9], 4096
    $region25: #{tpu_custom_call.1} parent=1 // pred_fallthru
      _
    // Predicated region
    $region26: #{tpu_custom_call.1} parent=1 // pred_check
      _
    $region27: #{tpu_custom_call.1} parent=1 // pred_check_branch
      %57 = sbr.rel (0) target = $region29
    $region28: #{tpu_custom_call.1} parent=1 // pred_region
      %58 = dma.done [#allocation9], 4096
    $region29: #{tpu_custom_call.1} parent=1 // pred_fallthru
      _
    %p60 = scmp.eq.s32.totalorder 0, 0
    // Predicated region
    $region30: #{tpu_custom_call.1} parent=1 // pred_check
      %p61 = pneg %p60
    $region31: #{tpu_custom_call.1} parent=1 // pred_check_branch
      %63 = sbr.rel (%p61) target = $region33
    $region32: #{tpu_custom_call.1} parent=1 // pred_region
      %64 = vst [vmem:[#allocation2] sm:$0xff] 0.0
      %65 = vst [vmem:[#allocation2 + $0x8] sm:$0xff] 0.0
      %66 = vst [vmem:[#allocation3] sm:$0xff] 0.0
      %67 = vst [vmem:[#allocation3 + $0x8] sm:$0xff] 0.0
    $region33: #{tpu_custom_call.1} parent=1 // pred_fallthru
      _
    %v68 = vld [vmem:[#allocation5] sm:$0xf]
    %v69 = vld [vmem:[#allocation5 + $0x4] sm:$0xf]
    %v70 = vld [vmem:[#allocation5 + $0x8] sm:$0xf]
    %v71 = vld [vmem:[#allocation5 + $0xc] sm:$0xf]
    %v72 = vld [vmem:[#allocation5 + $0x10] sm:$0xf]
    %v73 = vld [vmem:[#allocation5 + $0x14] sm:$0xf]
    %v74 = vld [vmem:[#allocation5 + $0x18] sm:$0xf]
    %v75 = vld [vmem:[#allocation5 + $0x1c] sm:$0xf]
    %v76 = vld [vmem:[#allocation5 + $0x20] sm:$0xf]
    %v77 = vld [vmem:[#allocation5 + $0x24] sm:$0xf]
    %v78 = vld [vmem:[#allocation5 + $0x28] sm:$0xf]
    %v79 = vld [vmem:[#allocation5 + $0x2c] sm:$0xf]
    %v80 = vld [vmem:[#allocation5 + $0x30] sm:$0xf]
    %v81 = vld [vmem:[#allocation5 + $0x34] sm:$0xf]
    %v82 = vld [vmem:[#allocation5 + $0x38] sm:$0xf]
    %v83 = vld [vmem:[#allocation5 + $0x3c] sm:$0xf]
    %v84 = vld [vmem:[#allocation8] sm:$0xff]
    %v85 = vld [vmem:[#allocation8 + $0x8] sm:$0xff]
    %v86 = vld [vmem:[#allocation8 + $0x10] sm:$0xff]
    %v87 = vld [vmem:[#allocation8 + $0x18] sm:$0xff]
    %v88 = vld [vmem:[#allocation8 + $0x20] sm:$0xff]
    %v89 = vld [vmem:[#allocation8 + $0x28] sm:$0xff]
    %v90 = vld [vmem:[#allocation8 + $0x30] sm:$0xff]
    %v91 = vld [vmem:[#allocation8 + $0x38] sm:$0xff]
    %v92 = vld [vmem:[#allocation8 + $0x40] sm:$0xff]
    %v93 = vld [vmem:[#allocation8 + $0x48] sm:$0xff]
    %v94 = vld [vmem:[#allocation8 + $0x50] sm:$0xff]
    %v95 = vld [vmem:[#allocation8 + $0x58] sm:$0xff]
    %v96 = vld [vmem:[#allocation8 + $0x60] sm:$0xff]
    %v97 = vld [vmem:[#allocation8 + $0x68] sm:$0xff]
    %v98 = vld [vmem:[#allocation8 + $0x70] sm:$0xff]
    %v99 = vld [vmem:[#allocation8 + $0x78] sm:$0xff]
    %v100 = vld [vmem:[#allocation8 + $0x80] sm:$0xff]
    %v101 = vld [vmem:[#allocation8 + $0x88] sm:$0xff]
    %v102 = vld [vmem:[#allocation8 + $0x90] sm:$0xff]
    %v103 = vld [vmem:[#allocation8 + $0x98] sm:$0xff]
    %v104 = vld [vmem:[#allocation8 + $0xa0] sm:$0xff]
    %v105 = vld [vmem:[#allocation8 + $0xa8] sm:$0xff]
    %v106 = vld [vmem:[#allocation8 + $0xb0] sm:$0xff]
    %v107 = vld [vmem:[#allocation8 + $0xb8] sm:$0xff]
    %v108 = vld [vmem:[#allocation8 + $0xc0] sm:$0xff]
    %v109 = vld [vmem:[#allocation8 + $0xc8] sm:$0xff]
    %v110 = vld [vmem:[#allocation8 + $0xd0] sm:$0xff]
    %v111 = vld [vmem:[#allocation8 + $0xd8] sm:$0xff]
    %v112 = vld [vmem:[#allocation8 + $0xe0] sm:$0xff]
    %v113 = vld [vmem:[#allocation8 + $0xe8] sm:$0xff]
    %v114 = vld [vmem:[#allocation8 + $0xf0] sm:$0xff]
    %v115 = vld [vmem:[#allocation8 + $0xf8] sm:$0xff]
    %v116 = vld [vmem:[%s3] sm:$0xf]
    %v118 = vlaneseq
    %v119 = vshrl.u32 %v118, 7
    %v120 = vsub.s32 0, %v119
    %v121 = vrot.slane %v116, %v120
    %v122 = vlaneseq
    %v123 = vshrl.u32 %v122, 7
    %v124 = vsub.s32 1, %v123
    %v125 = vrot.slane %v116, %v124
    %v126 = vlaneseq
    %v127 = vshrl.u32 %v126, 7
    %v128 = vsub.s32 2, %v127
    %v129 = vrot.slane %v116, %v128
    %v130 = vlaneseq
    %v131 = vshrl.u32 %v130, 7
    %v132 = vsub.s32 3, %v131
    %v133 = vrot.slane %v116, %v132
    %v154 = vunpack.c.l.b16 %v68
    %v155 = vunpack.c.l.b16 %v69
    %v156 = vunpack.c.l.b16 %v70
    %v157 = vunpack.c.l.b16 %v71
    %v158 = vunpack.c.l.b16 %v72
    %v159 = vunpack.c.l.b16 %v73
    %v160 = vunpack.c.l.b16 %v74
    %v161 = vunpack.c.l.b16 %v75
    %v162 = vunpack.c.l.b16 %v76
    %v163 = vunpack.c.l.b16 %v77
    %v164 = vunpack.c.l.b16 %v78
    %v165 = vunpack.c.l.b16 %v79
    %v166 = vunpack.c.l.b16 %v80
    %v167 = vunpack.c.l.b16 %v81
    %v168 = vunpack.c.l.b16 %v82
    %v169 = vunpack.c.l.b16 %v83
    %v170 = vpack.c.b16 %v155, %v154
    %v171 = vpack.c.b16 %v157, %v156
    %v172 = vpack.c.b16 %v159, %v158
    %v173 = vpack.c.b16 %v161, %v160
    %v174 = vpack.c.b16 %v163, %v162
    %v175 = vpack.c.b16 %v165, %v164
    %v176 = vpack.c.b16 %v167, %v166
    %v177 = vpack.c.b16 %v169, %v168
    %v218 = vunpack.c.l.b16 %v84
    %v219 = vunpack.c.h.b16 %v84
    %v220 = vunpack.c.l.b16 %v85
    %v221 = vunpack.c.h.b16 %v85
    %v222 = vunpack.c.l.b16 %v86
    %v223 = vunpack.c.h.b16 %v86
    %v224 = vunpack.c.l.b16 %v87
    %v225 = vunpack.c.h.b16 %v87
    %v226 = vunpack.c.l.b16 %v88
    %v227 = vunpack.c.h.b16 %v88
    %v228 = vunpack.c.l.b16 %v89
    %v229 = vunpack.c.h.b16 %v89
    %v230 = vunpack.c.l.b16 %v90
    %v231 = vunpack.c.h.b16 %v90
    %v232 = vunpack.c.l.b16 %v91
    %v233 = vunpack.c.h.b16 %v91
    %v234 = vunpack.c.l.b16 %v92
    %v235 = vunpack.c.h.b16 %v92
    %v236 = vunpack.c.l.b16 %v93
    %v237 = vunpack.c.h.b16 %v93
    %v238 = vunpack.c.l.b16 %v94
    %v239 = vunpack.c.h.b16 %v94
    %v240 = vunpack.c.l.b16 %v95
    %v241 = vunpack.c.h.b16 %v95
    %v242 = vunpack.c.l.b16 %v96
    %v243 = vunpack.c.h.b16 %v96
    %v244 = vunpack.c.l.b16 %v97
    %v245 = vunpack.c.h.b16 %v97
    %v246 = vunpack.c.l.b16 %v98
    %v247 = vunpack.c.h.b16 %v98
    %v248 = vunpack.c.l.b16 %v99
    %v249 = vunpack.c.h.b16 %v99
    %v250 = vunpack.c.l.b16 %v100
    %v251 = vunpack.c.h.b16 %v100
    %v252 = vunpack.c.l.b16 %v101
    %v253 = vunpack.c.h.b16 %v101
    %v254 = vunpack.c.l.b16 %v102
    %v255 = vunpack.c.h.b16 %v102
    %v256 = vunpack.c.l.b16 %v103
    %v257 = vunpack.c.h.b16 %v103
    %v258 = vunpack.c.l.b16 %v104
    %v259 = vunpack.c.h.b16 %v104
    %v260 = vunpack.c.l.b16 %v105
    %v261 = vunpack.c.h.b16 %v105
    %v262 = vunpack.c.l.b16 %v106
    %v263 = vunpack.c.h.b16 %v106
    %v264 = vunpack.c.l.b16 %v107
    %v265 = vunpack.c.h.b16 %v107
    %v266 = vunpack.c.l.b16 %v108
    %v267 = vunpack.c.h.b16 %v108
    %v268 = vunpack.c.l.b16 %v109
    %v269 = vunpack.c.h.b16 %v109
    %v270 = vunpack.c.l.b16 %v110
    %v271 = vunpack.c.h.b16 %v110
    %v272 = vunpack.c.l.b16 %v111
    %v273 = vunpack.c.h.b16 %v111
    %v274 = vunpack.c.l.b16 %v112
    %v275 = vunpack.c.h.b16 %v112
    %v276 = vunpack.c.l.b16 %v113
    %v277 = vunpack.c.h.b16 %v113
    %v278 = vunpack.c.l.b16 %v114
    %v279 = vunpack.c.h.b16 %v114
    %v280 = vunpack.c.l.b16 %v115
    %v281 = vunpack.c.h.b16 %v115
    %v282 = vpack.c.b16 %v222, %v218
    %v283 = vpack.c.b16 %v223, %v219
    %v284 = vpack.c.b16 %v224, %v220
    %v285 = vpack.c.b16 %v225, %v221
    %v286 = vpack.c.b16 %v230, %v226
    %v287 = vpack.c.b16 %v231, %v227
    %v288 = vpack.c.b16 %v232, %v228
    %v289 = vpack.c.b16 %v233, %v229
    %v290 = vpack.c.b16 %v238, %v234
    %v291 = vpack.c.b16 %v239, %v235
    %v292 = vpack.c.b16 %v240, %v236
    %v293 = vpack.c.b16 %v241, %v237
    %v294 = vpack.c.b16 %v246, %v242
    %v295 = vpack.c.b16 %v247, %v243
    %v296 = vpack.c.b16 %v248, %v244
    %v297 = vpack.c.b16 %v249, %v245
    %v298 = vpack.c.b16 %v254, %v250
    %v299 = vpack.c.b16 %v255, %v251
    %v300 = vpack.c.b16 %v256, %v252
    %v301 = vpack.c.b16 %v257, %v253
    %v302 = vpack.c.b16 %v262, %v258
    %v303 = vpack.c.b16 %v263, %v259
    %v304 = vpack.c.b16 %v264, %v260
    %v305 = vpack.c.b16 %v265, %v261
    %v306 = vpack.c.b16 %v270, %v266
    %v307 = vpack.c.b16 %v271, %v267
    %v308 = vpack.c.b16 %v272, %v268
    %v309 = vpack.c.b16 %v273, %v269
    %v310 = vpack.c.b16 %v278, %v274
    %v311 = vpack.c.b16 %v279, %v275
    %v312 = vpack.c.b16 %v280, %v276
    %v313 = vpack.c.b16 %v281, %v277
    %346 = vmatprep.subr.bf16.mxu0 %v283
    %347 = vmatpush1.bf16.msra.mxu0 %v282
    %348 = vmatprep.subr.bf16.mxu0 %v287
    %349 = vmatpush1.bf16.msra.mxu0 %v286
    %350 = vmatprep.subr.bf16.mxu0 %v291
    %351 = vmatpush1.bf16.msra.mxu0 %v290
    %352 = vmatprep.subr.bf16.mxu0 %v295
    %353 = vmatpush1.bf16.msra.mxu0 %v294
    %354 = vmatprep.subr.bf16.mxu0 %v299
    %355 = vmatpush1.bf16.msra.mxu0 %v298
    %356 = vmatprep.subr.bf16.mxu0 %v303
    %357 = vmatpush1.bf16.msra.mxu0 %v302
    %358 = vmatprep.subr.bf16.mxu0 %v307
    %359 = vmatpush1.bf16.msra.mxu0 %v306
    %360 = vmatprep.subr.bf16.mxu0 %v311
    %361 = vmatpush1.bf16.msra.mxu0 %v310
    %362 = vmatprep.subr.bf16.mxu0 0
    %363 = vmatpush1.bf16.msra.mxu0 0
    %364 = vmatprep.subr.bf16.mxu0 0
    %365 = vmatpush1.bf16.msra.mxu0 0
    %366 = vmatprep.subr.bf16.mxu0 0
    %367 = vmatpush1.bf16.msra.mxu0 0
    %368 = vmatprep.subr.bf16.mxu0 0
    %369 = vmatpush1.bf16.msra.mxu0 0
    %370 = vmatprep.subr.bf16.mxu0 0
    %371 = vmatpush1.bf16.msra.mxu0 0
    %372 = vmatprep.subr.bf16.mxu0 0
    %373 = vmatpush1.bf16.msra.mxu0 0
    %374 = vmatprep.subr.bf16.mxu0 0
    %375 = vmatpush1.bf16.msra.mxu0 0
    %376 = vmatprep.subr.bf16.mxu0 0
    %377 = vmatpush1.bf16.msra.mxu0 0
    %378 = vmatprep.mubr.bf16.mxu0 0
    %379 = vmatmul.mubr.bf16.gmra.mrb[0].mxu0 %v170
    %v380 = vpop.f32.mrb[0].mxu0
    %v381 = vadd.f32 %v121, %v380
    %v382 = vpop.f32.mrb[0].mxu0
    %v383 = vadd.f32 %v125, %v382
    %v384 = vpop.f32.mrb[0].mxu0
    %v385 = vadd.f32 %v121, %v384
    %v386 = vpop.f32.mrb[0].mxu0
    %v387 = vadd.f32 %v125, %v386
    %388 = vmatprep.mubr.bf16.mxu0 0
    %389 = vmatmul.mubr.bf16.gmra.mrb[0].mxu0 %v171
    %v390 = vpop.f32.mrb[0].mxu0
    %v391 = vadd.f32 %v121, %v390
    %v392 = vpop.f32.mrb[0].mxu0
    %v393 = vadd.f32 %v125, %v392
    %v394 = vpop.f32.mrb[0].mxu0
    %v395 = vadd.f32 %v121, %v394
    %v396 = vpop.f32.mrb[0].mxu0
    %v397 = vadd.f32 %v125, %v396
    %398 = vmatprep.mubr.bf16.mxu0 0
    %399 = vmatmul.mubr.bf16.gmra.mrb[0].mxu0 %v172
    %v400 = vpop.f32.mrb[0].mxu0
    %v401 = vadd.f32 %v121, %v400
    %v402 = vpop.f32.mrb[0].mxu0
    %v403 = vadd.f32 %v125, %v402
    %v404 = vpop.f32.mrb[0].mxu0
    %v405 = vadd.f32 %v121, %v404
    %v406 = vpop.f32.mrb[0].mxu0
    %v407 = vadd.f32 %v125, %v406
    %408 = vmatprep.mubr.bf16.mxu0 0
    %409 = vmatmul.mubr.bf16.gmra.mrb[0].mxu0 %v173
    %v410 = vpop.f32.mrb[0].mxu0
    %v411 = vadd.f32 %v121, %v410
    %v412 = vpop.f32.mrb[0].mxu0
    %v413 = vadd.f32 %v125, %v412
    %v414 = vpop.f32.mrb[0].mxu0
    %v415 = vadd.f32 %v121, %v414
    %v416 = vpop.f32.mrb[0].mxu0
    %v417 = vadd.f32 %v125, %v416
    %418 = vmatprep.mubr.bf16.mxu0 0
    %419 = vmatmul.mubr.bf16.gmra.mrb[0].mxu0 %v174
    %v420 = vpop.f32.mrb[0].mxu0
    %v421 = vadd.f32 %v121, %v420
    %v422 = vpop.f32.mrb[0].mxu0
    %v423 = vadd.f32 %v125, %v422
    %v424 = vpop.f32.mrb[0].mxu0
    %v425 = vadd.f32 %v121, %v424
    %v426 = vpop.f32.mrb[0].mxu0
    %v427 = vadd.f32 %v125, %v426
    %428 = vmatprep.mubr.bf16.mxu0 0
    %429 = vmatmul.mubr.bf16.gmra.mrb[0].mxu0 %v175
    %v430 = vpop.f32.mrb[0].mxu0
    %v431 = vadd.f32 %v121, %v430
    %v432 = vpop.f32.mrb[0].mxu0
    %v433 = vadd.f32 %v125, %v432
    %v434 = vpop.f32.mrb[0].mxu0
    %v435 = vadd.f32 %v121, %v434
    %v436 = vpop.f32.mrb[0].mxu0
    %v437 = vadd.f32 %v125, %v436
    %438 = vmatprep.mubr.bf16.mxu0 0
    %439 = vmatmul.mubr.bf16.gmra.mrb[0].mxu0 %v176
    %v440 = vpop.f32.mrb[0].mxu0
    %v441 = vadd.f32 %v121, %v440
    %v442 = vpop.f32.mrb[0].mxu0
    %v443 = vadd.f32 %v125, %v442
    %v444 = vpop.f32.mrb[0].mxu0
    %v445 = vadd.f32 %v121, %v444
    %v446 = vpop.f32.mrb[0].mxu0
    %v447 = vadd.f32 %v125, %v446
    %448 = vmatprep.mubr.bf16.mxu0 0
    %449 = vmatmul.mubr.bf16.gmra.mrb[0].mxu0 %v177
    %v450 = vpop.f32.mrb[0].mxu0
    %v451 = vadd.f32 %v121, %v450
    %v452 = vpop.f32.mrb[0].mxu0
    %v453 = vadd.f32 %v125, %v452
    %v454 = vpop.f32.mrb[0].mxu0
    %v455 = vadd.f32 %v121, %v454
    %v456 = vpop.f32.mrb[0].mxu0
    %v457 = vadd.f32 %v125, %v456
    %458 = vdwg.mxu0
    %459 = vmatprep.subr.bf16.mxu0 %v285
    %460 = vmatpush1.bf16.msra.mxu0 %v284
    %461 = vmatprep.subr.bf16.mxu0 %v289
    %462 = vmatpush1.bf16.msra.mxu0 %v288
    %463 = vmatprep.subr.bf16.mxu0 %v293
    %464 = vmatpush1.bf16.msra.mxu0 %v292
    %465 = vmatprep.subr.bf16.mxu0 %v297
    %466 = vmatpush1.bf16.msra.mxu0 %v296
    %467 = vmatprep.subr.bf16.mxu0 %v301
    %468 = vmatpush1.bf16.msra.mxu0 %v300
    %469 = vmatprep.subr.bf16.mxu0 %v305
    %470 = vmatpush1.bf16.msra.mxu0 %v304
    %471 = vmatprep.subr.bf16.mxu0 %v309
    %472 = vmatpush1.bf16.msra.mxu0 %v308
    %473 = vmatprep.subr.bf16.mxu0 %v313
    %474 = vmatpush1.bf16.msra.mxu0 %v312
    %475 = vmatprep.subr.bf16.mxu0 0
    %476 = vmatpush1.bf16.msra.mxu0 0
    %477 = vmatprep.subr.bf16.mxu0 0
    %478 = vmatpush1.bf16.msra.mxu0 0
    %479 = vmatprep.subr.bf16.mxu0 0
    %480 = vmatpush1.bf16.msra.mxu0 0
    %481 = vmatprep.subr.bf16.mxu0 0
    %482 = vmatpush1.bf16.msra.mxu0 0
    %483 = vmatprep.subr.bf16.mxu0 0
    %484 = vmatpush1.bf16.msra.mxu0 0
    %485 = vmatprep.subr.bf16.mxu0 0
    %486 = vmatpush1.bf16.msra.mxu0 0
    %487 = vmatprep.subr.bf16.mxu0 0
    %488 = vmatpush1.bf16.msra.mxu0 0
    %489 = vmatprep.subr.bf16.mxu0 0
    %490 = vmatpush1.bf16.msra.mxu0 0
    %491 = vmatprep.mubr.bf16.mxu0 0
    %492 = vmatmul.mubr.bf16.gmra.mrb[0].mxu0 %v170
    %v493 = vpop.f32.mrb[0].mxu0
    %v494 = vadd.f32 %v129, %v493
    %v495 = vpop.f32.mrb[0].mxu0
    %v496 = vadd.f32 %v133, %v495
    %v497 = vpop.f32.mrb[0].mxu0
    %v498 = vadd.f32 %v129, %v497
    %v499 = vpop.f32.mrb[0].mxu0
    %v500 = vadd.f32 %v133, %v499
    %501 = vmatprep.mubr.bf16.mxu0 0
    %502 = vmatmul.mubr.bf16.gmra.mrb[0].mxu0 %v171
    %v503 = vpop.f32.mrb[0].mxu0
    %v504 = vadd.f32 %v129, %v503
    %v505 = vpop.f32.mrb[0].mxu0
    %v506 = vadd.f32 %v133, %v505
    %v507 = vpop.f32.mrb[0].mxu0
    %v508 = vadd.f32 %v129, %v507
    %v509 = vpop.f32.mrb[0].mxu0
    %v510 = vadd.f32 %v133, %v509
    %511 = vmatprep.mubr.bf16.mxu0 0
    %512 = vmatmul.mubr.bf16.gmra.mrb[0].mxu0 %v172
    %v513 = vpop.f32.mrb[0].mxu0
    %v514 = vadd.f32 %v129, %v513
    %v515 = vpop.f32.mrb[0].mxu0
    %v516 = vadd.f32 %v133, %v515
    %v517 = vpop.f32.mrb[0].mxu0
    %v518 = vadd.f32 %v129, %v517
    %v519 = vpop.f32.mrb[0].mxu0
    %v520 = vadd.f32 %v133, %v519
    %521 = vmatprep.mubr.bf16.mxu0 0
    %522 = vmatmul.mubr.bf16.gmra.mrb[0].mxu0 %v173
    %v523 = vpop.f32.mrb[0].mxu0
    %v524 = vadd.f32 %v129, %v523
    %v525 = vpop.f32.mrb[0].mxu0
    %v526 = vadd.f32 %v133, %v525
    %v527 = vpop.f32.mrb[0].mxu0
    %v528 = vadd.f32 %v129, %v527
    %v529 = vpop.f32.mrb[0].mxu0
    %v530 = vadd.f32 %v133, %v529
    %531 = vmatprep.mubr.bf16.mxu0 0
    %532 = vmatmul.mubr.bf16.gmra.mrb[0].mxu0 %v174
    %v533 = vpop.f32.mrb[0].mxu0
    %v534 = vadd.f32 %v129, %v533
    %v535 = vpop.f32.mrb[0].mxu0
    %v536 = vadd.f32 %v133, %v535
    %v537 = vpop.f32.mrb[0].mxu0
    %v538 = vadd.f32 %v129, %v537
    %v539 = vpop.f32.mrb[0].mxu0
    %v540 = vadd.f32 %v133, %v539
    %541 = vmatprep.mubr.bf16.mxu0 0
    %542 = vmatmul.mubr.bf16.gmra.mrb[0].mxu0 %v175
    %v543 = vpop.f32.mrb[0].mxu0
    %v544 = vadd.f32 %v129, %v543
    %v545 = vpop.f32.mrb[0].mxu0
    %v546 = vadd.f32 %v133, %v545
    %v547 = vpop.f32.mrb[0].mxu0
    %v548 = vadd.f32 %v129, %v547
    %v549 = vpop.f32.mrb[0].mxu0
    %v550 = vadd.f32 %v133, %v549
    %551 = vmatprep.mubr.bf16.mxu0 0
    %552 = vmatmul.mubr.bf16.gmra.mrb[0].mxu0 %v176
    %v553 = vpop.f32.mrb[0].mxu0
    %v554 = vadd.f32 %v129, %v553
    %v555 = vpop.f32.mrb[0].mxu0
    %v556 = vadd.f32 %v133, %v555
    %v557 = vpop.f32.mrb[0].mxu0
    %v558 = vadd.f32 %v129, %v557
    %v559 = vpop.f32.mrb[0].mxu0
    %v560 = vadd.f32 %v133, %v559
    %561 = vmatprep.mubr.bf16.mxu0 0
    %562 = vmatmul.mubr.bf16.gmra.mrb[0].mxu0 %v177
    %v563 = vpop.f32.mrb[0].mxu0
    %v564 = vadd.f32 %v129, %v563
    %v565 = vpop.f32.mrb[0].mxu0
    %v566 = vadd.f32 %v133, %v565
    %v567 = vpop.f32.mrb[0].mxu0
    %v568 = vadd.f32 %v129, %v567
    %v569 = vpop.f32.mrb[0].mxu0
    %v570 = vadd.f32 %v133, %v569
    %571 = vdwg.mxu0
    %572 = vst [vmem:[#allocation4] sm:$0xff] %v381
    %573 = vst [vmem:[#allocation4 + $0x8] sm:$0xff] %v383
    %574 = vst [vmem:[#allocation4 + $0x10] sm:$0xff] %v494
    %575 = vst [vmem:[#allocation4 + $0x18] sm:$0xff] %v496
    %576 = vst [vmem:[#allocation4 + $0x20] sm:$0xff] %v385
    %577 = vst [vmem:[#allocation4 + $0x28] sm:$0xff] %v387
    %578 = vst [vmem:[#allocation4 + $0x30] sm:$0xff] %v498
    %579 = vst [vmem:[#allocation4 + $0x38] sm:$0xff] %v500
    %580 = vst [vmem:[#allocation4 + $0x40] sm:$0xff] %v391
    %581 = vst [vmem:[#allocation4 + $0x48] sm:$0xff] %v393
    %582 = vst [vmem:[#allocation4 + $0x50] sm:$0xff] %v504
    %583 = vst [vmem:[#allocation4 + $0x58] sm:$0xff] %v506
    %584 = vst [vmem:[#allocation4 + $0x60] sm:$0xff] %v395
    %585 = vst [vmem:[#allocation4 + $0x68] sm:$0xff] %v397
    %586 = vst [vmem:[#allocation4 + $0x70] sm:$0xff] %v508
    %587 = vst [vmem:[#allocation4 + $0x78] sm:$0xff] %v510
    %588 = vst [vmem:[#allocation4 + $0x80] sm:$0xff] %v401
    %589 = vst [vmem:[#allocation4 + $0x88] sm:$0xff] %v403
    %590 = vst [vmem:[#allocation4 + $0x90] sm:$0xff] %v514
    %591 = vst [vmem:[#allocation4 + $0x98] sm:$0xff] %v516
    %592 = vst [vmem:[#allocation4 + $0xa0] sm:$0xff] %v405
    %593 = vst [vmem:[#allocation4 + $0xa8] sm:$0xff] %v407
    %594 = vst [vmem:[#allocation4 + $0xb0] sm:$0xff] %v518
    %595 = vst [vmem:[#allocation4 + $0xb8] sm:$0xff] %v520
    %596 = vst [vmem:[#allocation4 + $0xc0] sm:$0xff] %v411
    %597 = vst [vmem:[#allocation4 + $0xc8] sm:$0xff] %v413
    %598 = vst [vmem:[#allocation4 + $0xd0] sm:$0xff] %v524
    %599 = vst [vmem:[#allocation4 + $0xd8] sm:$0xff] %v526
    %600 = vst [vmem:[#allocation4 + $0xe0] sm:$0xff] %v415
    %601 = vst [vmem:[#allocation4 + $0xe8] sm:$0xff] %v417
    %602 = vst [vmem:[#allocation4 + $0xf0] sm:$0xff] %v528
    %603 = vst [vmem:[#allocation4 + $0xf8] sm:$0xff] %v530
    %604 = vst [vmem:[#allocation4 + $0x100] sm:$0xff] %v421
    %605 = vst [vmem:[#allocation4 + $0x108] sm:$0xff] %v423
    %606 = vst [vmem:[#allocation4 + $0x110] sm:$0xff] %v534
    %607 = vst [vmem:[#allocation4 + $0x118] sm:$0xff] %v536
    %608 = vst [vmem:[#allocation4 + $0x120] sm:$0xff] %v425
    %609 = vst [vmem:[#allocation4 + $0x128] sm:$0xff] %v427
    %610 = vst [vmem:[#allocation4 + $0x130] sm:$0xff] %v538
    %611 = vst [vmem:[#allocation4 + $0x138] sm:$0xff] %v540
    %612 = vst [vmem:[#allocation4 + $0x140] sm:$0xff] %v431
    %613 = vst [vmem:[#allocation4 + $0x148] sm:$0xff] %v433
    %614 = vst [vmem:[#allocation4 + $0x150] sm:$0xff] %v544
    %615 = vst [vmem:[#allocation4 + $0x158] sm:$0xff] %v546
    %616 = vst [vmem:[#allocation4 + $0x160] sm:$0xff] %v435
    %617 = vst [vmem:[#allocation4 + $0x168] sm:$0xff] %v437
    %618 = vst [vmem:[#allocation4 + $0x170] sm:$0xff] %v548
    %619 = vst [vmem:[#allocation4 + $0x178] sm:$0xff] %v550
    %620 = vst [vmem:[#allocation4 + $0x180] sm:$0xff] %v441
    %621 = vst [vmem:[#allocation4 + $0x188] sm:$0xff] %v443
    %622 = vst [vmem:[#allocation4 + $0x190] sm:$0xff] %v554
    %623 = vst [vmem:[#allocation4 + $0x198] sm:$0xff] %v556
    %624 = vst [vmem:[#allocation4 + $0x1a0] sm:$0xff] %v445
    %625 = vst [vmem:[#allocation4 + $0x1a8] sm:$0xff] %v447
    %626 = vst [vmem:[#allocation4 + $0x1b0] sm:$0xff] %v558
    %627 = vst [vmem:[#allocation4 + $0x1b8] sm:$0xff] %v560
    %628 = vst [vmem:[#allocation4 + $0x1c0] sm:$0xff] %v451
    %629 = vst [vmem:[#allocation4 + $0x1c8] sm:$0xff] %v453
    %630 = vst [vmem:[#allocation4 + $0x1d0] sm:$0xff] %v564
    %631 = vst [vmem:[#allocation4 + $0x1d8] sm:$0xff] %v566
    %632 = vst [vmem:[#allocation4 + $0x1e0] sm:$0xff] %v455
    %633 = vst [vmem:[#allocation4 + $0x1e8] sm:$0xff] %v457
    %634 = vst [vmem:[#allocation4 + $0x1f0] sm:$0xff] %v568
    %635 = vst [vmem:[#allocation4 + $0x1f8] sm:$0xff] %v570
    %v636 = vld [vmem:[#allocation2] sm:$0xff]
    %v637 = vld [vmem:[#allocation2 + $0x8] sm:$0xff]
    %v638 = vld [vmem:[#allocation3] sm:$0xff]
    %v639 = vld [vmem:[#allocation3 + $0x8] sm:$0xff]
    %v640 = vld [vmem:[#allocation4] sm:$0xff]
    %v641 = vld [vmem:[#allocation4 + $0x8] sm:$0xff]
    %v642 = vld [vmem:[#allocation4 + $0x10] sm:$0xff]
    %v643 = vld [vmem:[#allocation4 + $0x18] sm:$0xff]
    %v644 = vld [vmem:[#allocation4 + $0x20] sm:$0xff]
    %v645 = vld [vmem:[#allocation4 + $0x28] sm:$0xff]
    %v646 = vld [vmem:[#allocation4 + $0x30] sm:$0xff]
    %v647 = vld [vmem:[#allocation4 + $0x38] sm:$0xff]
    %v648 = vpack.c.bf16 %v637, %v636
    %v649 = vld [vmem:[#allocation10] sm:$0xff]
    %v650 = vld [vmem:[#allocation10 + $0x8] sm:$0xff]
    %v651 = vld [vmem:[#allocation10 + $0x10] sm:$0xff]
    %v652 = vld [vmem:[#allocation10 + $0x18] sm:$0xff]
    %v653 = vld [vmem:[#allocation10 + $0x20] sm:$0xff]
    %v654 = vld [vmem:[#allocation10 + $0x28] sm:$0xff]
    %v655 = vld [vmem:[#allocation10 + $0x30] sm:$0xff]
    %v656 = vld [vmem:[#allocation10 + $0x38] sm:$0xff]
    %v657 = vld [vmem:[#allocation10 + $0x40] sm:$0xff]
    %v658 = vld [vmem:[#allocation10 + $0x48] sm:$0xff]
    %v659 = vld [vmem:[#allocation10 + $0x50] sm:$0xff]
    %v660 = vld [vmem:[#allocation10 + $0x58] sm:$0xff]
    %v661 = vld [vmem:[#allocation10 + $0x60] sm:$0xff]
    %v662 = vld [vmem:[#allocation10 + $0x68] sm:$0xff]
    %v663 = vld [vmem:[#allocation10 + $0x70] sm:$0xff]
    %v664 = vld [vmem:[#allocation10 + $0x78] sm:$0xff]
    %v665 = vld [vmem:[#allocation10 + $0x80] sm:$0xff]
    %v666 = vld [vmem:[#allocation10 + $0x88] sm:$0xff]
    %v667 = vld [vmem:[#allocation10 + $0x90] sm:$0xff]
    %v668 = vld [vmem:[#allocation10 + $0x98] sm:$0xff]
    %v669 = vld [vmem:[#allocation10 + $0xa0] sm:$0xff]
    %v670 = vld [vmem:[#allocation10 + $0xa8] sm:$0xff]
    %v671 = vld [vmem:[#allocation10 + $0xb0] sm:$0xff]
    %v672 = vld [vmem:[#allocation10 + $0xb8] sm:$0xff]
    %v673 = vld [vmem:[#allocation10 + $0xc0] sm:$0xff]
    %v674 = vld [vmem:[#allocation10 + $0xc8] sm:$0xff]
    %v675 = vld [vmem:[#allocation10 + $0xd0] sm:$0xff]
    %v676 = vld [vmem:[#allocation10 + $0xd8] sm:$0xff]
    %v677 = vld [vmem:[#allocation10 + $0xe0] sm:$0xff]
    %v678 = vld [vmem:[#allocation10 + $0xe8] sm:$0xff]
    %v679 = vld [vmem:[#allocation10 + $0xf0] sm:$0xff]
    %v680 = vld [vmem:[#allocation10 + $0xf8] sm:$0xff]
    %v713 = vunpack.c.l.b16 %v649
    %v714 = vunpack.c.h.b16 %v649
    %v715 = vunpack.c.l.b16 %v650
    %v716 = vunpack.c.h.b16 %v650
    %v717 = vunpack.c.l.b16 %v651
    %v718 = vunpack.c.h.b16 %v651
    %v719 = vunpack.c.l.b16 %v652
    %v720 = vunpack.c.h.b16 %v652
    %v721 = vunpack.c.l.b16 %v653
    %v722 = vunpack.c.h.b16 %v653
    %v723 = vunpack.c.l.b16 %v654
    %v724 = vunpack.c.h.b16 %v654
    %v725 = vunpack.c.l.b16 %v655
    %v726 = vunpack.c.h.b16 %v655
    %v727 = vunpack.c.l.b16 %v656
    %v728 = vunpack.c.h.b16 %v656
    %v729 = vunpack.c.l.b16 %v657
    %v730 = vunpack.c.h.b16 %v657
    %v731 = vunpack.c.l.b16 %v658
    %v732 = vunpack.c.h.b16 %v658
    %v733 = vunpack.c.l.b16 %v659
    %v734 = vunpack.c.h.b16 %v659
    %v735 = vunpack.c.l.b16 %v660
    %v736 = vunpack.c.h.b16 %v660
    %v737 = vunpack.c.l.b16 %v661
    %v738 = vunpack.c.h.b16 %v661
    %v739 = vunpack.c.l.b16 %v662
    %v740 = vunpack.c.h.b16 %v662
    %v741 = vunpack.c.l.b16 %v663
    %v742 = vunpack.c.h.b16 %v663
    %v743 = vunpack.c.l.b16 %v664
    %v744 = vunpack.c.h.b16 %v664
    %v745 = vunpack.c.l.b16 %v665
    %v746 = vunpack.c.h.b16 %v665
    %v747 = vunpack.c.l.b16 %v666
    %v748 = vunpack.c.h.b16 %v666
    %v749 = vunpack.c.l.b16 %v667
    %v750 = vunpack.c.h.b16 %v667
    %v751 = vunpack.c.l.b16 %v668
    %v752 = vunpack.c.h.b16 %v668
    %v753 = vunpack.c.l.b16 %v669
    %v754 = vunpack.c.h.b16 %v669
    %v755 = vunpack.c.l.b16 %v670
    %v756 = vunpack.c.h.b16 %v670
    %v757 = vunpack.c.l.b16 %v671
    %v758 = vunpack.c.h.b16 %v671
    %v759 = vunpack.c.l.b16 %v672
    %v760 = vunpack.c.h.b16 %v672
    %v761 = vunpack.c.l.b16 %v673
    %v762 = vunpack.c.h.b16 %v673
    %v763 = vunpack.c.l.b16 %v674
    %v764 = vunpack.c.h.b16 %v674
    %v765 = vunpack.c.l.b16 %v675
    %v766 = vunpack.c.h.b16 %v675
    %v767 = vunpack.c.l.b16 %v676
    %v768 = vunpack.c.h.b16 %v676
    %v769 = vunpack.c.l.b16 %v677
    %v770 = vunpack.c.h.b16 %v677
    %v771 = vunpack.c.l.b16 %v678
    %v772 = vunpack.c.h.b16 %v678
    %v773 = vunpack.c.l.b16 %v679
    %v774 = vunpack.c.h.b16 %v679
    %v775 = vunpack.c.l.b16 %v680
    %v776 = vunpack.c.h.b16 %v680
    %v777 = vpack.c.b16 %v717, %v713
    %v778 = vpack.c.b16 %v718, %v714
    %v779 = vpack.c.b16 %v719, %v715
    %v780 = vpack.c.b16 %v720, %v716
    %v781 = vpack.c.b16 %v725, %v721
    %v782 = vpack.c.b16 %v726, %v722
    %v783 = vpack.c.b16 %v727, %v723
    %v784 = vpack.c.b16 %v728, %v724
    %v785 = vpack.c.b16 %v733, %v729
    %v786 = vpack.c.b16 %v734, %v730
    %v787 = vpack.c.b16 %v735, %v731
    %v788 = vpack.c.b16 %v736, %v732
    %v789 = vpack.c.b16 %v741, %v737
    %v790 = vpack.c.b16 %v742, %v738
    %v791 = vpack.c.b16 %v743, %v739
    %v792 = vpack.c.b16 %v744, %v740
    %v793 = vpack.c.b16 %v749, %v745
    %v794 = vpack.c.b16 %v750, %v746
    %v795 = vpack.c.b16 %v751, %v747
    %v796 = vpack.c.b16 %v752, %v748
    %v797 = vpack.c.b16 %v757, %v753
    %v798 = vpack.c.b16 %v758, %v754
    %v799 = vpack.c.b16 %v759, %v755
    %v800 = vpack.c.b16 %v760, %v756
    %v801 = vpack.c.b16 %v765, %v761
    %v802 = vpack.c.b16 %v766, %v762
    %v803 = vpack.c.b16 %v767, %v763
    %v804 = vpack.c.b16 %v768, %v764
    %v805 = vpack.c.b16 %v773, %v769
    %v806 = vpack.c.b16 %v774, %v770
    %v807 = vpack.c.b16 %v775, %v771
    %v808 = vpack.c.b16 %v776, %v772
    %841 = vmatprep.subr.bf16.mxu0 %v778
    %842 = vmatpush1.bf16.msra.mxu0 %v777
    %843 = vmatprep.subr.bf16.mxu0 %v782
    %844 = vmatpush1.bf16.msra.mxu0 %v781
    %845 = vmatprep.subr.bf16.mxu0 %v786
    %846 = vmatpush1.bf16.msra.mxu0 %v785
    %847 = vmatprep.subr.bf16.mxu0 %v790
    %848 = vmatpush1.bf16.msra.mxu0 %v789
    %849 = vmatprep.subr.bf16.mxu0 %v794
    %850 = vmatpush1.bf16.msra.mxu0 %v793
    %851 = vmatprep.subr.bf16.mxu0 %v798
    %852 = vmatpush1.bf16.msra.mxu0 %v797
    %853 = vmatprep.subr.bf16.mxu0 %v802
    %854 = vmatpush1.bf16.msra.mxu0 %v801
    %855 = vmatprep.subr.bf16.mxu0 %v806
    %856 = vmatpush1.bf16.msra.mxu0 %v805
    %857 = vmatprep.subr.bf16.mxu0 0
    %858 = vmatpush1.bf16.msra.mxu0 0
    %859 = vmatprep.subr.bf16.mxu0 0
    %860 = vmatpush1.bf16.msra.mxu0 0
    %861 = vmatprep.subr.bf16.mxu0 0
    %862 = vmatpush1.bf16.msra.mxu0 0
    %863 = vmatprep.subr.bf16.mxu0 0
    %864 = vmatpush1.bf16.msra.mxu0 0
    %865 = vmatprep.subr.bf16.mxu0 0
    %866 = vmatpush1.bf16.msra.mxu0 0
    %867 = vmatprep.subr.bf16.mxu0 0
    %868 = vmatpush1.bf16.msra.mxu0 0
    %869 = vmatprep.subr.bf16.mxu0 0
    %870 = vmatpush1.bf16.msra.mxu0 0
    %871 = vmatprep.subr.bf16.mxu0 0
    %872 = vmatpush1.bf16.msra.mxu0 0
    %873 = vmatprep.mubr.bf16.mxu0 0
    %874 = vmatmul.mubr.bf16.gmra.mrb[0].mxu0 %v648
    %v875 = vpop.f32.mrb[0].mxu0
    %v876 = vadd.f32 0.0, %v875
    %v877 = vpop.f32.mrb[0].mxu0
    %v878 = vadd.f32 0.0, %v877
    %v879 = vpop.f32.mrb[0].mxu0
    %v880 = vadd.f32 0.0, %v879
    %v881 = vpop.f32.mrb[0].mxu0
    %v882 = vadd.f32 0.0, %v881
    %883 = vdwg.mxu0
    %884 = vmatprep.subr.bf16.mxu0 %v780
    %885 = vmatpush1.bf16.msra.mxu0 %v779
    %886 = vmatprep.subr.bf16.mxu0 %v784
    %887 = vmatpush1.bf16.msra.mxu0 %v783
    %888 = vmatprep.subr.bf16.mxu0 %v788
    %889 = vmatpush1.bf16.msra.mxu0 %v787
    %890 = vmatprep.subr.bf16.mxu0 %v792
    %891 = vmatpush1.bf16.msra.mxu0 %v791
    %892 = vmatprep.subr.bf16.mxu0 %v796
    %893 = vmatpush1.bf16.msra.mxu0 %v795
    %894 = vmatprep.subr.bf16.mxu0 %v800
    %895 = vmatpush1.bf16.msra.mxu0 %v799
    %896 = vmatprep.subr.bf16.mxu0 %v804
    %897 = vmatpush1.bf16.msra.mxu0 %v803
    %898 = vmatprep.subr.bf16.mxu0 %v808
    %899 = vmatpush1.bf16.msra.mxu0 %v807
    %900 = vmatprep.subr.bf16.mxu0 0
    %901 = vmatpush1.bf16.msra.mxu0 0
    %902 = vmatprep.subr.bf16.mxu0 0
    %903 = vmatpush1.bf16.msra.mxu0 0
    %904 = vmatprep.subr.bf16.mxu0 0
    %905 = vmatpush1.bf16.msra.mxu0 0
    %906 = vmatprep.subr.bf16.mxu0 0
    %907 = vmatpush1.bf16.msra.mxu0 0
    %908 = vmatprep.subr.bf16.mxu0 0
    %909 = vmatpush1.bf16.msra.mxu0 0
    %910 = vmatprep.subr.bf16.mxu0 0
    %911 = vmatpush1.bf16.msra.mxu0 0
    %912 = vmatprep.subr.bf16.mxu0 0
    %913 = vmatpush1.bf16.msra.mxu0 0
    %914 = vmatprep.subr.bf16.mxu0 0
    %915 = vmatpush1.bf16.msra.mxu0 0
    %916 = vmatprep.mubr.bf16.mxu0 0
    %917 = vmatmul.mubr.bf16.gmra.mrb[0].mxu0 %v648
    %v918 = vpop.f32.mrb[0].mxu0
    %v919 = vadd.f32 0.0, %v918
    %v920 = vpop.f32.mrb[0].mxu0
    %v921 = vadd.f32 0.0, %v920
    %v922 = vpop.f32.mrb[0].mxu0
    %v923 = vadd.f32 0.0, %v922
    %v924 = vpop.f32.mrb[0].mxu0
    %v925 = vadd.f32 0.0, %v924
    %926 = vdwg.mxu0
    %v927 = vadd.f32 %v640, %v876
    %v928 = vadd.f32 %v641, %v878
    %v929 = vadd.f32 %v642, %v919
    %v930 = vadd.f32 %v643, %v921
    %v931 = vadd.f32 %v644, %v880
    %v932 = vadd.f32 %v645, %v882
    %v933 = vadd.f32 %v646, %v923
    %v934 = vadd.f32 %v647, %v925
    %v935 = vxor.u32 %v927, 2147483648
    %v936 = vxor.u32 %v931, 2147483648
    %v937 = vmul.f32 %v935, 1.442695
    %v938 = vpow.pop %v937
    %v939 = vmul.f32 %v936, 1.442695
    %v940 = vpow.pop %v939
    %v941 = vadd.f32 %v938, 1.0
    %v942 = vadd.f32 %v940, 1.0
    %v943 = vrcp.pop %v941
    %v944 = vmul.f32 1.0, %v943
    %v945 = vrcp.pop %v942
    %v946 = vmul.f32 1.0, %v945
    %v947 = vxor.u32 %v928, 2147483648
    %v948 = vxor.u32 %v932, 2147483648
    %v949 = vmul.f32 %v947, 1.442695
    %v950 = vpow.pop %v949
    %v951 = vmul.f32 %v948, 1.442695
    %v952 = vpow.pop %v951
    %v953 = vadd.f32 %v950, 1.0
    %v954 = vadd.f32 %v952, 1.0
    %v955 = vrcp.pop %v953
    %v956 = vmul.f32 1.0, %v955
    %v957 = vrcp.pop %v954
    %v958 = vmul.f32 1.0, %v957
    %v959 = vtanh.pop %v929
    %v960 = vtanh.pop %v933
    %v961 = vxor.u32 %v930, 2147483648
    %v962 = vxor.u32 %v934, 2147483648
    %v963 = vmul.f32 %v961, 1.442695
    %v964 = vpow.pop %v963
    %v965 = vmul.f32 %v962, 1.442695
    %v966 = vpow.pop %v965
    %v967 = vadd.f32 %v964, 1.0
    %v968 = vadd.f32 %v966, 1.0
    %v969 = vrcp.pop %v967
    %v970 = vmul.f32 1.0, %v969
    %v971 = vrcp.pop %v968
    %v972 = vmul.f32 1.0, %v971
    %v973 = vmul.f32 %v956, %v638
    %v974 = vmul.f32 %v958, %v639
    %v975 = vmul.f32 %v944, %v959
    %v976 = vmul.f32 %v946, %v960
    %v977 = vadd.f32 %v973, %v975
    %v978 = vadd.f32 %v974, %v976
    %v979 = vtanh.pop %v977
    %v980 = vtanh.pop %v978
    %v981 = vmul.f32 %v970, %v979
    %v982 = vmul.f32 %v972, %v980
    %v983 = vpack.c.bf16 %v982, %v981
    %v985 = vunpack.c.l.b16 %v983
    %v986 = vunpack.c.h.b16 %v983
    %v987 = vpack.c.b16 %v985, %v985
    %v988 = vpack.c.b16 %v986, %v986
    %991 = vst [vmem:[#allocation11] sm:$0xf] %v987
    %992 = vst [vmem:[#allocation11 + $0x4] sm:$0xf] %v988
    %s993 = scalar_lea.vmem [#allocation4], 64
    %v994 = vld [vmem:[%s993] sm:$0xff]
    %v995 = vld [vmem:[%s993 + $0x8] sm:$0xff]
    %v996 = vld [vmem:[%s993 + $0x10] sm:$0xff]
    %v997 = vld [vmem:[%s993 + $0x18] sm:$0xff]
    %v998 = vld [vmem:[%s993 + $0x20] sm:$0xff]
    %v999 = vld [vmem:[%s993 + $0x28] sm:$0xff]
    %v1000 = vld [vmem:[%s993 + $0x30] sm:$0xff]
    %v1001 = vld [vmem:[%s993 + $0x38] sm:$0xff]
    %v1002 = vld [vmem:[#allocation10] sm:$0xff]
    %v1003 = vld [vmem:[#allocation10 + $0x8] sm:$0xff]
    %v1004 = vld [vmem:[#allocation10 + $0x10] sm:$0xff]
    %v1005 = vld [vmem:[#allocation10 + $0x18] sm:$0xff]
    %v1006 = vld [vmem:[#allocation10 + $0x20] sm:$0xff]
    %v1007 = vld [vmem:[#allocation10 + $0x28] sm:$0xff]
    %v1008 = vld [vmem:[#allocation10 + $0x30] sm:$0xff]
    %v1009 = vld [vmem:[#allocation10 + $0x38] sm:$0xff]
    %v1010 = vld [vmem:[#allocation10 + $0x40] sm:$0xff]
    %v1011 = vld [vmem:[#allocation10 + $0x48] sm:$0xff]
    %v1012 = vld [vmem:[#allocation10 + $0x50] sm:$0xff]
    %v1013 = vld [vmem:[#allocation10 + $0x58] sm:$0xff]
    %v1014 = vld [vmem:[#allocation10 + $0x60] sm:$0xff]
    %v1015 = vld [vmem:[#allocation10 + $0x68] sm:$0xff]
    %v1016 = vld [vmem:[#allocation10 + $0x70] sm:$0xff]
    %v1017 = vld [vmem:[#allocation10 + $0x78] sm:$0xff]
    %v1018 = vld [vmem:[#allocation10 + $0x80] sm:$0xff]
    %v1019 = vld [vmem:[#allocation10 + $0x88] sm:$0xff]
    %v1020 = vld [vmem:[#allocation10 + $0x90] sm:$0xff]
    %v1021 = vld [vmem:[#allocation10 + $0x98] sm:$0xff]
    %v1022 = vld [vmem:[#allocation10 + $0xa0] sm:$0xff]
    %v1023 = vld [vmem:[#allocation10 + $0xa8] sm:$0xff]
    %v1024 = vld [vmem:[#allocation10 + $0xb0] sm:$0xff]
    %v1025 = vld [vmem:[#allocation10 + $0xb8] sm:$0xff]
    %v1026 = vld [vmem:[#allocation10 + $0xc0] sm:$0xff]
    %v1027 = vld [vmem:[#allocation10 + $0xc8] sm:$0xff]
    %v1028 = vld [vmem:[#allocation10 + $0xd0] sm:$0xff]
    %v1029 = vld [vmem:[#allocation10 + $0xd8] sm:$0xff]
    %v1030 = vld [vmem:[#allocation10 + $0xe0] sm:$0xff]
    %v1031 = vld [vmem:[#allocation10 + $0xe8] sm:$0xff]
    %v1032 = vld [vmem:[#allocation10 + $0xf0] sm:$0xff]
    %v1033 = vld [vmem:[#allocation10 + $0xf8] sm:$0xff]
    %v1066 = vunpack.c.l.b16 %v1002
    %v1067 = vunpack.c.h.b16 %v1002
    %v1068 = vunpack.c.l.b16 %v1003
    %v1069 = vunpack.c.h.b16 %v1003
    %v1070 = vunpack.c.l.b16 %v1004
    %v1071 = vunpack.c.h.b16 %v1004
    %v1072 = vunpack.c.l.b16 %v1005
    %v1073 = vunpack.c.h.b16 %v1005
    %v1074 = vunpack.c.l.b16 %v1006
    %v1075 = vunpack.c.h.b16 %v1006
    %v1076 = vunpack.c.l.b16 %v1007
    %v1077 = vunpack.c.h.b16 %v1007
    %v1078 = vunpack.c.l.b16 %v1008
    %v1079 = vunpack.c.h.b16 %v1008
    %v1080 = vunpack.c.l.b16 %v1009
    %v1081 = vunpack.c.h.b16 %v1009
    %v1082 = vunpack.c.l.b16 %v1010
    %v1083 = vunpack.c.h.b16 %v1010
    %v1084 = vunpack.c.l.b16 %v1011
    %v1085 = vunpack.c.h.b16 %v1011
    %v1086 = vunpack.c.l.b16 %v1012
    %v1087 = vunpack.c.h.b16 %v1012
    %v1088 = vunpack.c.l.b16 %v1013
    %v1089 = vunpack.c.h.b16 %v1013
    %v1090 = vunpack.c.l.b16 %v1014
    %v1091 = vunpack.c.h.b16 %v1014
    %v1092 = vunpack.c.l.b16 %v1015
    %v1093 = vunpack.c.h.b16 %v1015
    %v1094 = vunpack.c.l.b16 %v1016
    %v1095 = vunpack.c.h.b16 %v1016
    %v1096 = vunpack.c.l.b16 %v1017
    %v1097 = vunpack.c.h.b16 %v1017
    %v1098 = vunpack.c.l.b16 %v1018
    %v1099 = vunpack.c.h.b16 %v1018
    %v1100 = vunpack.c.l.b16 %v1019
    %v1101 = vunpack.c.h.b16 %v1019
    %v1102 = vunpack.c.l.b16 %v1020
    %v1103 = vunpack.c.h.b16 %v1020
    %v1104 = vunpack.c.l.b16 %v1021
    %v1105 = vunpack.c.h.b16 %v1021
    %v1106 = vunpack.c.l.b16 %v1022
    %v1107 = vunpack.c.h.b16 %v1022
    %v1108 = vunpack.c.l.b16 %v1023
    %v1109 = vunpack.c.h.b16 %v1023
    %v1110 = vunpack.c.l.b16 %v1024
    %v1111 = vunpack.c.h.b16 %v1024
    %v1112 = vunpack.c.l.b16 %v1025
    %v1113 = vunpack.c.h.b16 %v1025
    %v1114 = vunpack.c.l.b16 %v1026
    %v1115 = vunpack.c.h.b16 %v1026
    %v1116 = vunpack.c.l.b16 %v1027
    %v1117 = vunpack.c.h.b16 %v1027
    %v1118 = vunpack.c.l.b16 %v1028
    %v1119 = vunpack.c.h.b16 %v1028
    %v1120 = vunpack.c.l.b16 %v1029
    %v1121 = vunpack.c.h.b16 %v1029
    %v1122 = vunpack.c.l.b16 %v1030
    %v1123 = vunpack.c.h.b16 %v1030
    %v1124 = vunpack.c.l.b16 %v1031
    %v1125 = vunpack.c.h.b16 %v1031
    %v1126 = vunpack.c.l.b16 %v1032
    %v1127 = vunpack.c.h.b16 %v1032
    %v1128 = vunpack.c.l.b16 %v1033
    %v1129 = vunpack.c.h.b16 %v1033
    %v1130 = vpack.c.b16 %v1070, %v1066
    %v1131 = vpack.c.b16 %v1071, %v1067
    %v1132 = vpack.c.b16 %v1072, %v1068
    %v1133 = vpack.c.b16 %v1073, %v1069
    %v1134 = vpack.c.b16 %v1078, %v1074
    %v1135 = vpack.c.b16 %v1079, %v1075
    %v1136 = vpack.c.b16 %v1080, %v1076
    %v1137 = vpack.c.b16 %v1081, %v1077
    %v1138 = vpack.c.b16 %v1086, %v1082
    %v1139 = vpack.c.b16 %v1087, %v1083
    %v1140 = vpack.c.b16 %v1088, %v1084
    %v1141 = vpack.c.b16 %v1089, %v1085
    %v1142 = vpack.c.b16 %v1094, %v1090
    %v1143 = vpack.c.b16 %v1095, %v1091
    %v1144 = vpack.c.b16 %v1096, %v1092
    %v1145 = vpack.c.b16 %v1097, %v1093
    %v1146 = vpack.c.b16 %v1102, %v1098
    %v1147 = vpack.c.b16 %v1103, %v1099
    %v1148 = vpack.c.b16 %v1104, %v1100
    %v1149 = vpack.c.b16 %v1105, %v1101
    %v1150 = vpack.c.b16 %v1110, %v1106
    %v1151 = vpack.c.b16 %v1111, %v1107
    %v1152 = vpack.c.b16 %v1112, %v1108
    %v1153 = vpack.c.b16 %v1113, %v1109
    %v1154 = vpack.c.b16 %v1118, %v1114
    %v1155 = vpack.c.b16 %v1119, %v1115
    %v1156 = vpack.c.b16 %v1120, %v1116
    %v1157 = vpack.c.b16 %v1121, %v1117
    %v1158 = vpack.c.b16 %v1126, %v1122
    %v1159 = vpack.c.b16 %v1127, %v1123
    %v1160 = vpack.c.b16 %v1128, %v1124
    %v1161 = vpack.c.b16 %v1129, %v1125
    %1194 = vmatprep.subr.bf16.mxu0 %v1131
    %1195 = vmatpush1.bf16.msra.mxu0 %v1130
    %1196 = vmatprep.subr.bf16.mxu0 %v1135
    %1197 = vmatpush1.bf16.msra.mxu0 %v1134
    %1198 = vmatprep.subr.bf16.mxu0 %v1139
    %1199 = vmatpush1.bf16.msra.mxu0 %v1138
    %1200 = vmatprep.subr.bf16.mxu0 %v1143
    %1201 = vmatpush1.bf16.msra.mxu0 %v1142
    %1202 = vmatprep.subr.bf16.mxu0 %v1147
    %1203 = vmatpush1.bf16.msra.mxu0 %v1146
    %1204 = vmatprep.subr.bf16.mxu0 %v1151
    %1205 = vmatpush1.bf16.msra.mxu0 %v1150
    %1206 = vmatprep.subr.bf16.mxu0 %v1155
    %1207 = vmatpush1.bf16.msra.mxu0 %v1154
    %1208 = vmatprep.subr.bf16.mxu0 %v1159
    %1209 = vmatpush1.bf16.msra.mxu0 %v1158
    %1210 = vmatprep.subr.bf16.mxu0 0
    %1211 = vmatpush1.bf16.msra.mxu0 0
    %1212 = vmatprep.subr.bf16.mxu0 0
    %1213 = vmatpush1.bf16.msra.mxu0 0
    %1214 = vmatprep.subr.bf16.mxu0 0
    %1215 = vmatpush1.bf16.msra.mxu0 0
    %1216 = vmatprep.subr.bf16.mxu0 0
    %1217 = vmatpush1.bf16.msra.mxu0 0
    %1218 = vmatprep.subr.bf16.mxu0 0
    %1219 = vmatpush1.bf16.msra.mxu0 0
    %1220 = vmatprep.subr.bf16.mxu0 0
    %1221 = vmatpush1.bf16.msra.mxu0 0
    %1222 = vmatprep.subr.bf16.mxu0 0
    %1223 = vmatpush1.bf16.msra.mxu0 0
    %1224 = vmatprep.subr.bf16.mxu0 0
    %1225 = vmatpush1.bf16.msra.mxu0 0
    %1226 = vmatprep.mubr.bf16.mxu0 0
    %1227 = vmatmul.mubr.bf16.gmra.mrb[0].mxu0 %v983
    %v1228 = vpop.f32.mrb[0].mxu0
    %v1229 = vadd.f32 0.0, %v1228
    %v1230 = vpop.f32.mrb[0].mxu0
    %v1231 = vadd.f32 0.0, %v1230
    %v1232 = vpop.f32.mrb[0].mxu0
    %v1233 = vadd.f32 0.0, %v1232
    %v1234 = vpop.f32.mrb[0].mxu0
    %v1235 = vadd.f32 0.0, %v1234
    %1236 = vdwg.mxu0
    %1237 = vmatprep.subr.bf16.mxu0 %v1133
    %1238 = vmatpush1.bf16.msra.mxu0 %v1132
    %1239 = vmatprep.subr.bf16.mxu0 %v1137
    %1240 = vmatpush1.bf16.msra.mxu0 %v1136
    %1241 = vmatprep.subr.bf16.mxu0 %v1141
    %1242 = vmatpush1.bf16.msra.mxu0 %v1140
    %1243 = vmatprep.subr.bf16.mxu0 %v1145
    %1244 = vmatpush1.bf16.msra.mxu0 %v1144
    %1245 = vmatprep.subr.bf16.mxu0 %v1149
    %1246 = vmatpush1.bf16.msra.mxu0 %v1148
    %1247 = vmatprep.subr.bf16.mxu0 %v1153
    %1248 = vmatpush1.bf16.msra.mxu0 %v1152
    %1249 = vmatprep.subr.bf16.mxu0 %v1157
    %1250 = vmatpush1.bf16.msra.mxu0 %v1156
    %1251 = vmatprep.subr.bf16.mxu0 %v1161
    %1252 = vmatpush1.bf16.msra.mxu0 %v1160
    %1253 = vmatprep.subr.bf16.mxu0 0
    %1254 = vmatpush1.bf16.msra.mxu0 0
    %1255 = vmatprep.subr.bf16.mxu0 0
    %1256 = vmatpush1.bf16.msra.mxu0 0
    %1257 = vmatprep.subr.bf16.mxu0 0
    %1258 = vmatpush1.bf16.msra.mxu0 0
    %1259 = vmatprep.subr.bf16.mxu0 0
    %1260 = vmatpush1.bf16.msra.mxu0 0
    %1261 = vmatprep.subr.bf16.mxu0 0
    %1262 = vmatpush1.bf16.msra.mxu0 0
    %1263 = vmatprep.subr.bf16.mxu0 0
    %1264 = vmatpush1.bf16.msra.mxu0 0
    %1265 = vmatprep.subr.bf16.mxu0 0
    %1266 = vmatpush1.bf16.msra.mxu0 0
    %1267 = vmatprep.subr.bf16.mxu0 0
    %1268 = vmatpush1.bf16.msra.mxu0 0
    %1269 = vmatprep.mubr.bf16.mxu0 0
    %1270 = vmatmul.mubr.bf16.gmra.mrb[0].mxu0 %v983
    %v1271 = vpop.f32.mrb[0].mxu0
    %v1272 = vadd.f32 0.0, %v1271
    %v1273 = vpop.f32.mrb[0].mxu0
    %v1274 = vadd.f32 0.0, %v1273
    %v1275 = vpop.f32.mrb[0].mxu0
    %v1276 = vadd.f32 0.0, %v1275
    %v1277 = vpop.f32.mrb[0].mxu0
    %v1278 = vadd.f32 0.0, %v1277
    %1279 = vdwg.mxu0
    %v1280 = vadd.f32 %v994, %v1229
    %v1281 = vadd.f32 %v995, %v1231
    %v1282 = vadd.f32 %v996, %v1272
    %v1283 = vadd.f32 %v997, %v1274
    %v1284 = vadd.f32 %v998, %v1233
    %v1285 = vadd.f32 %v999, %v1235
    %v1286 = vadd.f32 %v1000, %v1276
    %v1287 = vadd.f32 %v1001, %v1278
    %v1288 = vxor.u32 %v1280, 2147483648
    %v1289 = vxor.u32 %v1284, 2147483648
    %v1290 = vmul.f32 %v1288, 1.442695
    %v1291 = vpow.pop %v1290
    %v1292 = vmul.f32 %v1289, 1.442695
    %v1293 = vpow.pop %v1292
    %v1294 = vadd.f32 %v1291, 1.0
    %v1295 = vadd.f32 %v1293, 1.0
    %v1296 = vrcp.pop %v1294
    %v1297 = vmul.f32 1.0, %v1296
    %v1298 = vrcp.pop %v1295
    %v1299 = vmul.f32 1.0, %v1298
    %v1300 = vxor.u32 %v1281, 2147483648
    %v1301 = vxor.u32 %v1285, 2147483648
    %v1302 = vmul.f32 %v1300, 1.442695
    %v1303 = vpow.pop %v1302
    %v1304 = vmul.f32 %v1301, 1.442695
    %v1305 = vpow.pop %v1304
    %v1306 = vadd.f32 %v1303, 1.0
    %v1307 = vadd.f32 %v1305, 1.0
    %v1308 = vrcp.pop %v1306
    %v1309 = vmul.f32 1.0, %v1308
    %v1310 = vrcp.pop %v1307
    %v1311 = vmul.f32 1.0, %v1310
    %v1312 = vtanh.pop %v1282
    %v1313 = vtanh.pop %v1286
    %v1314 = vxor.u32 %v1283, 2147483648
    %v1315 = vxor.u32 %v1287, 2147483648
    %v1316 = vmul.f32 %v1314, 1.442695
    %v1317 = vpow.pop %v1316
    %v1318 = vmul.f32 %v1315, 1.442695
    %v1319 = vpow.pop %v1318
    %v1320 = vadd.f32 %v1317, 1.0
    %v1321 = vadd.f32 %v1319, 1.0
    %v1322 = vrcp.pop %v1320
    %v1323 = vmul.f32 1.0, %v1322
    %v1324 = vrcp.pop %v1321
    %v1325 = vmul.f32 1.0, %v1324
    %v1326 = vmul.f32 %v1309, %v977
    %v1327 = vmul.f32 %v1311, %v978
    %v1328 = vmul.f32 %v1297, %v1312
    %v1329 = vmul.f32 %v1299, %v1313
    %v1330 = vadd.f32 %v1326, %v1328
    %v1331 = vadd.f32 %v1327, %v1329
    %v1332 = vtanh.pop %v1330
    %v1333 = vtanh.pop %v1331
    %v1334 = vmul.f32 %v1323, %v1332
    %v1335 = vmul.f32 %v1325, %v1333
    %v1336 = vpack.c.bf16 %v1335, %v1334
    %v1338 = vunpack.c.l.b16 %v1336
    %v1339 = vunpack.c.h.b16 %v1336
    %v1340 = vpack.c.b16 %v1338, %v1338
    %v1341 = vpack.c.b16 %v1339, %v1339
    %s1344 = scalar_lea.vmem [#allocation11], 8
    %1345 = vst [vmem:[%s1344] sm:$0xf] %v1340
    %1346 = vst [vmem:[%s1344 + $0x4] sm:$0xf] %v1341
    %s1347 = scalar_lea.vmem [#allocation4], 128
    %v1348 = vld [vmem:[%s1347] sm:$0xff]
    %v1349 = vld [vmem:[%s1347 + $0x8] sm:$0xff]
    %v1350 = vld [vmem:[%s1347 + $0x10] sm:$0xff]
    %v1351 = vld [vmem:[%s1347 + $0x18] sm:$0xff]
    %v1352 = vld [vmem:[%s1347 + $0x20] sm:$0xff]
    %v1353 = vld [vmem:[%s1347 + $0x28] sm:$0xff]
    %v1354 = vld [vmem:[%s1347 + $0x30] sm:$0xff]
    %v1355 = vld [vmem:[%s1347 + $0x38] sm:$0xff]
    %v1356 = vld [vmem:[#allocation10] sm:$0xff]
    %v1357 = vld [vmem:[#allocation10 + $0x8] sm:$0xff]
    %v1358 = vld [vmem:[#allocation10 + $0x10] sm:$0xff]
    %v1359 = vld [vmem:[#allocation10 + $0x18] sm:$0xff]
    %v1360 = vld [vmem:[#allocation10 + $0x20] sm:$0xff]
    %v1361 = vld [vmem:[#allocation10 + $0x28] sm:$0xff]
    %v1362 = vld [vmem:[#allocation10 + $0x30] sm:$0xff]
    %v1363 = vld [vmem:[#allocation10 + $0x38] sm:$0xff]
    %v1364 = vld [vmem:[#allocation10 + $0x40] sm:$0xff]
    %v1365 = vld [vmem:[#allocation10 + $0x48] sm:$0xff]
    %v1366 = vld [vmem:[#allocation10 + $0x50] sm:$0xff]
    %v1367 = vld [vmem:[#allocation10 + $0x58] sm:$0xff]
    %v1368 = vld [vmem:[#allocation10 + $0x60] sm:$0xff]
    %v1369 = vld [vmem:[#allocation10 + $0x68] sm:$0xff]
    %v1370 = vld [vmem:[#allocation10 + $0x70] sm:$0xff]
    %v1371 = vld [vmem:[#allocation10 + $0x78] sm:$0xff]
    %v1372 = vld [vmem:[#allocation10 + $0x80] sm:$0xff]
    %v1373 = vld [vmem:[#allocation10 + $0x88] sm:$0xff]
    %v1374 = vld [vmem:[#allocation10 + $0x90] sm:$0xff]
    %v1375 = vld [vmem:[#allocation10 + $0x98] sm:$0xff]
    %v1376 = vld [vmem:[#allocation10 + $0xa0] sm:$0xff]
    %v1377 = vld [vmem:[#allocation10 + $0xa8] sm:$0xff]
    %v1378 = vld [vmem:[#allocation10 + $0xb0] sm:$0xff]
    %v1379 = vld [vmem:[#allocation10 + $0xb8] sm:$0xff]
    %v1380 = vld [vmem:[#allocation10 + $0xc0] sm:$0xff]
    %v1381 = vld [vmem:[#allocation10 + $0xc8] sm:$0xff]
    %v1382 = vld [vmem:[#allocation10 + $0xd0] sm:$0xff]
    %v1383 = vld [vmem:[#allocation10 + $0xd8] sm:$0xff]
    %v1384 = vld [vmem:[#allocation10 + $0xe0] sm:$0xff]
    %v1385 = vld [vmem:[#allocation10 + $0xe8] sm:$0xff]
    %v1386 = vld [vmem:[#allocation10 + $0xf0] sm:$0xff]
    %v1387 = vld [vmem:[#allocation10 + $0xf8] sm:$0xff]
    %v1420 = vunpack.c.l.b16 %v1356
    %v1421 = vunpack.c.h.b16 %v1356
    %v1422 = vunpack.c.l.b16 %v1357
    %v1423 = vunpack.c.h.b16 %v1357
    %v1424 = vunpack.c.l.b16 %v1358
    %v1425 = vunpack.c.h.b16 %v1358
    %v1426 = vunpack.c.l.b16 %v1359
    %v1427 = vunpack.c.h.b16 %v1359
    %v1428 = vunpack.c.l.b16 %v1360
    %v1429 = vunpack.c.h.b16 %v1360
    %v1430 = vunpack.c.l.b16 %v1361
    %v1431 = vunpack.c.h.b16 %v1361
    %v1432 = vunpack.c.l.b16 %v1362
    %v1433 = vunpack.c.h.b16 %v1362
    %v1434 = vunpack.c.l.b16 %v1363
    %v1435 = vunpack.c.h.b16 %v1363
    %v1436 = vunpack.c.l.b16 %v1364
    %v1437 = vunpack.c.h.b16 %v1364
    %v1438 = vunpack.c.l.b16 %v1365
    %v1439 = vunpack.c.h.b16 %v1365
    %v1440 = vunpack.c.l.b16 %v1366
    %v1441 = vunpack.c.h.b16 %v1366
    %v1442 = vunpack.c.l.b16 %v1367
    %v1443 = vunpack.c.h.b16 %v1367
    %v1444 = vunpack.c.l.b16 %v1368
    %v1445 = vunpack.c.h.b16 %v1368
    %v1446 = vunpack.c.l.b16 %v1369
    %v1447 = vunpack.c.h.b16 %v1369
    %v1448 = vunpack.c.l.b16 %v1370
    %v1449 = vunpack.c.h.b16 %v1370
    %v1450 = vunpack.c.l.b16 %v1371
    %v1451 = vunpack.c.h.b16 %v1371
    %v1452 = vunpack.c.l.b16 %v1372
    %v1453 = vunpack.c.h.b16 %v1372
    %v1454 = vunpack.c.l.b16 %v1373
    %v1455 = vunpack.c.h.b16 %v1373
    %v1456 = vunpack.c.l.b16 %v1374
    %v1457 = vunpack.c.h.b16 %v1374
    %v1458 = vunpack.c.l.b16 %v1375
    %v1459 = vunpack.c.h.b16 %v1375
    %v1460 = vunpack.c.l.b16 %v1376
    %v1461 = vunpack.c.h.b16 %v1376
    %v1462 = vunpack.c.l.b16 %v1377
    %v1463 = vunpack.c.h.b16 %v1377
    %v1464 = vunpack.c.l.b16 %v1378
    %v1465 = vunpack.c.h.b16 %v1378
    %v1466 = vunpack.c.l.b16 %v1379
    %v1467 = vunpack.c.h.b16 %v1379
    %v1468 = vunpack.c.l.b16 %v1380
    %v1469 = vunpack.c.h.b16 %v1380
    %v1470 = vunpack.c.l.b16 %v1381
    %v1471 = vunpack.c.h.b16 %v1381
    %v1472 = vunpack.c.l.b16 %v1382
    %v1473 = vunpack.c.h.b16 %v1382
    %v1474 = vunpack.c.l.b16 %v1383
    %v1475 = vunpack.c.h.b16 %v1383
    %v1476 = vunpack.c.l.b16 %v1384
    %v1477 = vunpack.c.h.b16 %v1384
    %v1478 = vunpack.c.l.b16 %v1385
    %v1479 = vunpack.c.h.b16 %v1385
    %v1480 = vunpack.c.l.b16 %v1386
    %v1481 = vunpack.c.h.b16 %v1386
    %v1482 = vunpack.c.l.b16 %v1387
    %v1483 = vunpack.c.h.b16 %v1387
    %v1484 = vpack.c.b16 %v1424, %v1420
    %v1485 = vpack.c.b16 %v1425, %v1421
    %v1486 = vpack.c.b16 %v1426, %v1422
    %v1487 = vpack.c.b16 %v1427, %v1423
    %v1488 = vpack.c.b16 %v1432, %v1428
    %v1489 = vpack.c.b16 %v1433, %v1429
    %v1490 = vpack.c.b16 %v1434, %v1430
    %v1491 = vpack.c.b16 %v1435, %v1431
    %v1492 = vpack.c.b16 %v1440, %v1436
    %v1493 = vpack.c.b16 %v1441, %v1437
    %v1494 = vpack.c.b16 %v1442, %v1438
    %v1495 = vpack.c.b16 %v1443, %v1439
    %v1496 = vpack.c.b16 %v1448, %v1444
    %v1497 = vpack.c.b16 %v1449, %v1445
    %v1498 = vpack.c.b16 %v1450, %v1446
    %v1499 = vpack.c.b16 %v1451, %v1447
    %v1500 = vpack.c.b16 %v1456, %v1452
    %v1501 = vpack.c.b16 %v1457, %v1453
    %v1502 = vpack.c.b16 %v1458, %v1454
    %v1503 = vpack.c.b16 %v1459, %v1455
    %v1504 = vpack.c.b16 %v1464, %v1460
    %v1505 = vpack.c.b16 %v1465, %v1461
    %v1506 = vpack.c.b16 %v1466, %v1462
    %v1507 = vpack.c.b16 %v1467, %v1463
    %v1508 = vpack.c.b16 %v1472, %v1468
    %v1509 = vpack.c.b16 %v1473, %v1469
    %v1510 = vpack.c.b16 %v1474, %v1470
    %v1511 = vpack.c.b16 %v1475, %v1471
    %v1512 = vpack.c.b16 %v1480, %v1476
    %v1513 = vpack.c.b16 %v1481, %v1477
    %v1514 = vpack.c.b16 %v1482, %v1478
    %v1515 = vpack.c.b16 %v1483, %v1479
    %1548 = vmatprep.subr.bf16.mxu0 %v1485
    %1549 = vmatpush1.bf16.msra.mxu0 %v1484
    %1550 = vmatprep.subr.bf16.mxu0 %v1489
    %1551 = vmatpush1.bf16.msra.mxu0 %v1488
    %1552 = vmatprep.subr.bf16.mxu0 %v1493
    %1553 = vmatpush1.bf16.msra.mxu0 %v1492
    %1554 = vmatprep.subr.bf16.mxu0 %v1497
    %1555 = vmatpush1.bf16.msra.mxu0 %v1496
    %1556 = vmatprep.subr.bf16.mxu0 %v1501
    %1557 = vmatpush1.bf16.msra.mxu0 %v1500
    %1558 = vmatprep.subr.bf16.mxu0 %v1505
    %1559 = vmatpush1.bf16.msra.mxu0 %v1504
    %1560 = vmatprep.subr.bf16.mxu0 %v1509
    %1561 = vmatpush1.bf16.msra.mxu0 %v1508
    %1562 = vmatprep.subr.bf16.mxu0 %v1513
    %1563 = vmatpush1.bf16.msra.mxu0 %v1512
    %1564 = vmatprep.subr.bf16.mxu0 0
    %1565 = vmatpush1.bf16.msra.mxu0 0
    %1566 = vmatprep.subr.bf16.mxu0 0
    %1567 = vmatpush1.bf16.msra.mxu0 0
    %1568 = vmatprep.subr.bf16.mxu0 0
    %1569 = vmatpush1.bf16.msra.mxu0 0
    %1570 = vmatprep.subr.bf16.mxu0 0
    %1571 = vmatpush1.bf16.msra.mxu0 0
    %1572 = vmatprep.subr.bf16.mxu0 0
    %1573 = vmatpush1.bf16.msra.mxu0 0
    %1574 = vmatprep.subr.bf16.mxu0 0
    %1575 = vmatpush1.bf16.msra.mxu0 0
    %1576 = vmatprep.subr.bf16.mxu0 0
    %1577 = vmatpush1.bf16.msra.mxu0 0
    %1578 = vmatprep.subr.bf16.mxu0 0
    %1579 = vmatpush1.bf16.msra.mxu0 0
    %1580 = vmatprep.mubr.bf16.mxu0 0
    %1581 = vmatmul.mubr.bf16.gmra.mrb[0].mxu0 %v1336
    %v1582 = vpop.f32.mrb[0].mxu0
    %v1583 = vadd.f32 0.0, %v1582
    %v1584 = vpop.f32.mrb[0].mxu0
    %v1585 = vadd.f32 0.0, %v1584
    %v1586 = vpop.f32.mrb[0].mxu0
    %v1587 = vadd.f32 0.0, %v1586
    %v1588 = vpop.f32.mrb[0].mxu0
    %v1589 = vadd.f32 0.0, %v1588
    %1590 = vdwg.mxu0
    %1591 = vmatprep.subr.bf16.mxu0 %v1487
    %1592 = vmatpush1.bf16.msra.mxu0 %v1486
    %1593 = vmatprep.subr.bf16.mxu0 %v1491
    %1594 = vmatpush1.bf16.msra.mxu0 %v1490
    %1595 = vmatprep.subr.bf16.mxu0 %v1495
    %1596 = vmatpush1.bf16.msra.mxu0 %v1494
    %1597 = vmatprep.subr.bf16.mxu0 %v1499
    %1598 = vmatpush1.bf16.msra.mxu0 %v1498
    %1599 = vmatprep.subr.bf16.mxu0 %v1503
    %1600 = vmatpush1.bf16.msra.mxu0 %v1502
    %1601 = vmatprep.subr.bf16.mxu0 %v1507
    %1602 = vmatpush1.bf16.msra.mxu0 %v1506
    %1603 = vmatprep.subr.bf16.mxu0 %v1511
    %1604 = vmatpush1.bf16.msra.mxu0 %v1510
    %1605 = vmatprep.subr.bf16.mxu0 %v1515
    %1606 = vmatpush1.bf16.msra.mxu0 %v1514
    %1607 = vmatprep.subr.bf16.mxu0 0
    %1608 = vmatpush1.bf16.msra.mxu0 0
    %1609 = vmatprep.subr.bf16.mxu0 0
    %1610 = vmatpush1.bf16.msra.mxu0 0
    %1611 = vmatprep.subr.bf16.mxu0 0
    %1612 = vmatpush1.bf16.msra.mxu0 0
    %1613 = vmatprep.subr.bf16.mxu0 0
    %1614 = vmatpush1.bf16.msra.mxu0 0
    %1615 = vmatprep.subr.bf16.mxu0 0
    %1616 = vmatpush1.bf16.msra.mxu0 0
    %1617 = vmatprep.subr.bf16.mxu0 0
    %1618 = vmatpush1.bf16.msra.mxu0 0
    %1619 = vmatprep.subr.bf16.mxu0 0
    %1620 = vmatpush1.bf16.msra.mxu0 0
    %1621 = vmatprep.subr.bf16.mxu0 0
    %1622 = vmatpush1.bf16.msra.mxu0 0
    %1623 = vmatprep.mubr.bf16.mxu0 0
    %1624 = vmatmul.mubr.bf16.gmra.mrb[0].mxu0 %v1336
    %v1625 = vpop.f32.mrb[0].mxu0
    %v1626 = vadd.f32 0.0, %v1625
    %v1627 = vpop.f32.mrb[0].mxu0
    %v1628 = vadd.f32 0.0, %v1627
    %v1629 = vpop.f32.mrb[0].mxu0
    %v1630 = vadd.f32 0.0, %v1629
    %v1631 = vpop.f32.mrb[0].mxu0
    %v1632 = vadd.f32 0.0, %v1631
    %1633 = vdwg.mxu0
    %v1634 = vadd.f32 %v1348, %v1583
    %v1635 = vadd.f32 %v1349, %v1585
    %v1636 = vadd.f32 %v1350, %v1626
    %v1637 = vadd.f32 %v1351, %v1628
    %v1638 = vadd.f32 %v1352, %v1587
    %v1639 = vadd.f32 %v1353, %v1589
    %v1640 = vadd.f32 %v1354, %v1630
    %v1641 = vadd.f32 %v1355, %v1632
    %v1642 = vxor.u32 %v1634, 2147483648
    %v1643 = vxor.u32 %v1638, 2147483648
    %v1644 = vmul.f32 %v1642, 1.442695
    %v1645 = vpow.pop %v1644
    %v1646 = vmul.f32 %v1643, 1.442695
    %v1647 = vpow.pop %v1646
    %v1648 = vadd.f32 %v1645, 1.0
    %v1649 = vadd.f32 %v1647, 1.0
    %v1650 = vrcp.pop %v1648
    %v1651 = vmul.f32 1.0, %v1650
    %v1652 = vrcp.pop %v1649
    %v1653 = vmul.f32 1.0, %v1652
    %v1654 = vxor.u32 %v1635, 2147483648
    %v1655 = vxor.u32 %v1639, 2147483648
    %v1656 = vmul.f32 %v1654, 1.442695
    %v1657 = vpow.pop %v1656
    %v1658 = vmul.f32 %v1655, 1.442695
    %v1659 = vpow.pop %v1658
    %v1660 = vadd.f32 %v1657, 1.0
    %v1661 = vadd.f32 %v1659, 1.0
    %v1662 = vrcp.pop %v1660
    %v1663 = vmul.f32 1.0, %v1662
    %v1664 = vrcp.pop %v1661
    %v1665 = vmul.f32 1.0, %v1664
    %v1666 = vtanh.pop %v1636
    %v1667 = vtanh.pop %v1640
    %v1668 = vxor.u32 %v1637, 2147483648
    %v1669 = vxor.u32 %v1641, 2147483648
    %v1670 = vmul.f32 %v1668, 1.442695
    %v1671 = vpow.pop %v1670
    %v1672 = vmul.f32 %v1669, 1.442695
    %v1673 = vpow.pop %v1672
    %v1674 = vadd.f32 %v1671, 1.0
    %v1675 = vadd.f32 %v1673, 1.0
    %v1676 = vrcp.pop %v1674
    %v1677 = vmul.f32 1.0, %v1676
    %v1678 = vrcp.pop %v1675
    %v1679 = vmul.f32 1.0, %v1678
    %v1680 = vmul.f32 %v1663, %v1330
    %v1681 = vmul.f32 %v1665, %v1331
    %v1682 = vmul.f32 %v1651, %v1666
    %v1683 = vmul.f32 %v1653, %v1667
    %v1684 = vadd.f32 %v1680, %v1682
    %v1685 = vadd.f32 %v1681, %v1683
    %v1686 = vtanh.pop %v1684
    %v1687 = vtanh.pop %v1685
    %v1688 = vmul.f32 %v1677, %v1686
    %v1689 = vmul.f32 %v1679, %v1687
    %v1690 = vpack.c.bf16 %v1689, %v1688
    %v1692 = vunpack.c.l.b16 %v1690
    %v1693 = vunpack.c.h.b16 %v1690
    %v1694 = vpack.c.b16 %v1692, %v1692
    %v1695 = vpack.c.b16 %v1693, %v1693
    %s1698 = scalar_lea.vmem [#allocation11], 16
    %1699 = vst [vmem:[%s1698] sm:$0xf] %v1694
    %1700 = vst [vmem:[%s1698 + $0x4] sm:$0xf] %v1695
    %s1701 = scalar_lea.vmem [#allocation4], 192
    %v1702 = vld [vmem:[%s1701] sm:$0xff]
    %v1703 = vld [vmem:[%s1701 + $0x8] sm:$0xff]
    %v1704 = vld [vmem:[%s1701 + $0x10] sm:$0xff]
    %v1705 = vld [vmem:[%s1701 + $0x18] sm:$0xff]
    %v1706 = vld [vmem:[%s1701 + $0x20] sm:$0xff]
    %v1707 = vld [vmem:[%s1701 + $0x28] sm:$0xff]
    %v1708 = vld [vmem:[%s1701 + $0x30] sm:$0xff]
    %v1709 = vld [vmem:[%s1701 + $0x38] sm:$0xff]
    %v1710 = vld [vmem:[#allocation10] sm:$0xff]
    %v1711 = vld [vmem:[#allocation10 + $0x8] sm:$0xff]
    %v1712 = vld [vmem:[#allocation10 + $0x10] sm:$0xff]
    %v1713 = vld [vmem:[#allocation10 + $0x18] sm:$0xff]
    %v1714 = vld [vmem:[#allocation10 + $0x20] sm:$0xff]
    %v1715 = vld [vmem:[#allocation10 + $0x28] sm:$0xff]
    %v1716 = vld [vmem:[#allocation10 + $0x30] sm:$0xff]
    %v1717 = vld [vmem:[#allocation10 + $0x38] sm:$0xff]
    %v1718 = vld [vmem:[#allocation10 + $0x40] sm:$0xff]
    %v1719 = vld [vmem:[#allocation10 + $0x48] sm:$0xff]
    %v1720 = vld [vmem:[#allocation10 + $0x50] sm:$0xff]
    %v1721 = vld [vmem:[#allocation10 + $0x58] sm:$0xff]
    %v1722 = vld [vmem:[#allocation10 + $0x60] sm:$0xff]
    %v1723 = vld [vmem:[#allocation10 + $0x68] sm:$0xff]
    %v1724 = vld [vmem:[#allocation10 + $0x70] sm:$0xff]
    %v1725 = vld [vmem:[#allocation10 + $0x78] sm:$0xff]
    %v1726 = vld [vmem:[#allocation10 + $0x80] sm:$0xff]
    %v1727 = vld [vmem:[#allocation10 + $0x88] sm:$0xff]
    %v1728 = vld [vmem:[#allocation10 + $0x90] sm:$0xff]
    %v1729 = vld [vmem:[#allocation10 + $0x98] sm:$0xff]
    %v1730 = vld [vmem:[#allocation10 + $0xa0] sm:$0xff]
    %v1731 = vld [vmem:[#allocation10 + $0xa8] sm:$0xff]
    %v1732 = vld [vmem:[#allocation10 + $0xb0] sm:$0xff]
    %v1733 = vld [vmem:[#allocation10 + $0xb8] sm:$0xff]
    %v1734 = vld [vmem:[#allocation10 + $0xc0] sm:$0xff]
    %v1735 = vld [vmem:[#allocation10 + $0xc8] sm:$0xff]
    %v1736 = vld [vmem:[#allocation10 + $0xd0] sm:$0xff]
    %v1737 = vld [vmem:[#allocation10 + $0xd8] sm:$0xff]
    %v1738 = vld [vmem:[#allocation10 + $0xe0] sm:$0xff]
    %v1739 = vld [vmem:[#allocation10 + $0xe8] sm:$0xff]
    %v1740 = vld [vmem:[#allocation10 + $0xf0] sm:$0xff]
    %v1741 = vld [vmem:[#allocation10 + $0xf8] sm:$0xff]
    %v1774 = vunpack.c.l.b16 %v1710
    %v1775 = vunpack.c.h.b16 %v1710
    %v1776 = vunpack.c.l.b16 %v1711
    %v1777 = vunpack.c.h.b16 %v1711
    %v1778 = vunpack.c.l.b16 %v1712
    %v1779 = vunpack.c.h.b16 %v1712
    %v1780 = vunpack.c.l.b16 %v1713
    %v1781 = vunpack.c.h.b16 %v1713
    %v1782 = vunpack.c.l.b16 %v1714
    %v1783 = vunpack.c.h.b16 %v1714
    %v1784 = vunpack.c.l.b16 %v1715
    %v1785 = vunpack.c.h.b16 %v1715
    %v1786 = vunpack.c.l.b16 %v1716
    %v1787 = vunpack.c.h.b16 %v1716
    %v1788 = vunpack.c.l.b16 %v1717
    %v1789 = vunpack.c.h.b16 %v1717
    %v1790 = vunpack.c.l.b16 %v1718
    %v1791 = vunpack.c.h.b16 %v1718
    %v1792 = vunpack.c.l.b16 %v1719
    %v1793 = vunpack.c.h.b16 %v1719
    %v1794 = vunpack.c.l.b16 %v1720
    %v1795 = vunpack.c.h.b16 %v1720
    %v1796 = vunpack.c.l.b16 %v1721
    %v1797 = vunpack.c.h.b16 %v1721
    %v1798 = vunpack.c.l.b16 %v1722
    %v1799 = vunpack.c.h.b16 %v1722
    %v1800 = vunpack.c.l.b16 %v1723
    %v1801 = vunpack.c.h.b16 %v1723
    %v1802 = vunpack.c.l.b16 %v1724
    %v1803 = vunpack.c.h.b16 %v1724
    %v1804 = vunpack.c.l.b16 %v1725
    %v1805 = vunpack.c.h.b16 %v1725
    %v1806 = vunpack.c.l.b16 %v1726
    %v1807 = vunpack.c.h.b16 %v1726
    %v1808 = vunpack.c.l.b16 %v1727
    %v1809 = vunpack.c.h.b16 %v1727
    %v1810 = vunpack.c.l.b16 %v1728
    %v1811 = vunpack.c.h.b16 %v1728
    %v1812 = vunpack.c.l.b16 %v1729
    %v1813 = vunpack.c.h.b16 %v1729
    %v1814 = vunpack.c.l.b16 %v1730
    %v1815 = vunpack.c.h.b16 %v1730
    %v1816 = vunpack.c.l.b16 %v1731
    %v1817 = vunpack.c.h.b16 %v1731
    %v1818 = vunpack.c.l.b16 %v1732
    %v1819 = vunpack.c.h.b16 %v1732
    %v1820 = vunpack.c.l.b16 %v1733
    %v1821 = vunpack.c.h.b16 %v1733
    %v1822 = vunpack.c.l.b16 %v1734
    %v1823 = vunpack.c.h.b16 %v1734
    %v1824 = vunpack.c.l.b16 %v1735
    %v1825 = vunpack.c.h.b16 %v1735
    %v1826 = vunpack.c.l.b16 %v1736
    %v1827 = vunpack.c.h.b16 %v1736
    %v1828 = vunpack.c.l.b16 %v1737
    %v1829 = vunpack.c.h.b16 %v1737
    %v1830 = vunpack.c.l.b16 %v1738
    %v1831 = vunpack.c.h.b16 %v1738
    %v1832 = vunpack.c.l.b16 %v1739
    %v1833 = vunpack.c.h.b16 %v1739
    %v1834 = vunpack.c.l.b16 %v1740
    %v1835 = vunpack.c.h.b16 %v1740
    %v1836 = vunpack.c.l.b16 %v1741
    %v1837 = vunpack.c.h.b16 %v1741
    %v1838 = vpack.c.b16 %v1778, %v1774
    %v1839 = vpack.c.b16 %v1779, %v1775
    %v1840 = vpack.c.b16 %v1780, %v1776
    %v1841 = vpack.c.b16 %v1781, %v1777
    %v1842 = vpack.c.b16 %v1786, %v1782
    %v1843 = vpack.c.b16 %v1787, %v1783
    %v1844 = vpack.c.b16 %v1788, %v1784
    %v1845 = vpack.c.b16 %v1789, %v1785
    %v1846 = vpack.c.b16 %v1794, %v1790
    %v1847 = vpack.c.b16 %v1795, %v1791
    %v1848 = vpack.c.b16 %v1796, %v1792
    %v1849 = vpack.c.b16 %v1797, %v1793
    %v1850 = vpack.c.b16 %v1802, %v1798
    %v1851 = vpack.c.b16 %v1803, %v1799
    %v1852 = vpack.c.b16 %v1804, %v1800
    %v1853 = vpack.c.b16 %v1805, %v1801
    %v1854 = vpack.c.b16 %v1810, %v1806
    %v1855 = vpack.c.b16 %v1811, %v1807
    %v1856 = vpack.c.b16 %v1812, %v1808
    %v1857 = vpack.c.b16 %v1813, %v1809
    %v1858 = vpack.c.b16 %v1818, %v1814
    %v1859 = vpack.c.b16 %v1819, %v1815
    %v1860 = vpack.c.b16 %v1820, %v1816
    %v1861 = vpack.c.b16 %v1821, %v1817
    %v1862 = vpack.c.b16 %v1826, %v1822
    %v1863 = vpack.c.b16 %v1827, %v1823
    %v1864 = vpack.c.b16 %v1828, %v1824
    %v1865 = vpack.c.b16 %v1829, %v1825
    %v1866 = vpack.c.b16 %v1834, %v1830
    %v1867 = vpack.c.b16 %v1835, %v1831
    %v1868 = vpack.c.b16 %v1836, %v1832
    %v1869 = vpack.c.b16 %v1837, %v1833
    %1902 = vmatprep.subr.bf16.mxu0 %v1839
    %1903 = vmatpush1.bf16.msra.mxu0 %v1838
    %1904 = vmatprep.subr.bf16.mxu0 %v1843
    %1905 = vmatpush1.bf16.msra.mxu0 %v1842
    %1906 = vmatprep.subr.bf16.mxu0 %v1847
    %1907 = vmatpush1.bf16.msra.mxu0 %v1846
    %1908 = vmatprep.subr.bf16.mxu0 %v1851
    %1909 = vmatpush1.bf16.msra.mxu0 %v1850
    %1910 = vmatprep.subr.bf16.mxu0 %v1855
    %1911 = vmatpush1.bf16.msra.mxu0 %v1854
    %1912 = vmatprep.subr.bf16.mxu0 %v1859
    %1913 = vmatpush1.bf16.msra.mxu0 %v1858
    %1914 = vmatprep.subr.bf16.mxu0 %v1863
    %1915 = vmatpush1.bf16.msra.mxu0 %v1862
    %1916 = vmatprep.subr.bf16.mxu0 %v1867
    %1917 = vmatpush1.bf16.msra.mxu0 %v1866
    %1918 = vmatprep.subr.bf16.mxu0 0
    %1919 = vmatpush1.bf16.msra.mxu0 0
    %1920 = vmatprep.subr.bf16.mxu0 0
    %1921 = vmatpush1.bf16.msra.mxu0 0
    %1922 = vmatprep.subr.bf16.mxu0 0
    %1923 = vmatpush1.bf16.msra.mxu0 0
    %1924 = vmatprep.subr.bf16.mxu0 0
    %1925 = vmatpush1.bf16.msra.mxu0 0
    %1926 = vmatprep.subr.bf16.mxu0 0
    %1927 = vmatpush1.bf16.msra.mxu0 0
    %1928 = vmatprep.subr.bf16.mxu0 0
    %1929 = vmatpush1.bf16.msra.mxu0 0
    %1930 = vmatprep.subr.bf16.mxu0 0
    %1931 = vmatpush1.bf16.msra.mxu0 0
    %1932 = vmatprep.subr.bf16.mxu0 0
    %1933 = vmatpush1.bf16.msra.mxu0 0
    %1934 = vmatprep.mubr.bf16.mxu0 0
    %1935 = vmatmul.mubr.bf16.gmra.mrb[0].mxu0 %v1690
    %v1936 = vpop.f32.mrb[0].mxu0
    %v1937 = vadd.f32 0.0, %v1936
    %v1938 = vpop.f32.mrb[0].mxu0
    %v1939 = vadd.f32 0.0, %v1938
    %v1940 = vpop.f32.mrb[0].mxu0
    %v1941 = vadd.f32 0.0, %v1940
    %v1942 = vpop.f32.mrb[0].mxu0
    %v1943 = vadd.f32 0.0, %v1942
    %1944 = vdwg.mxu0
    %1945 = vmatprep.subr.bf16.mxu0 %v1841
    %1946 = vmatpush1.bf16.msra.mxu0 %v1840
    %1947 = vmatprep.subr.bf16.mxu0 %v1845
    %1948 = vmatpush1.bf16.msra.mxu0 %v1844
    %1949 = vmatprep.subr.bf16.mxu0 %v1849
    %1950 = vmatpush1.bf16.msra.mxu0 %v1848
    %1951 = vmatprep.subr.bf16.mxu0 %v1853
    %1952 = vmatpush1.bf16.msra.mxu0 %v1852
    %1953 = vmatprep.subr.bf16.mxu0 %v1857
    %1954 = vmatpush1.bf16.msra.mxu0 %v1856
    %1955 = vmatprep.subr.bf16.mxu0 %v1861
    %1956 = vmatpush1.bf16.msra.mxu0 %v1860
    %1957 = vmatprep.subr.bf16.mxu0 %v1865
    %1958 = vmatpush1.bf16.msra.mxu0 %v1864
    %1959 = vmatprep.subr.bf16.mxu0 %v1869
    %1960 = vmatpush1.bf16.msra.mxu0 %v1868
    %1961 = vmatprep.subr.bf16.mxu0 0
    %1962 = vmatpush1.bf16.msra.mxu0 0
    %1963 = vmatprep.subr.bf16.mxu0 0
    %1964 = vmatpush1.bf16.msra.mxu0 0
    %1965 = vmatprep.subr.bf16.mxu0 0
    %1966 = vmatpush1.bf16.msra.mxu0 0
    %1967 = vmatprep.subr.bf16.mxu0 0
    %1968 = vmatpush1.bf16.msra.mxu0 0
    %1969 = vmatprep.subr.bf16.mxu0 0
    %1970 = vmatpush1.bf16.msra.mxu0 0
    %1971 = vmatprep.subr.bf16.mxu0 0
    %1972 = vmatpush1.bf16.msra.mxu0 0
    %1973 = vmatprep.subr.bf16.mxu0 0
    %1974 = vmatpush1.bf16.msra.mxu0 0
    %1975 = vmatprep.subr.bf16.mxu0 0
    %1976 = vmatpush1.bf16.msra.mxu0 0
    %1977 = vmatprep.mubr.bf16.mxu0 0
    %1978 = vmatmul.mubr.bf16.gmra.mrb[0].mxu0 %v1690
    %v1979 = vpop.f32.mrb[0].mxu0
    %v1980 = vadd.f32 0.0, %v1979
    %v1981 = vpop.f32.mrb[0].mxu0
    %v1982 = vadd.f32 0.0, %v1981
    %v1983 = vpop.f32.mrb[0].mxu0
    %v1984 = vadd.f32 0.0, %v1983
    %v1985 = vpop.f32.mrb[0].mxu0
    %v1986 = vadd.f32 0.0, %v1985
    %1987 = vdwg.mxu0
    %v1988 = vadd.f32 %v1702, %v1937
    %v1989 = vadd.f32 %v1703, %v1939
    %v1990 = vadd.f32 %v1704, %v1980
    %v1991 = vadd.f32 %v1705, %v1982
    %v1992 = vadd.f32 %v1706, %v1941
    %v1993 = vadd.f32 %v1707, %v1943
    %v1994 = vadd.f32 %v1708, %v1984
    %v1995 = vadd.f32 %v1709, %v1986
    %v1996 = vxor.u32 %v1988, 2147483648
    %v1997 = vxor.u32 %v1992, 2147483648
    %v1998 = vmul.f32 %v1996, 1.442695
    %v1999 = vpow.pop %v1998
    %v2000 = vmul.f32 %v1997, 1.442695
    %v2001 = vpow.pop %v2000
    %v2002 = vadd.f32 %v1999, 1.0
    %v2003 = vadd.f32 %v2001, 1.0
    %v2004 = vrcp.pop %v2002
    %v2005 = vmul.f32 1.0, %v2004
    %v2006 = vrcp.pop %v2003
    %v2007 = vmul.f32 1.0, %v2006
    %v2008 = vxor.u32 %v1989, 2147483648
    %v2009 = vxor.u32 %v1993, 2147483648
    %v2010 = vmul.f32 %v2008, 1.442695
    %v2011 = vpow.pop %v2010
    %v2012 = vmul.f32 %v2009, 1.442695
    %v2013 = vpow.pop %v2012
    %v2014 = vadd.f32 %v2011, 1.0
    %v2015 = vadd.f32 %v2013, 1.0
    %v2016 = vrcp.pop %v2014
    %v2017 = vmul.f32 1.0, %v2016
    %v2018 = vrcp.pop %v2015
    %v2019 = vmul.f32 1.0, %v2018
    %v2020 = vtanh.pop %v1990
    %v2021 = vtanh.pop %v1994
    %v2022 = vxor.u32 %v1991, 2147483648
    %v2023 = vxor.u32 %v1995, 2147483648
    %v2024 = vmul.f32 %v2022, 1.442695
    %v2025 = vpow.pop %v2024
    %v2026 = vmul.f32 %v2023, 1.442695
    %v2027 = vpow.pop %v2026
    %v2028 = vadd.f32 %v2025, 1.0
    %v2029 = vadd.f32 %v2027, 1.0
    %v2030 = vrcp.pop %v2028
    %v2031 = vmul.f32 1.0, %v2030
    %v2032 = vrcp.pop %v2029
    %v2033 = vmul.f32 1.0, %v2032
    %v2034 = vmul.f32 %v2017, %v1684
    %v2035 = vmul.f32 %v2019, %v1685
    %v2036 = vmul.f32 %v2005, %v2020
    %v2037 = vmul.f32 %v2007, %v2021
    %v2038 = vadd.f32 %v2034, %v2036
    %v2039 = vadd.f32 %v2035, %v2037
    %v2040 = vtanh.pop %v2038
    %v2041 = vtanh.pop %v2039
    %v2042 = vmul.f32 %v2031, %v2040
    %v2043 = vmul.f32 %v2033, %v2041
    %v2044 = vpack.c.bf16 %v2043, %v2042
    %v2046 = vunpack.c.l.b16 %v2044
    %v2047 = vunpack.c.h.b16 %v2044
    %v2048 = vpack.c.b16 %v2046, %v2046
    %v2049 = vpack.c.b16 %v2047, %v2047
    %s2052 = scalar_lea.vmem [#allocation11], 24
    %2053 = vst [vmem:[%s2052] sm:$0xf] %v2048
    %2054 = vst [vmem:[%s2052 + $0x4] sm:$0xf] %v2049
    %s2055 = scalar_lea.vmem [#allocation4], 256
    %v2056 = vld [vmem:[%s2055] sm:$0xff]
    %v2057 = vld [vmem:[%s2055 + $0x8] sm:$0xff]
    %v2058 = vld [vmem:[%s2055 + $0x10] sm:$0xff]
    %v2059 = vld [vmem:[%s2055 + $0x18] sm:$0xff]
    %v2060 = vld [vmem:[%s2055 + $0x20] sm:$0xff]
    %v2061 = vld [vmem:[%s2055 + $0x28] sm:$0xff]
    %v2062 = vld [vmem:[%s2055 + $0x30] sm:$0xff]
    %v2063 = vld [vmem:[%s2055 + $0x38] sm:$0xff]
    %v2064 = vld [vmem:[#allocation10] sm:$0xff]
    %v2065 = vld [vmem:[#allocation10 + $0x8] sm:$0xff]
    %v2066 = vld [vmem:[#allocation10 + $0x10] sm:$0xff]
    %v2067 = vld [vmem:[#allocation10 + $0x18] sm:$0xff]
    %v2068 = vld [vmem:[#allocation10 + $0x20] sm:$0xff]
    %v2069 = vld [vmem:[#allocation10 + $0x28] sm:$0xff]
    %v2070 = vld [vmem:[#allocation10 + $0x30] sm:$0xff]
    %v2071 = vld [vmem:[#allocation10 + $0x38] sm:$0xff]
    %v2072 = vld [vmem:[#allocation10 + $0x40] sm:$0xff]
    %v2073 = vld [vmem:[#allocation10 + $0x48] sm:$0xff]
    %v2074 = vld [vmem:[#allocation10 + $0x50] sm:$0xff]
    %v2075 = vld [vmem:[#allocation10 + $0x58] sm:$0xff]
    %v2076 = vld [vmem:[#allocation10 + $0x60] sm:$0xff]
    %v2077 = vld [vmem:[#allocation10 + $0x68] sm:$0xff]
    %v2078 = vld [vmem:[#allocation10 + $0x70] sm:$0xff]
    %v2079 = vld [vmem:[#allocation10 + $0x78] sm:$0xff]
    %v2080 = vld [vmem:[#allocation10 + $0x80] sm:$0xff]
    %v2081 = vld [vmem:[#allocation10 + $0x88] sm:$0xff]
    %v2082 = vld [vmem:[#allocation10 + $0x90] sm:$0xff]
    %v2083 = vld [vmem:[#allocation10 + $0x98] sm:$0xff]
    %v2084 = vld [vmem:[#allocation10 + $0xa0] sm:$0xff]
    %v2085 = vld [vmem:[#allocation10 + $0xa8] sm:$0xff]
    %v2086 = vld [vmem:[#allocation10 + $0xb0] sm:$0xff]
    %v2087 = vld [vmem:[#allocation10 + $0xb8] sm:$0xff]
    %v2088 = vld [vmem:[#allocation10 + $0xc0] sm:$0xff]
    %v2089 = vld [vmem:[#allocation10 + $0xc8] sm:$0xff]
    %v2090 = vld [vmem:[#allocation10 + $0xd0] sm:$0xff]
    %v2091 = vld [vmem:[#allocation10 + $0xd8] sm:$0xff]
    %v2092 = vld [vmem:[#allocation10 + $0xe0] sm:$0xff]
    %v2093 = vld [vmem:[#allocation10 + $0xe8] sm:$0xff]
    %v2094 = vld [vmem:[#allocation10 + $0xf0] sm:$0xff]
    %v2095 = vld [vmem:[#allocation10 + $0xf8] sm:$0xff]
    %v2128 = vunpack.c.l.b16 %v2064
    %v2129 = vunpack.c.h.b16 %v2064
    %v2130 = vunpack.c.l.b16 %v2065
    %v2131 = vunpack.c.h.b16 %v2065
    %v2132 = vunpack.c.l.b16 %v2066
    %v2133 = vunpack.c.h.b16 %v2066
    %v2134 = vunpack.c.l.b16 %v2067
    %v2135 = vunpack.c.h.b16 %v2067
    %v2136 = vunpack.c.l.b16 %v2068
    %v2137 = vunpack.c.h.b16 %v2068
    %v2138 = vunpack.c.l.b16 %v2069
    %v2139 = vunpack.c.h.b16 %v2069
    %v2140 = vunpack.c.l.b16 %v2070
    %v2141 = vunpack.c.h.b16 %v2070
    %v2142 = vunpack.c.l.b16 %v2071
    %v2143 = vunpack.c.h.b16 %v2071
    %v2144 = vunpack.c.l.b16 %v2072
    %v2145 = vunpack.c.h.b16 %v2072
    %v2146 = vunpack.c.l.b16 %v2073
    %v2147 = vunpack.c.h.b16 %v2073
    %v2148 = vunpack.c.l.b16 %v2074
    %v2149 = vunpack.c.h.b16 %v2074
    %v2150 = vunpack.c.l.b16 %v2075
    %v2151 = vunpack.c.h.b16 %v2075
    %v2152 = vunpack.c.l.b16 %v2076
    %v2153 = vunpack.c.h.b16 %v2076
    %v2154 = vunpack.c.l.b16 %v2077
    %v2155 = vunpack.c.h.b16 %v2077
    %v2156 = vunpack.c.l.b16 %v2078
    %v2157 = vunpack.c.h.b16 %v2078
    %v2158 = vunpack.c.l.b16 %v2079
    %v2159 = vunpack.c.h.b16 %v2079
    %v2160 = vunpack.c.l.b16 %v2080
    %v2161 = vunpack.c.h.b16 %v2080
    %v2162 = vunpack.c.l.b16 %v2081
    %v2163 = vunpack.c.h.b16 %v2081
    %v2164 = vunpack.c.l.b16 %v2082
    %v2165 = vunpack.c.h.b16 %v2082
    %v2166 = vunpack.c.l.b16 %v2083
    %v2167 = vunpack.c.h.b16 %v2083
    %v2168 = vunpack.c.l.b16 %v2084
    %v2169 = vunpack.c.h.b16 %v2084
    %v2170 = vunpack.c.l.b16 %v2085
    %v2171 = vunpack.c.h.b16 %v2085
    %v2172 = vunpack.c.l.b16 %v2086
    %v2173 = vunpack.c.h.b16 %v2086
    %v2174 = vunpack.c.l.b16 %v2087
    %v2175 = vunpack.c.h.b16 %v2087
    %v2176 = vunpack.c.l.b16 %v2088
    %v2177 = vunpack.c.h.b16 %v2088
    %v2178 = vunpack.c.l.b16 %v2089
    %v2179 = vunpack.c.h.b16 %v2089
    %v2180 = vunpack.c.l.b16 %v2090
    %v2181 = vunpack.c.h.b16 %v2090
    %v2182 = vunpack.c.l.b16 %v2091
    %v2183 = vunpack.c.h.b16 %v2091
    %v2184 = vunpack.c.l.b16 %v2092
    %v2185 = vunpack.c.h.b16 %v2092
    %v2186 = vunpack.c.l.b16 %v2093
    %v2187 = vunpack.c.h.b16 %v2093
    %v2188 = vunpack.c.l.b16 %v2094
    %v2189 = vunpack.c.h.b16 %v2094
    %v2190 = vunpack.c.l.b16 %v2095
    %v2191 = vunpack.c.h.b16 %v2095
    %v2192 = vpack.c.b16 %v2132, %v2128
    %v2193 = vpack.c.b16 %v2133, %v2129
    %v2194 = vpack.c.b16 %v2134, %v2130
    %v2195 = vpack.c.b16 %v2135, %v2131
    %v2196 = vpack.c.b16 %v2140, %v2136
    %v2197 = vpack.c.b16 %v2141, %v2137
    %v2198 = vpack.c.b16 %v2142, %v2138
    %v2199 = vpack.c.b16 %v2143, %v2139
    %v2200 = vpack.c.b16 %v2148, %v2144
    %v2201 = vpack.c.b16 %v2149, %v2145
    %v2202 = vpack.c.b16 %v2150, %v2146
    %v2203 = vpack.c.b16 %v2151, %v2147
    %v2204 = vpack.c.b16 %v2156, %v2152
    %v2205 = vpack.c.b16 %v2157, %v2153
    %v2206 = vpack.c.b16 %v2158, %v2154
    %v2207 = vpack.c.b16 %v2159, %v2155
    %v2208 = vpack.c.b16 %v2164, %v2160
    %v2209 = vpack.c.b16 %v2165, %v2161
    %v2210 = vpack.c.b16 %v2166, %v2162
    %v2211 = vpack.c.b16 %v2167, %v2163
    %v2212 = vpack.c.b16 %v2172, %v2168
    %v2213 = vpack.c.b16 %v2173, %v2169
    %v2214 = vpack.c.b16 %v2174, %v2170
    %v2215 = vpack.c.b16 %v2175, %v2171
    %v2216 = vpack.c.b16 %v2180, %v2176
    %v2217 = vpack.c.b16 %v2181, %v2177
    %v2218 = vpack.c.b16 %v2182, %v2178
    %v2219 = vpack.c.b16 %v2183, %v2179
    %v2220 = vpack.c.b16 %v2188, %v2184
    %v2221 = vpack.c.b16 %v2189, %v2185
    %v2222 = vpack.c.b16 %v2190, %v2186
    %v2223 = vpack.c.b16 %v2191, %v2187
    %2256 = vmatprep.subr.bf16.mxu0 %v2193
    %2257 = vmatpush1.bf16.msra.mxu0 %v2192
    %2258 = vmatprep.subr.bf16.mxu0 %v2197
    %2259 = vmatpush1.bf16.msra.mxu0 %v2196
    %2260 = vmatprep.subr.bf16.mxu0 %v2201
    %2261 = vmatpush1.bf16.msra.mxu0 %v2200
    %2262 = vmatprep.subr.bf16.mxu0 %v2205
    %2263 = vmatpush1.bf16.msra.mxu0 %v2204
    %2264 = vmatprep.subr.bf16.mxu0 %v2209
    %2265 = vmatpush1.bf16.msra.mxu0 %v2208
    %2266 = vmatprep.subr.bf16.mxu0 %v2213
    %2267 = vmatpush1.bf16.msra.mxu0 %v2212
    %2268 = vmatprep.subr.bf16.mxu0 %v2217
    %2269 = vmatpush1.bf16.msra.mxu0 %v2216
    %2270 = vmatprep.subr.bf16.mxu0 %v2221
    %2271 = vmatpush1.bf16.msra.mxu0 %v2220
    %2272 = vmatprep.subr.bf16.mxu0 0
    %2273 = vmatpush1.bf16.msra.mxu0 0
    %2274 = vmatprep.subr.bf16.mxu0 0
    %2275 = vmatpush1.bf16.msra.mxu0 0
    %2276 = vmatprep.subr.bf16.mxu0 0
    %2277 = vmatpush1.bf16.msra.mxu0 0
    %2278 = vmatprep.subr.bf16.mxu0 0
    %2279 = vmatpush1.bf16.msra.mxu0 0
    %2280 = vmatprep.subr.bf16.mxu0 0
    %2281 = vmatpush1.bf16.msra.mxu0 0
    %2282 = vmatprep.subr.bf16.mxu0 0
    %2283 = vmatpush1.bf16.msra.mxu0 0
    %2284 = vmatprep.subr.bf16.mxu0 0
    %2285 = vmatpush1.bf16.msra.mxu0 0
    %2286 = vmatprep.subr.bf16.mxu0 0
    %2287 = vmatpush1.bf16.msra.mxu0 0
    %2288 = vmatprep.mubr.bf16.mxu0 0
    %2289 = vmatmul.mubr.bf16.gmra.mrb[0].mxu0 %v2044
    %v2290 = vpop.f32.mrb[0].mxu0
    %v2291 = vadd.f32 0.0, %v2290
    %v2292 = vpop.f32.mrb[0].mxu0
    %v2293 = vadd.f32 0.0, %v2292
    %v2294 = vpop.f32.mrb[0].mxu0
    %v2295 = vadd.f32 0.0, %v2294
    %v2296 = vpop.f32.mrb[0].mxu0
    %v2297 = vadd.f32 0.0, %v2296
    %2298 = vdwg.mxu0
    %2299 = vmatprep.subr.bf16.mxu0 %v2195
    %2300 = vmatpush1.bf16.msra.mxu0 %v2194
    %2301 = vmatprep.subr.bf16.mxu0 %v2199
    %2302 = vmatpush1.bf16.msra.mxu0 %v2198
    %2303 = vmatprep.subr.bf16.mxu0 %v2203
    %2304 = vmatpush1.bf16.msra.mxu0 %v2202
    %2305 = vmatprep.subr.bf16.mxu0 %v2207
    %2306 = vmatpush1.bf16.msra.mxu0 %v2206
    %2307 = vmatprep.subr.bf16.mxu0 %v2211
    %2308 = vmatpush1.bf16.msra.mxu0 %v2210
    %2309 = vmatprep.subr.bf16.mxu0 %v2215
    %2310 = vmatpush1.bf16.msra.mxu0 %v2214
    %2311 = vmatprep.subr.bf16.mxu0 %v2219
    %2312 = vmatpush1.bf16.msra.mxu0 %v2218
    %2313 = vmatprep.subr.bf16.mxu0 %v2223
    %2314 = vmatpush1.bf16.msra.mxu0 %v2222
    %2315 = vmatprep.subr.bf16.mxu0 0
    %2316 = vmatpush1.bf16.msra.mxu0 0
    %2317 = vmatprep.subr.bf16.mxu0 0
    %2318 = vmatpush1.bf16.msra.mxu0 0
    %2319 = vmatprep.subr.bf16.mxu0 0
    %2320 = vmatpush1.bf16.msra.mxu0 0
    %2321 = vmatprep.subr.bf16.mxu0 0
    %2322 = vmatpush1.bf16.msra.mxu0 0
    %2323 = vmatprep.subr.bf16.mxu0 0
    %2324 = vmatpush1.bf16.msra.mxu0 0
    %2325 = vmatprep.subr.bf16.mxu0 0
    %2326 = vmatpush1.bf16.msra.mxu0 0
    %2327 = vmatprep.subr.bf16.mxu0 0
    %2328 = vmatpush1.bf16.msra.mxu0 0
    %2329 = vmatprep.subr.bf16.mxu0 0
    %2330 = vmatpush1.bf16.msra.mxu0 0
    %2331 = vmatprep.mubr.bf16.mxu0 0
    %2332 = vmatmul.mubr.bf16.gmra.mrb[0].mxu0 %v2044
    %v2333 = vpop.f32.mrb[0].mxu0
    %v2334 = vadd.f32 0.0, %v2333
    %v2335 = vpop.f32.mrb[0].mxu0
    %v2336 = vadd.f32 0.0, %v2335
    %v2337 = vpop.f32.mrb[0].mxu0
    %v2338 = vadd.f32 0.0, %v2337
    %v2339 = vpop.f32.mrb[0].mxu0
    %v2340 = vadd.f32 0.0, %v2339
    %2341 = vdwg.mxu0
    %v2342 = vadd.f32 %v2056, %v2291
    %v2343 = vadd.f32 %v2057, %v2293
    %v2344 = vadd.f32 %v2058, %v2334
    %v2345 = vadd.f32 %v2059, %v2336
    %v2346 = vadd.f32 %v2060, %v2295
    %v2347 = vadd.f32 %v2061, %v2297
    %v2348 = vadd.f32 %v2062, %v2338
    %v2349 = vadd.f32 %v2063, %v2340
    %v2350 = vxor.u32 %v2342, 2147483648
    %v2351 = vxor.u32 %v2346, 2147483648
    %v2352 = vmul.f32 %v2350, 1.442695
    %v2353 = vpow.pop %v2352
    %v2354 = vmul.f32 %v2351, 1.442695
    %v2355 = vpow.pop %v2354
    %v2356 = vadd.f32 %v2353, 1.0
    %v2357 = vadd.f32 %v2355, 1.0
    %v2358 = vrcp.pop %v2356
    %v2359 = vmul.f32 1.0, %v2358
    %v2360 = vrcp.pop %v2357
    %v2361 = vmul.f32 1.0, %v2360
    %v2362 = vxor.u32 %v2343, 2147483648
    %v2363 = vxor.u32 %v2347, 2147483648
    %v2364 = vmul.f32 %v2362, 1.442695
    %v2365 = vpow.pop %v2364
    %v2366 = vmul.f32 %v2363, 1.442695
    %v2367 = vpow.pop %v2366
    %v2368 = vadd.f32 %v2365, 1.0
    %v2369 = vadd.f32 %v2367, 1.0
    %v2370 = vrcp.pop %v2368
    %v2371 = vmul.f32 1.0, %v2370
    %v2372 = vrcp.pop %v2369
    %v2373 = vmul.f32 1.0, %v2372
    %v2374 = vtanh.pop %v2344
    %v2375 = vtanh.pop %v2348
    %v2376 = vxor.u32 %v2345, 2147483648
    %v2377 = vxor.u32 %v2349, 2147483648
    %v2378 = vmul.f32 %v2376, 1.442695
    %v2379 = vpow.pop %v2378
    %v2380 = vmul.f32 %v2377, 1.442695
    %v2381 = vpow.pop %v2380
    %v2382 = vadd.f32 %v2379, 1.0
    %v2383 = vadd.f32 %v2381, 1.0
    %v2384 = vrcp.pop %v2382
    %v2385 = vmul.f32 1.0, %v2384
    %v2386 = vrcp.pop %v2383
    %v2387 = vmul.f32 1.0, %v2386
    %v2388 = vmul.f32 %v2371, %v2038
    %v2389 = vmul.f32 %v2373, %v2039
    %v2390 = vmul.f32 %v2359, %v2374
    %v2391 = vmul.f32 %v2361, %v2375
    %v2392 = vadd.f32 %v2388, %v2390
    %v2393 = vadd.f32 %v2389, %v2391
    %v2394 = vtanh.pop %v2392
    %v2395 = vtanh.pop %v2393
    %v2396 = vmul.f32 %v2385, %v2394
    %v2397 = vmul.f32 %v2387, %v2395
    %v2398 = vpack.c.bf16 %v2397, %v2396
    %v2400 = vunpack.c.l.b16 %v2398
    %v2401 = vunpack.c.h.b16 %v2398
    %v2402 = vpack.c.b16 %v2400, %v2400
    %v2403 = vpack.c.b16 %v2401, %v2401
    %s2406 = scalar_lea.vmem [#allocation11], 32
    %2407 = vst [vmem:[%s2406] sm:$0xf] %v2402
    %2408 = vst [vmem:[%s2406 + $0x4] sm:$0xf] %v2403
    %s2409 = scalar_lea.vmem [#allocation4], 320
    %v2410 = vld [vmem:[%s2409] sm:$0xff]
    %v2411 = vld [vmem:[%s2409 + $0x8] sm:$0xff]
    %v2412 = vld [vmem:[%s2409 + $0x10] sm:$0xff]
    %v2413 = vld [vmem:[%s2409 + $0x18] sm:$0xff]
    %v2414 = vld [vmem:[%s2409 + $0x20] sm:$0xff]
    %v2415 = vld [vmem:[%s2409 + $0x28] sm:$0xff]
    %v2416 = vld [vmem:[%s2409 + $0x30] sm:$0xff]
    %v2417 = vld [vmem:[%s2409 + $0x38] sm:$0xff]
    %v2418 = vld [vmem:[#allocation10] sm:$0xff]
    %v2419 = vld [vmem:[#allocation10 + $0x8] sm:$0xff]
    %v2420 = vld [vmem:[#allocation10 + $0x10] sm:$0xff]
    %v2421 = vld [vmem:[#allocation10 + $0x18] sm:$0xff]
    %v2422 = vld [vmem:[#allocation10 + $0x20] sm:$0xff]
    %v2423 = vld [vmem:[#allocation10 + $0x28] sm:$0xff]
    %v2424 = vld [vmem:[#allocation10 + $0x30] sm:$0xff]
    %v2425 = vld [vmem:[#allocation10 + $0x38] sm:$0xff]
    %v2426 = vld [vmem:[#allocation10 + $0x40] sm:$0xff]
    %v2427 = vld [vmem:[#allocation10 + $0x48] sm:$0xff]
    %v2428 = vld [vmem:[#allocation10 + $0x50] sm:$0xff]
    %v2429 = vld [vmem:[#allocation10 + $0x58] sm:$0xff]
    %v2430 = vld [vmem:[#allocation10 + $0x60] sm:$0xff]
    %v2431 = vld [vmem:[#allocation10 + $0x68] sm:$0xff]
    %v2432 = vld [vmem:[#allocation10 + $0x70] sm:$0xff]
    %v2433 = vld [vmem:[#allocation10 + $0x78] sm:$0xff]
    %v2434 = vld [vmem:[#allocation10 + $0x80] sm:$0xff]
    %v2435 = vld [vmem:[#allocation10 + $0x88] sm:$0xff]
    %v2436 = vld [vmem:[#allocation10 + $0x90] sm:$0xff]
    %v2437 = vld [vmem:[#allocation10 + $0x98] sm:$0xff]
    %v2438 = vld [vmem:[#allocation10 + $0xa0] sm:$0xff]
    %v2439 = vld [vmem:[#allocation10 + $0xa8] sm:$0xff]
    %v2440 = vld [vmem:[#allocation10 + $0xb0] sm:$0xff]
    %v2441 = vld [vmem:[#allocation10 + $0xb8] sm:$0xff]
    %v2442 = vld [vmem:[#allocation10 + $0xc0] sm:$0xff]
    %v2443 = vld [vmem:[#allocation10 + $0xc8] sm:$0xff]
    %v2444 = vld [vmem:[#allocation10 + $0xd0] sm:$0xff]
    %v2445 = vld [vmem:[#allocation10 + $0xd8] sm:$0xff]
    %v2446 = vld [vmem:[#allocation10 + $0xe0] sm:$0xff]
    %v2447 = vld [vmem:[#allocation10 + $0xe8] sm:$0xff]
    %v2448 = vld [vmem:[#allocation10 + $0xf0] sm:$0xff]
    %v2449 = vld [vmem:[#allocation10 + $0xf8] sm:$0xff]
    %v2482 = vunpack.c.l.b16 %v2418
    %v2483 = vunpack.c.h.b16 %v2418
    %v2484 = vunpack.c.l.b16 %v2419
    %v2485 = vunpack.c.h.b16 %v2419
    %v2486 = vunpack.c.l.b16 %v2420
    %v2487 = vunpack.c.h.b16 %v2420
    %v2488 = vunpack.c.l.b16 %v2421
    %v2489 = vunpack.c.h.b16 %v2421
    %v2490 = vunpack.c.l.b16 %v2422
    %v2491 = vunpack.c.h.b16 %v2422
    %v2492 = vunpack.c.l.b16 %v2423
    %v2493 = vunpack.c.h.b16 %v2423
    %v2494 = vunpack.c.l.b16 %v2424
    %v2495 = vunpack.c.h.b16 %v2424
    %v2496 = vunpack.c.l.b16 %v2425
    %v2497 = vunpack.c.h.b16 %v2425
    %v2498 = vunpack.c.l.b16 %v2426
    %v2499 = vunpack.c.h.b16 %v2426
    %v2500 = vunpack.c.l.b16 %v2427
    %v2501 = vunpack.c.h.b16 %v2427
    %v2502 = vunpack.c.l.b16 %v2428
    %v2503 = vunpack.c.h.b16 %v2428
    %v2504 = vunpack.c.l.b16 %v2429
    %v2505 = vunpack.c.h.b16 %v2429
    %v2506 = vunpack.c.l.b16 %v2430
    %v2507 = vunpack.c.h.b16 %v2430
    %v2508 = vunpack.c.l.b16 %v2431
    %v2509 = vunpack.c.h.b16 %v2431
    %v2510 = vunpack.c.l.b16 %v2432
    %v2511 = vunpack.c.h.b16 %v2432
    %v2512 = vunpack.c.l.b16 %v2433
    %v2513 = vunpack.c.h.b16 %v2433
    %v2514 = vunpack.c.l.b16 %v2434
    %v2515 = vunpack.c.h.b16 %v2434
    %v2516 = vunpack.c.l.b16 %v2435
    %v2517 = vunpack.c.h.b16 %v2435
    %v2518 = vunpack.c.l.b16 %v2436
    %v2519 = vunpack.c.h.b16 %v2436
    %v2520 = vunpack.c.l.b16 %v2437
    %v2521 = vunpack.c.h.b16 %v2437
    %v2522 = vunpack.c.l.b16 %v2438
    %v2523 = vunpack.c.h.b16 %v2438
    %v2524 = vunpack.c.l.b16 %v2439
    %v2525 = vunpack.c.h.b16 %v2439
    %v2526 = vunpack.c.l.b16 %v2440
    %v2527 = vunpack.c.h.b16 %v2440
    %v2528 = vunpack.c.l.b16 %v2441
    %v2529 = vunpack.c.h.b16 %v2441
    %v2530 = vunpack.c.l.b16 %v2442
    %v2531 = vunpack.c.h.b16 %v2442
    %v2532 = vunpack.c.l.b16 %v2443
    %v2533 = vunpack.c.h.b16 %v2443
    %v2534 = vunpack.c.l.b16 %v2444
    %v2535 = vunpack.c.h.b16 %v2444
    %v2536 = vunpack.c.l.b16 %v2445
    %v2537 = vunpack.c.h.b16 %v2445
    %v2538 = vunpack.c.l.b16 %v2446
    %v2539 = vunpack.c.h.b16 %v2446
    %v2540 = vunpack.c.l.b16 %v2447
    %v2541 = vunpack.c.h.b16 %v2447
    %v2542 = vunpack.c.l.b16 %v2448
    %v2543 = vunpack.c.h.b16 %v2448
    %v2544 = vunpack.c.l.b16 %v2449
    %v2545 = vunpack.c.h.b16 %v2449
    %v2546 = vpack.c.b16 %v2486, %v2482
    %v2547 = vpack.c.b16 %v2487, %v2483
    %v2548 = vpack.c.b16 %v2488, %v2484
    %v2549 = vpack.c.b16 %v2489, %v2485
    %v2550 = vpack.c.b16 %v2494, %v2490
    %v2551 = vpack.c.b16 %v2495, %v2491
    %v2552 = vpack.c.b16 %v2496, %v2492
    %v2553 = vpack.c.b16 %v2497, %v2493
    %v2554 = vpack.c.b16 %v2502, %v2498
    %v2555 = vpack.c.b16 %v2503, %v2499
    %v2556 = vpack.c.b16 %v2504, %v2500
    %v2557 = vpack.c.b16 %v2505, %v2501
    %v2558 = vpack.c.b16 %v2510, %v2506
    %v2559 = vpack.c.b16 %v2511, %v2507
    %v2560 = vpack.c.b16 %v2512, %v2508
    %v2561 = vpack.c.b16 %v2513, %v2509
    %v2562 = vpack.c.b16 %v2518, %v2514
    %v2563 = vpack.c.b16 %v2519, %v2515
    %v2564 = vpack.c.b16 %v2520, %v2516
    %v2565 = vpack.c.b16 %v2521, %v2517
    %v2566 = vpack.c.b16 %v2526, %v2522
    %v2567 = vpack.c.b16 %v2527, %v2523
    %v2568 = vpack.c.b16 %v2528, %v2524
    %v2569 = vpack.c.b16 %v2529, %v2525
    %v2570 = vpack.c.b16 %v2534, %v2530
    %v2571 = vpack.c.b16 %v2535, %v2531
    %v2572 = vpack.c.b16 %v2536, %v2532
    %v2573 = vpack.c.b16 %v2537, %v2533
    %v2574 = vpack.c.b16 %v2542, %v2538
    %v2575 = vpack.c.b16 %v2543, %v2539
    %v2576 = vpack.c.b16 %v2544, %v2540
    %v2577 = vpack.c.b16 %v2545, %v2541
    %2610 = vmatprep.subr.bf16.mxu0 %v2547
    %2611 = vmatpush1.bf16.msra.mxu0 %v2546
    %2612 = vmatprep.subr.bf16.mxu0 %v2551
    %2613 = vmatpush1.bf16.msra.mxu0 %v2550
    %2614 = vmatprep.subr.bf16.mxu0 %v2555
    %2615 = vmatpush1.bf16.msra.mxu0 %v2554
    %2616 = vmatprep.subr.bf16.mxu0 %v2559
    %2617 = vmatpush1.bf16.msra.mxu0 %v2558
    %2618 = vmatprep.subr.bf16.mxu0 %v2563
    %2619 = vmatpush1.bf16.msra.mxu0 %v2562
    %2620 = vmatprep.subr.bf16.mxu0 %v2567
    %2621 = vmatpush1.bf16.msra.mxu0 %v2566
    %2622 = vmatprep.subr.bf16.mxu0 %v2571
    %2623 = vmatpush1.bf16.msra.mxu0 %v2570
    %2624 = vmatprep.subr.bf16.mxu0 %v2575
    %2625 = vmatpush1.bf16.msra.mxu0 %v2574
    %2626 = vmatprep.subr.bf16.mxu0 0
    %2627 = vmatpush1.bf16.msra.mxu0 0
    %2628 = vmatprep.subr.bf16.mxu0 0
    %2629 = vmatpush1.bf16.msra.mxu0 0
    %2630 = vmatprep.subr.bf16.mxu0 0
    %2631 = vmatpush1.bf16.msra.mxu0 0
    %2632 = vmatprep.subr.bf16.mxu0 0
    %2633 = vmatpush1.bf16.msra.mxu0 0
    %2634 = vmatprep.subr.bf16.mxu0 0
    %2635 = vmatpush1.bf16.msra.mxu0 0
    %2636 = vmatprep.subr.bf16.mxu0 0
    %2637 = vmatpush1.bf16.msra.mxu0 0
    %2638 = vmatprep.subr.bf16.mxu0 0
    %2639 = vmatpush1.bf16.msra.mxu0 0
    %2640 = vmatprep.subr.bf16.mxu0 0
    %2641 = vmatpush1.bf16.msra.mxu0 0
    %2642 = vmatprep.mubr.bf16.mxu0 0
    %2643 = vmatmul.mubr.bf16.gmra.mrb[0].mxu0 %v2398
    %v2644 = vpop.f32.mrb[0].mxu0
    %v2645 = vadd.f32 0.0, %v2644
    %v2646 = vpop.f32.mrb[0].mxu0
    %v2647 = vadd.f32 0.0, %v2646
    %v2648 = vpop.f32.mrb[0].mxu0
    %v2649 = vadd.f32 0.0, %v2648
    %v2650 = vpop.f32.mrb[0].mxu0
    %v2651 = vadd.f32 0.0, %v2650
    %2652 = vdwg.mxu0
    %2653 = vmatprep.subr.bf16.mxu0 %v2549
    %2654 = vmatpush1.bf16.msra.mxu0 %v2548
    %2655 = vmatprep.subr.bf16.mxu0 %v2553
    %2656 = vmatpush1.bf16.msra.mxu0 %v2552
    %2657 = vmatprep.subr.bf16.mxu0 %v2557
    %2658 = vmatpush1.bf16.msra.mxu0 %v2556
    %2659 = vmatprep.subr.bf16.mxu0 %v2561
    %2660 = vmatpush1.bf16.msra.mxu0 %v2560
    %2661 = vmatprep.subr.bf16.mxu0 %v2565
    %2662 = vmatpush1.bf16.msra.mxu0 %v2564
    %2663 = vmatprep.subr.bf16.mxu0 %v2569
    %2664 = vmatpush1.bf16.msra.mxu0 %v2568
    %2665 = vmatprep.subr.bf16.mxu0 %v2573
    %2666 = vmatpush1.bf16.msra.mxu0 %v2572
    %2667 = vmatprep.subr.bf16.mxu0 %v2577
    %2668 = vmatpush1.bf16.msra.mxu0 %v2576
    %2669 = vmatprep.subr.bf16.mxu0 0
    %2670 = vmatpush1.bf16.msra.mxu0 0
    %2671 = vmatprep.subr.bf16.mxu0 0
    %2672 = vmatpush1.bf16.msra.mxu0 0
    %2673 = vmatprep.subr.bf16.mxu0 0
    %2674 = vmatpush1.bf16.msra.mxu0 0
    %2675 = vmatprep.subr.bf16.mxu0 0
    %2676 = vmatpush1.bf16.msra.mxu0 0
    %2677 = vmatprep.subr.bf16.mxu0 0
    %2678 = vmatpush1.bf16.msra.mxu0 0
    %2679 = vmatprep.subr.bf16.mxu0 0
    %2680 = vmatpush1.bf16.msra.mxu0 0
    %2681 = vmatprep.subr.bf16.mxu0 0
    %2682 = vmatpush1.bf16.msra.mxu0 0
    %2683 = vmatprep.subr.bf16.mxu0 0
    %2684 = vmatpush1.bf16.msra.mxu0 0
    %2685 = vmatprep.mubr.bf16.mxu0 0
    %2686 = vmatmul.mubr.bf16.gmra.mrb[0].mxu0 %v2398
    %v2687 = vpop.f32.mrb[0].mxu0
    %v2688 = vadd.f32 0.0, %v2687
    %v2689 = vpop.f32.mrb[0].mxu0
    %v2690 = vadd.f32 0.0, %v2689
    %v2691 = vpop.f32.mrb[0].mxu0
    %v2692 = vadd.f32 0.0, %v2691
    %v2693 = vpop.f32.mrb[0].mxu0
    %v2694 = vadd.f32 0.0, %v2693
    %2695 = vdwg.mxu0
    %v2696 = vadd.f32 %v2410, %v2645
    %v2697 = vadd.f32 %v2411, %v2647
    %v2698 = vadd.f32 %v2412, %v2688
    %v2699 = vadd.f32 %v2413, %v2690
    %v2700 = vadd.f32 %v2414, %v2649
    %v2701 = vadd.f32 %v2415, %v2651
    %v2702 = vadd.f32 %v2416, %v2692
    %v2703 = vadd.f32 %v2417, %v2694
    %v2704 = vxor.u32 %v2696, 2147483648
    %v2705 = vxor.u32 %v2700, 2147483648
    %v2706 = vmul.f32 %v2704, 1.442695
    %v2707 = vpow.pop %v2706
    %v2708 = vmul.f32 %v2705, 1.442695
    %v2709 = vpow.pop %v2708
    %v2710 = vadd.f32 %v2707, 1.0
    %v2711 = vadd.f32 %v2709, 1.0
    %v2712 = vrcp.pop %v2710
    %v2713 = vmul.f32 1.0, %v2712
    %v2714 = vrcp.pop %v2711
    %v2715 = vmul.f32 1.0, %v2714
    %v2716 = vxor.u32 %v2697, 2147483648
    %v2717 = vxor.u32 %v2701, 2147483648
    %v2718 = vmul.f32 %v2716, 1.442695
    %v2719 = vpow.pop %v2718
    %v2720 = vmul.f32 %v2717, 1.442695
    %v2721 = vpow.pop %v2720
    %v2722 = vadd.f32 %v2719, 1.0
    %v2723 = vadd.f32 %v2721, 1.0
    %v2724 = vrcp.pop %v2722
    %v2725 = vmul.f32 1.0, %v2724
    %v2726 = vrcp.pop %v2723
    %v2727 = vmul.f32 1.0, %v2726
    %v2728 = vtanh.pop %v2698
    %v2729 = vtanh.pop %v2702
    %v2730 = vxor.u32 %v2699, 2147483648
    %v2731 = vxor.u32 %v2703, 2147483648
    %v2732 = vmul.f32 %v2730, 1.442695
    %v2733 = vpow.pop %v2732
    %v2734 = vmul.f32 %v2731, 1.442695
    %v2735 = vpow.pop %v2734
    %v2736 = vadd.f32 %v2733, 1.0
    %v2737 = vadd.f32 %v2735, 1.0
    %v2738 = vrcp.pop %v2736
    %v2739 = vmul.f32 1.0, %v2738
    %v2740 = vrcp.pop %v2737
    %v2741 = vmul.f32 1.0, %v2740
    %v2742 = vmul.f32 %v2725, %v2392
    %v2743 = vmul.f32 %v2727, %v2393
    %v2744 = vmul.f32 %v2713, %v2728
    %v2745 = vmul.f32 %v2715, %v2729
    %v2746 = vadd.f32 %v2742, %v2744
    %v2747 = vadd.f32 %v2743, %v2745
    %v2748 = vtanh.pop %v2746
    %v2749 = vtanh.pop %v2747
    %v2750 = vmul.f32 %v2739, %v2748
    %v2751 = vmul.f32 %v2741, %v2749
    %v2752 = vpack.c.bf16 %v2751, %v2750
    %v2754 = vunpack.c.l.b16 %v2752
    %v2755 = vunpack.c.h.b16 %v2752
    %v2756 = vpack.c.b16 %v2754, %v2754
    %v2757 = vpack.c.b16 %v2755, %v2755
    %s2760 = scalar_lea.vmem [#allocation11], 40
    %2761 = vst [vmem:[%s2760] sm:$0xf] %v2756
    %2762 = vst [vmem:[%s2760 + $0x4] sm:$0xf] %v2757
    %s2763 = scalar_lea.vmem [#allocation4], 384
    %v2764 = vld [vmem:[%s2763] sm:$0xff]
    %v2765 = vld [vmem:[%s2763 + $0x8] sm:$0xff]
    %v2766 = vld [vmem:[%s2763 + $0x10] sm:$0xff]
    %v2767 = vld [vmem:[%s2763 + $0x18] sm:$0xff]
    %v2768 = vld [vmem:[%s2763 + $0x20] sm:$0xff]
    %v2769 = vld [vmem:[%s2763 + $0x28] sm:$0xff]
    %v2770 = vld [vmem:[%s2763 + $0x30] sm:$0xff]
    %v2771 = vld [vmem:[%s2763 + $0x38] sm:$0xff]
    %v2772 = vld [vmem:[#allocation10] sm:$0xff]
    %v2773 = vld [vmem:[#allocation10 + $0x8] sm:$0xff]
    %v2774 = vld [vmem:[#allocation10 + $0x10] sm:$0xff]
    %v2775 = vld [vmem:[#allocation10 + $0x18] sm:$0xff]
    %v2776 = vld [vmem:[#allocation10 + $0x20] sm:$0xff]
    %v2777 = vld [vmem:[#allocation10 + $0x28] sm:$0xff]
    %v2778 = vld [vmem:[#allocation10 + $0x30] sm:$0xff]
    %v2779 = vld [vmem:[#allocation10 + $0x38] sm:$0xff]
    %v2780 = vld [vmem:[#allocation10 + $0x40] sm:$0xff]
    %v2781 = vld [vmem:[#allocation10 + $0x48] sm:$0xff]
    %v2782 = vld [vmem:[#allocation10 + $0x50] sm:$0xff]
    %v2783 = vld [vmem:[#allocation10 + $0x58] sm:$0xff]
    %v2784 = vld [vmem:[#allocation10 + $0x60] sm:$0xff]
    %v2785 = vld [vmem:[#allocation10 + $0x68] sm:$0xff]
    %v2786 = vld [vmem:[#allocation10 + $0x70] sm:$0xff]
    %v2787 = vld [vmem:[#allocation10 + $0x78] sm:$0xff]
    %v2788 = vld [vmem:[#allocation10 + $0x80] sm:$0xff]
    %v2789 = vld [vmem:[#allocation10 + $0x88] sm:$0xff]
    %v2790 = vld [vmem:[#allocation10 + $0x90] sm:$0xff]
    %v2791 = vld [vmem:[#allocation10 + $0x98] sm:$0xff]
    %v2792 = vld [vmem:[#allocation10 + $0xa0] sm:$0xff]
    %v2793 = vld [vmem:[#allocation10 + $0xa8] sm:$0xff]
    %v2794 = vld [vmem:[#allocation10 + $0xb0] sm:$0xff]
    %v2795 = vld [vmem:[#allocation10 + $0xb8] sm:$0xff]
    %v2796 = vld [vmem:[#allocation10 + $0xc0] sm:$0xff]
    %v2797 = vld [vmem:[#allocation10 + $0xc8] sm:$0xff]
    %v2798 = vld [vmem:[#allocation10 + $0xd0] sm:$0xff]
    %v2799 = vld [vmem:[#allocation10 + $0xd8] sm:$0xff]
    %v2800 = vld [vmem:[#allocation10 + $0xe0] sm:$0xff]
    %v2801 = vld [vmem:[#allocation10 + $0xe8] sm:$0xff]
    %v2802 = vld [vmem:[#allocation10 + $0xf0] sm:$0xff]
    %v2803 = vld [vmem:[#allocation10 + $0xf8] sm:$0xff]
    %v2836 = vunpack.c.l.b16 %v2772
    %v2837 = vunpack.c.h.b16 %v2772
    %v2838 = vunpack.c.l.b16 %v2773
    %v2839 = vunpack.c.h.b16 %v2773
    %v2840 = vunpack.c.l.b16 %v2774
    %v2841 = vunpack.c.h.b16 %v2774
    %v2842 = vunpack.c.l.b16 %v2775
    %v2843 = vunpack.c.h.b16 %v2775
    %v2844 = vunpack.c.l.b16 %v2776
    %v2845 = vunpack.c.h.b16 %v2776
    %v2846 = vunpack.c.l.b16 %v2777
    %v2847 = vunpack.c.h.b16 %v2777
    %v2848 = vunpack.c.l.b16 %v2778
    %v2849 = vunpack.c.h.b16 %v2778
    %v2850 = vunpack.c.l.b16 %v2779
    %v2851 = vunpack.c.h.b16 %v2779
    %v2852 = vunpack.c.l.b16 %v2780
    %v2853 = vunpack.c.h.b16 %v2780
    %v2854 = vunpack.c.l.b16 %v2781
    %v2855 = vunpack.c.h.b16 %v2781
    %v2856 = vunpack.c.l.b16 %v2782
    %v2857 = vunpack.c.h.b16 %v2782
    %v2858 = vunpack.c.l.b16 %v2783
    %v2859 = vunpack.c.h.b16 %v2783
    %v2860 = vunpack.c.l.b16 %v2784
    %v2861 = vunpack.c.h.b16 %v2784
    %v2862 = vunpack.c.l.b16 %v2785
    %v2863 = vunpack.c.h.b16 %v2785
    %v2864 = vunpack.c.l.b16 %v2786
    %v2865 = vunpack.c.h.b16 %v2786
    %v2866 = vunpack.c.l.b16 %v2787
    %v2867 = vunpack.c.h.b16 %v2787
    %v2868 = vunpack.c.l.b16 %v2788
    %v2869 = vunpack.c.h.b16 %v2788
    %v2870 = vunpack.c.l.b16 %v2789
    %v2871 = vunpack.c.h.b16 %v2789
    %v2872 = vunpack.c.l.b16 %v2790
    %v2873 = vunpack.c.h.b16 %v2790
    %v2874 = vunpack.c.l.b16 %v2791
    %v2875 = vunpack.c.h.b16 %v2791
    %v2876 = vunpack.c.l.b16 %v2792
    %v2877 = vunpack.c.h.b16 %v2792
    %v2878 = vunpack.c.l.b16 %v2793
    %v2879 = vunpack.c.h.b16 %v2793
    %v2880 = vunpack.c.l.b16 %v2794
    %v2881 = vunpack.c.h.b16 %v2794
    %v2882 = vunpack.c.l.b16 %v2795
    %v2883 = vunpack.c.h.b16 %v2795
    %v2884 = vunpack.c.l.b16 %v2796
    %v2885 = vunpack.c.h.b16 %v2796
    %v2886 = vunpack.c.l.b16 %v2797
    %v2887 = vunpack.c.h.b16 %v2797
    %v2888 = vunpack.c.l.b16 %v2798
    %v2889 = vunpack.c.h.b16 %v2798
    %v2890 = vunpack.c.l.b16 %v2799
    %v2891 = vunpack.c.h.b16 %v2799
    %v2892 = vunpack.c.l.b16 %v2800
    %v2893 = vunpack.c.h.b16 %v2800
    %v2894 = vunpack.c.l.b16 %v2801
    %v2895 = vunpack.c.h.b16 %v2801
    %v2896 = vunpack.c.l.b16 %v2802
    %v2897 = vunpack.c.h.b16 %v2802
    %v2898 = vunpack.c.l.b16 %v2803
    %v2899 = vunpack.c.h.b16 %v2803
    %v2900 = vpack.c.b16 %v2840, %v2836
    %v2901 = vpack.c.b16 %v2841, %v2837
    %v2902 = vpack.c.b16 %v2842, %v2838
    %v2903 = vpack.c.b16 %v2843, %v2839
    %v2904 = vpack.c.b16 %v2848, %v2844
    %v2905 = vpack.c.b16 %v2849, %v2845
    %v2906 = vpack.c.b16 %v2850, %v2846
    %v2907 = vpack.c.b16 %v2851, %v2847
    %v2908 = vpack.c.b16 %v2856, %v2852
    %v2909 = vpack.c.b16 %v2857, %v2853
    %v2910 = vpack.c.b16 %v2858, %v2854
    %v2911 = vpack.c.b16 %v2859, %v2855
    %v2912 = vpack.c.b16 %v2864, %v2860
    %v2913 = vpack.c.b16 %v2865, %v2861
    %v2914 = vpack.c.b16 %v2866, %v2862
    %v2915 = vpack.c.b16 %v2867, %v2863
    %v2916 = vpack.c.b16 %v2872, %v2868
    %v2917 = vpack.c.b16 %v2873, %v2869
    %v2918 = vpack.c.b16 %v2874, %v2870
    %v2919 = vpack.c.b16 %v2875, %v2871
    %v2920 = vpack.c.b16 %v2880, %v2876
    %v2921 = vpack.c.b16 %v2881, %v2877
    %v2922 = vpack.c.b16 %v2882, %v2878
    %v2923 = vpack.c.b16 %v2883, %v2879
    %v2924 = vpack.c.b16 %v2888, %v2884
    %v2925 = vpack.c.b16 %v2889, %v2885
    %v2926 = vpack.c.b16 %v2890, %v2886
    %v2927 = vpack.c.b16 %v2891, %v2887
    %v2928 = vpack.c.b16 %v2896, %v2892
    %v2929 = vpack.c.b16 %v2897, %v2893
    %v2930 = vpack.c.b16 %v2898, %v2894
    %v2931 = vpack.c.b16 %v2899, %v2895
    %2964 = vmatprep.subr.bf16.mxu0 %v2901
    %2965 = vmatpush1.bf16.msra.mxu0 %v2900
    %2966 = vmatprep.subr.bf16.mxu0 %v2905
    %2967 = vmatpush1.bf16.msra.mxu0 %v2904
    %2968 = vmatprep.subr.bf16.mxu0 %v2909
    %2969 = vmatpush1.bf16.msra.mxu0 %v2908
    %2970 = vmatprep.subr.bf16.mxu0 %v2913
    %2971 = vmatpush1.bf16.msra.mxu0 %v2912
    %2972 = vmatprep.subr.bf16.mxu0 %v2917
    %2973 = vmatpush1.bf16.msra.mxu0 %v2916
    %2974 = vmatprep.subr.bf16.mxu0 %v2921
    %2975 = vmatpush1.bf16.msra.mxu0 %v2920
    %2976 = vmatprep.subr.bf16.mxu0 %v2925
    %2977 = vmatpush1.bf16.msra.mxu0 %v2924
    %2978 = vmatprep.subr.bf16.mxu0 %v2929
    %2979 = vmatpush1.bf16.msra.mxu0 %v2928
    %2980 = vmatprep.subr.bf16.mxu0 0
    %2981 = vmatpush1.bf16.msra.mxu0 0
    %2982 = vmatprep.subr.bf16.mxu0 0
    %2983 = vmatpush1.bf16.msra.mxu0 0
    %2984 = vmatprep.subr.bf16.mxu0 0
    %2985 = vmatpush1.bf16.msra.mxu0 0
    %2986 = vmatprep.subr.bf16.mxu0 0
    %2987 = vmatpush1.bf16.msra.mxu0 0
    %2988 = vmatprep.subr.bf16.mxu0 0
    %2989 = vmatpush1.bf16.msra.mxu0 0
    %2990 = vmatprep.subr.bf16.mxu0 0
    %2991 = vmatpush1.bf16.msra.mxu0 0
    %2992 = vmatprep.subr.bf16.mxu0 0
    %2993 = vmatpush1.bf16.msra.mxu0 0
    %2994 = vmatprep.subr.bf16.mxu0 0
    %2995 = vmatpush1.bf16.msra.mxu0 0
    %2996 = vmatprep.mubr.bf16.mxu0 0
    %2997 = vmatmul.mubr.bf16.gmra.mrb[0].mxu0 %v2752
    %v2998 = vpop.f32.mrb[0].mxu0
    %v2999 = vadd.f32 0.0, %v2998
    %v3000 = vpop.f32.mrb[0].mxu0
    %v3001 = vadd.f32 0.0, %v3000
    %v3002 = vpop.f32.mrb[0].mxu0
    %v3003 = vadd.f32 0.0, %v3002
    %v3004 = vpop.f32.mrb[0].mxu0
    %v3005 = vadd.f32 0.0, %v3004
    %3006 = vdwg.mxu0
    %3007 = vmatprep.subr.bf16.mxu0 %v2903
    %3008 = vmatpush1.bf16.msra.mxu0 %v2902
    %3009 = vmatprep.subr.bf16.mxu0 %v2907
    %3010 = vmatpush1.bf16.msra.mxu0 %v2906
    %3011 = vmatprep.subr.bf16.mxu0 %v2911
    %3012 = vmatpush1.bf16.msra.mxu0 %v2910
    %3013 = vmatprep.subr.bf16.mxu0 %v2915
    %3014 = vmatpush1.bf16.msra.mxu0 %v2914
    %3015 = vmatprep.subr.bf16.mxu0 %v2919
    %3016 = vmatpush1.bf16.msra.mxu0 %v2918
    %3017 = vmatprep.subr.bf16.mxu0 %v2923
    %3018 = vmatpush1.bf16.msra.mxu0 %v2922
    %3019 = vmatprep.subr.bf16.mxu0 %v2927
    %3020 = vmatpush1.bf16.msra.mxu0 %v2926
    %3021 = vmatprep.subr.bf16.mxu0 %v2931
    %3022 = vmatpush1.bf16.msra.mxu0 %v2930
    %3023 = vmatprep.subr.bf16.mxu0 0
    %3024 = vmatpush1.bf16.msra.mxu0 0
    %3025 = vmatprep.subr.bf16.mxu0 0
    %3026 = vmatpush1.bf16.msra.mxu0 0
    %3027 = vmatprep.subr.bf16.mxu0 0
    %3028 = vmatpush1.bf16.msra.mxu0 0
    %3029 = vmatprep.subr.bf16.mxu0 0
    %3030 = vmatpush1.bf16.msra.mxu0 0
    %3031 = vmatprep.subr.bf16.mxu0 0
    %3032 = vmatpush1.bf16.msra.mxu0 0
    %3033 = vmatprep.subr.bf16.mxu0 0
    %3034 = vmatpush1.bf16.msra.mxu0 0
    %3035 = vmatprep.subr.bf16.mxu0 0
    %3036 = vmatpush1.bf16.msra.mxu0 0
    %3037 = vmatprep.subr.bf16.mxu0 0
    %3038 = vmatpush1.bf16.msra.mxu0 0
    %3039 = vmatprep.mubr.bf16.mxu0 0
    %3040 = vmatmul.mubr.bf16.gmra.mrb[0].mxu0 %v2752
    %v3041 = vpop.f32.mrb[0].mxu0
    %v3042 = vadd.f32 0.0, %v3041
    %v3043 = vpop.f32.mrb[0].mxu0
    %v3044 = vadd.f32 0.0, %v3043
    %v3045 = vpop.f32.mrb[0].mxu0
    %v3046 = vadd.f32 0.0, %v3045
    %v3047 = vpop.f32.mrb[0].mxu0
    %v3048 = vadd.f32 0.0, %v3047
    %3049 = vdwg.mxu0
    %v3050 = vadd.f32 %v2764, %v2999
    %v3051 = vadd.f32 %v2765, %v3001
    %v3052 = vadd.f32 %v2766, %v3042
    %v3053 = vadd.f32 %v2767, %v3044
    %v3054 = vadd.f32 %v2768, %v3003
    %v3055 = vadd.f32 %v2769, %v3005
    %v3056 = vadd.f32 %v2770, %v3046
    %v3057 = vadd.f32 %v2771, %v3048
    %v3058 = vxor.u32 %v3050, 2147483648
    %v3059 = vxor.u32 %v3054, 2147483648
    %v3060 = vmul.f32 %v3058, 1.442695
    %v3061 = vpow.pop %v3060
    %v3062 = vmul.f32 %v3059, 1.442695
    %v3063 = vpow.pop %v3062
    %v3064 = vadd.f32 %v3061, 1.0
    %v3065 = vadd.f32 %v3063, 1.0
    %v3066 = vrcp.pop %v3064
    %v3067 = vmul.f32 1.0, %v3066
    %v3068 = vrcp.pop %v3065
    %v3069 = vmul.f32 1.0, %v3068
    %v3070 = vxor.u32 %v3051, 2147483648
    %v3071 = vxor.u32 %v3055, 2147483648
    %v3072 = vmul.f32 %v3070, 1.442695
    %v3073 = vpow.pop %v3072
    %v3074 = vmul.f32 %v3071, 1.442695
    %v3075 = vpow.pop %v3074
    %v3076 = vadd.f32 %v3073, 1.0
    %v3077 = vadd.f32 %v3075, 1.0
    %v3078 = vrcp.pop %v3076
    %v3079 = vmul.f32 1.0, %v3078
    %v3080 = vrcp.pop %v3077
    %v3081 = vmul.f32 1.0, %v3080
    %v3082 = vtanh.pop %v3052
    %v3083 = vtanh.pop %v3056
    %v3084 = vxor.u32 %v3053, 2147483648
    %v3085 = vxor.u32 %v3057, 2147483648
    %v3086 = vmul.f32 %v3084, 1.442695
    %v3087 = vpow.pop %v3086
    %v3088 = vmul.f32 %v3085, 1.442695
    %v3089 = vpow.pop %v3088
    %v3090 = vadd.f32 %v3087, 1.0
    %v3091 = vadd.f32 %v3089, 1.0
    %v3092 = vrcp.pop %v3090
    %v3093 = vmul.f32 1.0, %v3092
    %v3094 = vrcp.pop %v3091
    %v3095 = vmul.f32 1.0, %v3094
    %v3096 = vmul.f32 %v3079, %v2746
    %v3097 = vmul.f32 %v3081, %v2747
    %v3098 = vmul.f32 %v3067, %v3082
    %v3099 = vmul.f32 %v3069, %v3083
    %v3100 = vadd.f32 %v3096, %v3098
    %v3101 = vadd.f32 %v3097, %v3099
    %v3102 = vtanh.pop %v3100
    %v3103 = vtanh.pop %v3101
    %v3104 = vmul.f32 %v3093, %v3102
    %v3105 = vmul.f32 %v3095, %v3103
    %v3106 = vpack.c.bf16 %v3105, %v3104
    %v3108 = vunpack.c.l.b16 %v3106
    %v3109 = vunpack.c.h.b16 %v3106
    %v3110 = vpack.c.b16 %v3108, %v3108
    %v3111 = vpack.c.b16 %v3109, %v3109
    %s3114 = scalar_lea.vmem [#allocation11], 48
    %3115 = vst [vmem:[%s3114] sm:$0xf] %v3110
    %3116 = vst [vmem:[%s3114 + $0x4] sm:$0xf] %v3111
    %s3117 = scalar_lea.vmem [#allocation4], 448
    %v3118 = vld [vmem:[%s3117] sm:$0xff]
    %v3119 = vld [vmem:[%s3117 + $0x8] sm:$0xff]
    %v3120 = vld [vmem:[%s3117 + $0x10] sm:$0xff]
    %v3121 = vld [vmem:[%s3117 + $0x18] sm:$0xff]
    %v3122 = vld [vmem:[%s3117 + $0x20] sm:$0xff]
    %v3123 = vld [vmem:[%s3117 + $0x28] sm:$0xff]
    %v3124 = vld [vmem:[%s3117 + $0x30] sm:$0xff]
    %v3125 = vld [vmem:[%s3117 + $0x38] sm:$0xff]
    %v3126 = vld [vmem:[#allocation10] sm:$0xff]
    %v3127 = vld [vmem:[#allocation10 + $0x8] sm:$0xff]
    %v3128 = vld [vmem:[#allocation10 + $0x10] sm:$0xff]
    %v3129 = vld [vmem:[#allocation10 + $0x18] sm:$0xff]
    %v3130 = vld [vmem:[#allocation10 + $0x20] sm:$0xff]
    %v3131 = vld [vmem:[#allocation10 + $0x28] sm:$0xff]
    %v3132 = vld [vmem:[#allocation10 + $0x30] sm:$0xff]
    %v3133 = vld [vmem:[#allocation10 + $0x38] sm:$0xff]
    %v3134 = vld [vmem:[#allocation10 + $0x40] sm:$0xff]
    %v3135 = vld [vmem:[#allocation10 + $0x48] sm:$0xff]
    %v3136 = vld [vmem:[#allocation10 + $0x50] sm:$0xff]
    %v3137 = vld [vmem:[#allocation10 + $0x58] sm:$0xff]
    %v3138 = vld [vmem:[#allocation10 + $0x60] sm:$0xff]
    %v3139 = vld [vmem:[#allocation10 + $0x68] sm:$0xff]
    %v3140 = vld [vmem:[#allocation10 + $0x70] sm:$0xff]
    %v3141 = vld [vmem:[#allocation10 + $0x78] sm:$0xff]
    %v3142 = vld [vmem:[#allocation10 + $0x80] sm:$0xff]
    %v3143 = vld [vmem:[#allocation10 + $0x88] sm:$0xff]
    %v3144 = vld [vmem:[#allocation10 + $0x90] sm:$0xff]
    %v3145 = vld [vmem:[#allocation10 + $0x98] sm:$0xff]
    %v3146 = vld [vmem:[#allocation10 + $0xa0] sm:$0xff]
    %v3147 = vld [vmem:[#allocation10 + $0xa8] sm:$0xff]
    %v3148 = vld [vmem:[#allocation10 + $0xb0] sm:$0xff]
    %v3149 = vld [vmem:[#allocation10 + $0xb8] sm:$0xff]
    %v3150 = vld [vmem:[#allocation10 + $0xc0] sm:$0xff]
    %v3151 = vld [vmem:[#allocation10 + $0xc8] sm:$0xff]
    %v3152 = vld [vmem:[#allocation10 + $0xd0] sm:$0xff]
    %v3153 = vld [vmem:[#allocation10 + $0xd8] sm:$0xff]
    %v3154 = vld [vmem:[#allocation10 + $0xe0] sm:$0xff]
    %v3155 = vld [vmem:[#allocation10 + $0xe8] sm:$0xff]
    %v3156 = vld [vmem:[#allocation10 + $0xf0] sm:$0xff]
    %v3157 = vld [vmem:[#allocation10 + $0xf8] sm:$0xff]
    %v3190 = vunpack.c.l.b16 %v3126
    %v3191 = vunpack.c.h.b16 %v3126
    %v3192 = vunpack.c.l.b16 %v3127
    %v3193 = vunpack.c.h.b16 %v3127
    %v3194 = vunpack.c.l.b16 %v3128
    %v3195 = vunpack.c.h.b16 %v3128
    %v3196 = vunpack.c.l.b16 %v3129
    %v3197 = vunpack.c.h.b16 %v3129
    %v3198 = vunpack.c.l.b16 %v3130
    %v3199 = vunpack.c.h.b16 %v3130
    %v3200 = vunpack.c.l.b16 %v3131
    %v3201 = vunpack.c.h.b16 %v3131
    %v3202 = vunpack.c.l.b16 %v3132
    %v3203 = vunpack.c.h.b16 %v3132
    %v3204 = vunpack.c.l.b16 %v3133
    %v3205 = vunpack.c.h.b16 %v3133
    %v3206 = vunpack.c.l.b16 %v3134
    %v3207 = vunpack.c.h.b16 %v3134
    %v3208 = vunpack.c.l.b16 %v3135
    %v3209 = vunpack.c.h.b16 %v3135
    %v3210 = vunpack.c.l.b16 %v3136
    %v3211 = vunpack.c.h.b16 %v3136
    %v3212 = vunpack.c.l.b16 %v3137
    %v3213 = vunpack.c.h.b16 %v3137
    %v3214 = vunpack.c.l.b16 %v3138
    %v3215 = vunpack.c.h.b16 %v3138
    %v3216 = vunpack.c.l.b16 %v3139
    %v3217 = vunpack.c.h.b16 %v3139
    %v3218 = vunpack.c.l.b16 %v3140
    %v3219 = vunpack.c.h.b16 %v3140
    %v3220 = vunpack.c.l.b16 %v3141
    %v3221 = vunpack.c.h.b16 %v3141
    %v3222 = vunpack.c.l.b16 %v3142
    %v3223 = vunpack.c.h.b16 %v3142
    %v3224 = vunpack.c.l.b16 %v3143
    %v3225 = vunpack.c.h.b16 %v3143
    %v3226 = vunpack.c.l.b16 %v3144
    %v3227 = vunpack.c.h.b16 %v3144
    %v3228 = vunpack.c.l.b16 %v3145
    %v3229 = vunpack.c.h.b16 %v3145
    %v3230 = vunpack.c.l.b16 %v3146
    %v3231 = vunpack.c.h.b16 %v3146
    %v3232 = vunpack.c.l.b16 %v3147
    %v3233 = vunpack.c.h.b16 %v3147
    %v3234 = vunpack.c.l.b16 %v3148
    %v3235 = vunpack.c.h.b16 %v3148
    %v3236 = vunpack.c.l.b16 %v3149
    %v3237 = vunpack.c.h.b16 %v3149
    %v3238 = vunpack.c.l.b16 %v3150
    %v3239 = vunpack.c.h.b16 %v3150
    %v3240 = vunpack.c.l.b16 %v3151
    %v3241 = vunpack.c.h.b16 %v3151
    %v3242 = vunpack.c.l.b16 %v3152
    %v3243 = vunpack.c.h.b16 %v3152
    %v3244 = vunpack.c.l.b16 %v3153
    %v3245 = vunpack.c.h.b16 %v3153
    %v3246 = vunpack.c.l.b16 %v3154
    %v3247 = vunpack.c.h.b16 %v3154
    %v3248 = vunpack.c.l.b16 %v3155
    %v3249 = vunpack.c.h.b16 %v3155
    %v3250 = vunpack.c.l.b16 %v3156
    %v3251 = vunpack.c.h.b16 %v3156
    %v3252 = vunpack.c.l.b16 %v3157
    %v3253 = vunpack.c.h.b16 %v3157
    %v3254 = vpack.c.b16 %v3194, %v3190
    %v3255 = vpack.c.b16 %v3195, %v3191
    %v3256 = vpack.c.b16 %v3196, %v3192
    %v3257 = vpack.c.b16 %v3197, %v3193
    %v3258 = vpack.c.b16 %v3202, %v3198
    %v3259 = vpack.c.b16 %v3203, %v3199
    %v3260 = vpack.c.b16 %v3204, %v3200
    %v3261 = vpack.c.b16 %v3205, %v3201
    %v3262 = vpack.c.b16 %v3210, %v3206
    %v3263 = vpack.c.b16 %v3211, %v3207
    %v3264 = vpack.c.b16 %v3212, %v3208
    %v3265 = vpack.c.b16 %v3213, %v3209
    %v3266 = vpack.c.b16 %v3218, %v3214
    %v3267 = vpack.c.b16 %v3219, %v3215
    %v3268 = vpack.c.b16 %v3220, %v3216
    %v3269 = vpack.c.b16 %v3221, %v3217
    %v3270 = vpack.c.b16 %v3226, %v3222
    %v3271 = vpack.c.b16 %v3227, %v3223
    %v3272 = vpack.c.b16 %v3228, %v3224
    %v3273 = vpack.c.b16 %v3229, %v3225
    %v3274 = vpack.c.b16 %v3234, %v3230
    %v3275 = vpack.c.b16 %v3235, %v3231
    %v3276 = vpack.c.b16 %v3236, %v3232
    %v3277 = vpack.c.b16 %v3237, %v3233
    %v3278 = vpack.c.b16 %v3242, %v3238
    %v3279 = vpack.c.b16 %v3243, %v3239
    %v3280 = vpack.c.b16 %v3244, %v3240
    %v3281 = vpack.c.b16 %v3245, %v3241
    %v3282 = vpack.c.b16 %v3250, %v3246
    %v3283 = vpack.c.b16 %v3251, %v3247
    %v3284 = vpack.c.b16 %v3252, %v3248
    %v3285 = vpack.c.b16 %v3253, %v3249
    %3318 = vmatprep.subr.bf16.mxu0 %v3255
    %3319 = vmatpush1.bf16.msra.mxu0 %v3254
    %3320 = vmatprep.subr.bf16.mxu0 %v3259
    %3321 = vmatpush1.bf16.msra.mxu0 %v3258
    %3322 = vmatprep.subr.bf16.mxu0 %v3263
    %3323 = vmatpush1.bf16.msra.mxu0 %v3262
    %3324 = vmatprep.subr.bf16.mxu0 %v3267
    %3325 = vmatpush1.bf16.msra.mxu0 %v3266
    %3326 = vmatprep.subr.bf16.mxu0 %v3271
    %3327 = vmatpush1.bf16.msra.mxu0 %v3270
    %3328 = vmatprep.subr.bf16.mxu0 %v3275
    %3329 = vmatpush1.bf16.msra.mxu0 %v3274
    %3330 = vmatprep.subr.bf16.mxu0 %v3279
    %3331 = vmatpush1.bf16.msra.mxu0 %v3278
    %3332 = vmatprep.subr.bf16.mxu0 %v3283
    %3333 = vmatpush1.bf16.msra.mxu0 %v3282
    %3334 = vmatprep.subr.bf16.mxu0 0
    %3335 = vmatpush1.bf16.msra.mxu0 0
    %3336 = vmatprep.subr.bf16.mxu0 0
    %3337 = vmatpush1.bf16.msra.mxu0 0
    %3338 = vmatprep.subr.bf16.mxu0 0
    %3339 = vmatpush1.bf16.msra.mxu0 0
    %3340 = vmatprep.subr.bf16.mxu0 0
    %3341 = vmatpush1.bf16.msra.mxu0 0
    %3342 = vmatprep.subr.bf16.mxu0 0
    %3343 = vmatpush1.bf16.msra.mxu0 0
    %3344 = vmatprep.subr.bf16.mxu0 0
    %3345 = vmatpush1.bf16.msra.mxu0 0
    %3346 = vmatprep.subr.bf16.mxu0 0
    %3347 = vmatpush1.bf16.msra.mxu0 0
    %3348 = vmatprep.subr.bf16.mxu0 0
    %3349 = vmatpush1.bf16.msra.mxu0 0
    %3350 = vmatprep.mubr.bf16.mxu0 0
    %3351 = vmatmul.mubr.bf16.gmra.mrb[0].mxu0 %v3106
    %v3352 = vpop.f32.mrb[0].mxu0
    %v3353 = vadd.f32 0.0, %v3352
    %v3354 = vpop.f32.mrb[0].mxu0
    %v3355 = vadd.f32 0.0, %v3354
    %v3356 = vpop.f32.mrb[0].mxu0
    %v3357 = vadd.f32 0.0, %v3356
    %v3358 = vpop.f32.mrb[0].mxu0
    %v3359 = vadd.f32 0.0, %v3358
    %3360 = vdwg.mxu0
    %3361 = vmatprep.subr.bf16.mxu0 %v3257
    %3362 = vmatpush1.bf16.msra.mxu0 %v3256
    %3363 = vmatprep.subr.bf16.mxu0 %v3261
    %3364 = vmatpush1.bf16.msra.mxu0 %v3260
    %3365 = vmatprep.subr.bf16.mxu0 %v3265
    %3366 = vmatpush1.bf16.msra.mxu0 %v3264
    %3367 = vmatprep.subr.bf16.mxu0 %v3269
    %3368 = vmatpush1.bf16.msra.mxu0 %v3268
    %3369 = vmatprep.subr.bf16.mxu0 %v3273
    %3370 = vmatpush1.bf16.msra.mxu0 %v3272
    %3371 = vmatprep.subr.bf16.mxu0 %v3277
    %3372 = vmatpush1.bf16.msra.mxu0 %v3276
    %3373 = vmatprep.subr.bf16.mxu0 %v3281
    %3374 = vmatpush1.bf16.msra.mxu0 %v3280
    %3375 = vmatprep.subr.bf16.mxu0 %v3285
    %3376 = vmatpush1.bf16.msra.mxu0 %v3284
    %3377 = vmatprep.subr.bf16.mxu0 0
    %3378 = vmatpush1.bf16.msra.mxu0 0
    %3379 = vmatprep.subr.bf16.mxu0 0
    %3380 = vmatpush1.bf16.msra.mxu0 0
    %3381 = vmatprep.subr.bf16.mxu0 0
    %3382 = vmatpush1.bf16.msra.mxu0 0
    %3383 = vmatprep.subr.bf16.mxu0 0
    %3384 = vmatpush1.bf16.msra.mxu0 0
    %3385 = vmatprep.subr.bf16.mxu0 0
    %3386 = vmatpush1.bf16.msra.mxu0 0
    %3387 = vmatprep.subr.bf16.mxu0 0
    %3388 = vmatpush1.bf16.msra.mxu0 0
    %3389 = vmatprep.subr.bf16.mxu0 0
    %3390 = vmatpush1.bf16.msra.mxu0 0
    %3391 = vmatprep.subr.bf16.mxu0 0
    %3392 = vmatpush1.bf16.msra.mxu0 0
    %3393 = vmatprep.mubr.bf16.mxu0 0
    %3394 = vmatmul.mubr.bf16.gmra.mrb[0].mxu0 %v3106
    %v3395 = vpop.f32.mrb[0].mxu0
    %v3396 = vadd.f32 0.0, %v3395
    %v3397 = vpop.f32.mrb[0].mxu0
    %v3398 = vadd.f32 0.0, %v3397
    %v3399 = vpop.f32.mrb[0].mxu0
    %v3400 = vadd.f32 0.0, %v3399
    %v3401 = vpop.f32.mrb[0].mxu0
    %v3402 = vadd.f32 0.0, %v3401
    %3403 = vdwg.mxu0
    %v3404 = vadd.f32 %v3118, %v3353
    %v3405 = vadd.f32 %v3119, %v3355
    %v3406 = vadd.f32 %v3120, %v3396
    %v3407 = vadd.f32 %v3121, %v3398
    %v3408 = vadd.f32 %v3122, %v3357
    %v3409 = vadd.f32 %v3123, %v3359
    %v3410 = vadd.f32 %v3124, %v3400
    %v3411 = vadd.f32 %v3125, %v3402
    %v3412 = vxor.u32 %v3404, 2147483648
    %v3413 = vxor.u32 %v3408, 2147483648
    %v3414 = vmul.f32 %v3412, 1.442695
    %v3415 = vpow.pop %v3414
    %v3416 = vmul.f32 %v3413, 1.442695
    %v3417 = vpow.pop %v3416
    %v3418 = vadd.f32 %v3415, 1.0
    %v3419 = vadd.f32 %v3417, 1.0
    %v3420 = vrcp.pop %v3418
    %v3421 = vmul.f32 1.0, %v3420
    %v3422 = vrcp.pop %v3419
    %v3423 = vmul.f32 1.0, %v3422
    %v3424 = vxor.u32 %v3405, 2147483648
    %v3425 = vxor.u32 %v3409, 2147483648
    %v3426 = vmul.f32 %v3424, 1.442695
    %v3427 = vpow.pop %v3426
    %v3428 = vmul.f32 %v3425, 1.442695
    %v3429 = vpow.pop %v3428
    %v3430 = vadd.f32 %v3427, 1.0
    %v3431 = vadd.f32 %v3429, 1.0
    %v3432 = vrcp.pop %v3430
    %v3433 = vmul.f32 1.0, %v3432
    %v3434 = vrcp.pop %v3431
    %v3435 = vmul.f32 1.0, %v3434
    %v3436 = vtanh.pop %v3406
    %v3437 = vtanh.pop %v3410
    %v3438 = vxor.u32 %v3407, 2147483648
    %v3439 = vxor.u32 %v3411, 2147483648
    %v3440 = vmul.f32 %v3438, 1.442695
    %v3441 = vpow.pop %v3440
    %v3442 = vmul.f32 %v3439, 1.442695
    %v3443 = vpow.pop %v3442
    %v3444 = vadd.f32 %v3441, 1.0
    %v3445 = vadd.f32 %v3443, 1.0
    %v3446 = vrcp.pop %v3444
    %v3447 = vmul.f32 1.0, %v3446
    %v3448 = vrcp.pop %v3445
    %v3449 = vmul.f32 1.0, %v3448
    %v3450 = vmul.f32 %v3433, %v3100
    %v3451 = vmul.f32 %v3435, %v3101
    %v3452 = vmul.f32 %v3421, %v3436
    %v3453 = vmul.f32 %v3423, %v3437
    %v3454 = vadd.f32 %v3450, %v3452
    %v3455 = vadd.f32 %v3451, %v3453
    %v3456 = vtanh.pop %v3454
    %v3457 = vtanh.pop %v3455
    %v3458 = vmul.f32 %v3447, %v3456
    %v3459 = vmul.f32 %v3449, %v3457
    %v3460 = vpack.c.bf16 %v3459, %v3458
    %v3462 = vunpack.c.l.b16 %v3460
    %v3463 = vunpack.c.h.b16 %v3460
    %v3464 = vpack.c.b16 %v3462, %v3462
    %v3465 = vpack.c.b16 %v3463, %v3463
    %s3468 = scalar_lea.vmem [#allocation11], 56
    %3469 = vst [vmem:[%s3468] sm:$0xf] %v3464
    %3470 = vst [vmem:[%s3468 + $0x4] sm:$0xf] %v3465
    %3471 = vst [vmem:[#allocation2] sm:$0xff] %v3458
    %3472 = vst [vmem:[#allocation2 + $0x8] sm:$0xff] %v3459
    %3473 = vst [vmem:[#allocation3] sm:$0xff] %v3454
    %3474 = vst [vmem:[#allocation3 + $0x8] sm:$0xff] %v3455
    // Predicated region
    $region34: #{tpu_custom_call.1} parent=1 // pred_check
      _
    $region35: #{tpu_custom_call.1} parent=1 // pred_check_branch
      %3476 = sbr.rel (0) target = $region37
    $region36: #{tpu_custom_call.1} parent=1 // pred_region
      %s3478 = ssub.s32 1024, 1024
      %3479 = vsyncadd [#allocation7], %s3478
      %s3480 = sshll.u32 [#allocation11], 4
      %s3481 = int_to_ptr.vmem [resolvable:$true] %s3480
      %3486 = dma.vmem_to_hbm [thread:$0]  %s3481, 1024, %s4, [#allocation7], 64, 64, 4
    $region37: #{tpu_custom_call.1} parent=1 // pred_fallthru
      _
    // Predicated region
    $region38: #{tpu_custom_call.1} parent=1 // pred_check
      _
    $region39: #{tpu_custom_call.1} parent=1 // pred_check_branch
      %3488 = sbr.rel (0) target = $region41
    $region40: #{tpu_custom_call.1} parent=1 // pred_region
      %3489 = dma.done [#allocation7], 1024
    $region41: #{tpu_custom_call.1} parent=1 // pred_fallthru
      _
    %3490 = vsyncpa [#allocation6], 1
    %3491 = vsyncpa [#allocation9], 1
    %3492 = vsyncpa [#allocation7], 1

</llo_original>
